<compile_context>
chip_gen: v5e
topology: v5e:2x2
jax: 0.10.0
libtpu: 0.0.40
codegen_flags: <defaults>
</compile_context>

<pallas_src>
import functools
import numpy as np
import jax
import jax.numpy as jnp
from jax.experimental import pallas as pl
from jax.experimental.pallas import tpu as pltpu

DIMS = [28 * 28, 128, 64, 36, 18, 9, 18, 36, 64, 128, 28 * 28]
N_LAYERS = len(DIMS) - 1          # 10 Linear layers
N_MID = 8                         # layers 1..8 all have in/out <= 128
ENC_OUT = 4                       # layer 4 (18 -> 9): encoder output, NO ReLU
F_IN = DIMS[0]                    # 784 (kept unpadded at the HBM boundary)
F_OUT = DIMS[-1]                  # 784


def _round_up(n, m):
    return ((n + m - 1) // m) * m


def ae_kernel(x_ref, w_first_ref, w_mid_ref, w_last_ref, b_mid_ref, b_last_ref,
              out_ref):
    """Whole encoder+decoder forward for one batch tile, entirely in VMEM.

    x_ref:       (tile_b, 784)   f32   (cast to bf16 in VMEM)
    w_first_ref: (784, 128)      bf16  (layer 0)
    w_mid_ref:   (8, 128, 128)   bf16  (layers 1..8, zero-padded & packed)
    w_last_ref:  (128, 784)      bf16  (layer 9)
    b_mid_ref:   (9, 128)        f32   (biases of layers 0..8, packed)
    b_last_ref:  (1, 784)        f32   (bias of layer 9)
    out_ref:     (tile_b, 784)   bf16
    """
    x = x_ref[...].astype(jnp.bfloat16)        # f32 -> bf16 cast in VMEM

    # Layer 0: 784 -> 128, ReLU  (bf16 operands, f32 accumulation + bias).
    h = jnp.dot(x, w_first_ref[...], preferred_element_type=jnp.float32)
    h = jnp.maximum(h + b_mid_ref[0:1, :], 0.0).astype(jnp.bfloat16)

    # Layers 1..8: (zero-padded) 128 -> 128.  Layer 4 (18->9) has no ReLU.
    for j in range(N_MID):
        layer = j + 1
        h = jnp.dot(h, w_mid_ref[j], preferred_element_type=jnp.float32)
        h = h + b_mid_ref[layer:layer + 1, :]
        if layer != ENC_OUT:
            h = jnp.maximum(h, 0.0)
        h = h.astype(jnp.bfloat16)

    # Layer 9: 128 -> 784, Sigmoid (EUP exp), bf16 out.
    h = jnp.dot(h, w_last_ref[...], preferred_element_type=jnp.float32)
    out_ref[...] = jax.nn.sigmoid(h + b_last_ref[...]).astype(out_ref.dtype)


def _pack_params(weights, biases):
    """Pack f32 params into the kernel's consolidated bf16/f32 operands."""
    w_first = weights[0].astype(jnp.bfloat16)                        # (784, 128)
    w_mid = jnp.stack([
        jnp.pad(weights[i], ((0, 128 - DIMS[i]), (0, 128 - DIMS[i + 1])))
        for i in range(1, 1 + N_MID)
    ]).astype(jnp.bfloat16)                                          # (8, 128, 128)
    w_last = weights[N_LAYERS - 1].astype(jnp.bfloat16)              # (128, 784)
    b_mid = jnp.stack([
        jnp.pad(biases[i], (0, 128 - DIMS[i + 1])) for i in range(N_LAYERS - 1)
    ]).astype(jnp.float32)                                           # (9, 128)
    b_last = biases[N_LAYERS - 1].reshape(1, F_OUT).astype(jnp.float32)  # (1, 784)
    return w_first, w_mid, w_last, b_mid, b_last


def ae_forward(x, weights, biases, *, tile_b=512):
    """x: (B, 784) f32.  weights[i]: (DIMS[i], DIMS[i+1]) f32.  biases[i]: (DIMS[i+1],) f32.

    Returns (B, 784) bf16 (post-sigmoid values in [0, 1]); cast to f32 outside
    if a consumer needs it.
    """
    B, F = x.shape
    assert F == F_IN

    # Clamp the tile for tiny batches so we don't over-pad.
    tile_b = min(tile_b, _round_up(B, 8))
    # Prefer >= 2 grid steps so both v7x TensorCores get work ("parallel" axis).
    if B >= 16 and pl.cdiv(B, tile_b) == 1:
        tile_b = _round_up(pl.cdiv(B, 2), 8)
    Bp = _round_up(B, tile_b)
    xp = x if Bp == B else jnp.pad(x, ((0, Bp - B), (0, 0)))

    w_first, w_mid, w_last, b_mid, b_last = _pack_params(weights, biases)

    n_steps = Bp // tile_b
    grid = (n_steps,)

    in_specs = [
        pl.BlockSpec((tile_b, F_IN), lambda i: (i, 0)),        # x tile (f32)
        pl.BlockSpec((F_IN, 128), lambda i: (0, 0)),           # w_first (constant)
        pl.BlockSpec((N_MID, 128, 128), lambda i: (0, 0, 0)),  # packed mid weights
        pl.BlockSpec((128, F_OUT), lambda i: (0, 0)),          # w_last
        pl.BlockSpec((N_LAYERS - 1, 128), lambda i: (0, 0)),   # packed mid biases
        pl.BlockSpec((1, F_OUT), lambda i: (0, 0)),            # last bias
    ]
    out_spec = pl.BlockSpec((tile_b, F_OUT), lambda i: (i, 0))

    # Advisory cost estimate for XLA's scheduler.
    flops = int(2 * Bp * (F_IN * 128 + N_MID * 128 * 128 + 128 * F_OUT))
    transcendentals = int(Bp * F_OUT)                 # sigmoid exp
    weight_bytes = int((F_IN * 128 + N_MID * 128 * 128 + 128 * F_OUT) * 2
                       + ((N_LAYERS - 1) * 128 + F_OUT) * 4)
    bytes_accessed = int(Bp * F_IN * 4 + Bp * F_OUT * 2 + weight_bytes)

    out = pl.pallas_call(
        ae_kernel,
        out_shape=jax.ShapeDtypeStruct((Bp, F_OUT), jnp.bfloat16),
        grid=grid,
        in_specs=in_specs,
        out_specs=out_spec,
        compiler_params=pltpu.CompilerParams(
            dimension_semantics=("parallel",),
            vmem_limit_bytes=32 * 1024 * 1024),
        cost_estimate=pl.CostEstimate(
            flops=flops,
            transcendentals=transcendentals,
            bytes_accessed=bytes_accessed),
    )(xp, w_first, w_mid, w_last, b_mid, b_last)

    return out if Bp == B else out[:B]


def init_params(key):
    """Deterministic init mirroring PyTorch nn.Linear default: U(-1/sqrt(in), 1/sqrt(in))."""
    weights, biases = [], []
    for i in range(N_LAYERS):
        din, dout = DIMS[i], DIMS[i + 1]
        k = 1.0 / np.sqrt(din)
        key, kw, kb = jax.random.split(key, 3)
        # stored as (in, out) so the kernel does x @ W (PyTorch stores (out, in), does x @ W.T)
        weights.append(jax.random.uniform(kw, (din, dout), jnp.float32, -k, k))
        biases.append(jax.random.uniform(kb, (dout,), jnp.float32, -k, k))
    return weights, biases


def _activation(i, h):
    if i == N_LAYERS - 1:
        return jax.nn.sigmoid(h)
    if i == ENC_OUT:                 # encoder output layer (18->9): no activation
        return h
    return jnp.maximum(h, 0.0)


def ae_reference_f32(x, weights, biases):
    """Pure f32 reference (module semantics)."""
    h = x
    for i in range(N_LAYERS):
        h = _activation(i, h @ weights[i] + biases[i])
    return h


def ae_reference_policy(x, weights, biases):
    """Reference mimicking the kernel's dtype policy: bf16 operands, f32 accum, bf16 out."""
    h = x.astype(jnp.bfloat16)
    for i in range(N_LAYERS):
        h = jnp.dot(h, weights[i].astype(jnp.bfloat16),
                    preferred_element_type=jnp.float32) + biases[i]
        h = _activation(i, h).astype(jnp.bfloat16)
    return h


if __name__ == "__main__":
    key = jax.random.PRNGKey(0)
    key, kx = jax.random.split(key)

    B = 256                       # small demo batch; tile_b=128 -> 2 grid steps
    x = jax.random.uniform(kx, (B, 28 * 28), jnp.float32)

    weights, biases = init_params(key)

    fwd = jax.jit(functools.partial(ae_forward, tile_b=128))
    out = fwd(x, weights, biases)
    out = jax.block_until_ready(out)
    assert out.shape == (B, 28 * 28) and out.dtype == jnp.bfloat16

    out_f32 = np.asarray(out.astype(jnp.float32))

    # Tight check vs a reference using the same bf16/f32 dtype policy.
    ref_policy = np.asarray(ae_reference_policy(x, weights, biases).astype(jnp.float32))
    np.testing.assert_allclose(out_f32, ref_policy, rtol=0, atol=1e-2)

    # Looser sanity check vs the pure-f32 module semantics (bf16 rounding).
    ref_f32 = np.asarray(ae_reference_f32(x, weights, biases))
    np.testing.assert_allclose(out_f32, ref_f32, rtol=0, atol=5e-2)

    print("KERNEL_OK")
</pallas_src>

<mosaic_0001>
module attributes {stable_mosaic.version = 11 : i64} {
  func.func @ae_kernel(%arg0: i32, %arg1: memref<128x784xf32, #tpu.memory_space<vmem>>, %arg2: memref<784x128xbf16, #tpu.memory_space<vmem>>, %arg3: memref<8x128x128xbf16, #tpu.memory_space<vmem>>, %arg4: memref<128x784xbf16, #tpu.memory_space<vmem>>, %arg5: memref<9x128xf32, #tpu.memory_space<vmem>>, %arg6: memref<1x784xf32, #tpu.memory_space<vmem>>, %arg7: memref<128x784xbf16, #tpu.memory_space<vmem>>) attributes {dimension_semantics = [#tpu.dimension_semantics<parallel>], iteration_bounds = array<i64: 2>, scalar_prefetch = 0 : i64, scratch_operands = 0 : i64, tpu.core_type = #tpu.core_type<tc>, window_params = [{transform_indices = @transform_0, window_bounds = array<i64: 128, 784>}, {pipeline_mode = #tpu.pipeline_mode<synchronous>, transform_indices = @transform_1, window_bounds = array<i64: 784, 128>}, {pipeline_mode = #tpu.pipeline_mode<synchronous>, transform_indices = @transform_2, window_bounds = array<i64: 8, 128, 128>}, {pipeline_mode = #tpu.pipeline_mode<synchronous>, transform_indices = @transform_3, window_bounds = array<i64: 128, 784>}, {pipeline_mode = #tpu.pipeline_mode<synchronous>, transform_indices = @transform_4, window_bounds = array<i64: 9, 128>}, {pipeline_mode = #tpu.pipeline_mode<synchronous>, transform_indices = @transform_5, window_bounds = array<i64: 1, 784>}, {transform_indices = @transform_6, window_bounds = array<i64: 128, 784>}]} {
    %c0 = arith.constant 0 : index
    %c0_0 = arith.constant 0 : index
    %0 = vector.load %arg1[%c0, %c0_0] : memref<128x784xf32, #tpu.memory_space<vmem>>, vector<128x784xf32>
    %1 = arith.truncf %0 : vector<128x784xf32> to vector<128x784xbf16>
    %c0_1 = arith.constant 0 : index
    %c0_2 = arith.constant 0 : index
    %2 = vector.load %arg2[%c0_1, %c0_2] : memref<784x128xbf16, #tpu.memory_space<vmem>>, vector<784x128xbf16>
    %cst = arith.constant dense<0.000000e+00> : vector<128x128xf32>
    %3 = tpu.matmul %1, %2, %cst {dimension_numbers = #tpu.dot_dimension_numbers<[1], [0], [0], [1], [0, 0, 1, 1], [], []>} : vector<128x784xbf16>, vector<784x128xbf16>, vector<128x128xf32> -> vector<128x128xf32>
    %c0_3 = arith.constant 0 : index
    %c0_4 = arith.constant 0 : index
    %4 = vector.load %arg5[%c0_3, %c0_4] : memref<9x128xf32, #tpu.memory_space<vmem>>, vector<1x128xf32>
    %5 = vector.broadcast %4 : vector<1x128xf32> to vector<128x128xf32>
    %6 = arith.addf %3, %5 : vector<128x128xf32>
    %cst_5 = arith.constant 0.000000e+00 : f32
    %7 = vector.broadcast %cst_5 : f32 to vector<128x128xf32>
    %8 = arith.maximumf %6, %7 : vector<128x128xf32>
    %9 = arith.truncf %8 : vector<128x128xf32> to vector<128x128xbf16>
    %c0_6 = arith.constant 0 : index
    %c0_7 = arith.constant 0 : index
    %c0_8 = arith.constant 0 : index
    %10 = vector.load %arg3[%c0_6, %c0_7, %c0_8] : memref<8x128x128xbf16, #tpu.memory_space<vmem>>, vector<1x128x128xbf16>
    %11 = vector.shape_cast %10 : vector<1x128x128xbf16> to vector<128x128xbf16>
    %cst_9 = arith.constant dense<0.000000e+00> : vector<128x128xf32>
    %12 = tpu.matmul %9, %11, %cst_9 {dimension_numbers = #tpu.dot_dimension_numbers<[1], [0], [0], [1], [0, 0, 1, 1], [], []>} : vector<128x128xbf16>, vector<128x128xbf16>, vector<128x128xf32> -> vector<128x128xf32>
    %c1 = arith.constant 1 : index
    %c0_10 = arith.constant 0 : index
    %13 = vector.load %arg5[%c1, %c0_10] : memref<9x128xf32, #tpu.memory_space<vmem>>, vector<1x128xf32>
    %14 = vector.broadcast %13 : vector<1x128xf32> to vector<128x128xf32>
    %15 = arith.addf %12, %14 : vector<128x128xf32>
    %cst_11 = arith.constant 0.000000e+00 : f32
    %16 = vector.broadcast %cst_11 : f32 to vector<128x128xf32>
    %17 = arith.maximumf %15, %16 : vector<128x128xf32>
    %18 = arith.truncf %17 : vector<128x128xf32> to vector<128x128xbf16>
    %c1_12 = arith.constant 1 : index
    %c0_13 = arith.constant 0 : index
    %c0_14 = arith.constant 0 : index
    %19 = vector.load %arg3[%c1_12, %c0_13, %c0_14] : memref<8x128x128xbf16, #tpu.memory_space<vmem>>, vector<1x128x128xbf16>
    %20 = vector.shape_cast %19 : vector<1x128x128xbf16> to vector<128x128xbf16>
    %cst_15 = arith.constant dense<0.000000e+00> : vector<128x128xf32>
    %21 = tpu.matmul %18, %20, %cst_15 {dimension_numbers = #tpu.dot_dimension_numbers<[1], [0], [0], [1], [0, 0, 1, 1], [], []>} : vector<128x128xbf16>, vector<128x128xbf16>, vector<128x128xf32> -> vector<128x128xf32>
    %c2 = arith.constant 2 : index
    %c0_16 = arith.constant 0 : index
    %22 = vector.load %arg5[%c2, %c0_16] : memref<9x128xf32, #tpu.memory_space<vmem>>, vector<1x128xf32>
    %23 = vector.broadcast %22 : vector<1x128xf32> to vector<128x128xf32>
    %24 = arith.addf %21, %23 : vector<128x128xf32>
    %cst_17 = arith.constant 0.000000e+00 : f32
    %25 = vector.broadcast %cst_17 : f32 to vector<128x128xf32>
    %26 = arith.maximumf %24, %25 : vector<128x128xf32>
    %27 = arith.truncf %26 : vector<128x128xf32> to vector<128x128xbf16>
    %c2_18 = arith.constant 2 : index
    %c0_19 = arith.constant 0 : index
    %c0_20 = arith.constant 0 : index
    %28 = vector.load %arg3[%c2_18, %c0_19, %c0_20] : memref<8x128x128xbf16, #tpu.memory_space<vmem>>, vector<1x128x128xbf16>
    %29 = vector.shape_cast %28 : vector<1x128x128xbf16> to vector<128x128xbf16>
    %cst_21 = arith.constant dense<0.000000e+00> : vector<128x128xf32>
    %30 = tpu.matmul %27, %29, %cst_21 {dimension_numbers = #tpu.dot_dimension_numbers<[1], [0], [0], [1], [0, 0, 1, 1], [], []>} : vector<128x128xbf16>, vector<128x128xbf16>, vector<128x128xf32> -> vector<128x128xf32>
    %c3 = arith.constant 3 : index
    %c0_22 = arith.constant 0 : index
    %31 = vector.load %arg5[%c3, %c0_22] : memref<9x128xf32, #tpu.memory_space<vmem>>, vector<1x128xf32>
    %32 = vector.broadcast %31 : vector<1x128xf32> to vector<128x128xf32>
    %33 = arith.addf %30, %32 : vector<128x128xf32>
    %cst_23 = arith.constant 0.000000e+00 : f32
    %34 = vector.broadcast %cst_23 : f32 to vector<128x128xf32>
    %35 = arith.maximumf %33, %34 : vector<128x128xf32>
    %36 = arith.truncf %35 : vector<128x128xf32> to vector<128x128xbf16>
    %c3_24 = arith.constant 3 : index
    %c0_25 = arith.constant 0 : index
    %c0_26 = arith.constant 0 : index
    %37 = vector.load %arg3[%c3_24, %c0_25, %c0_26] : memref<8x128x128xbf16, #tpu.memory_space<vmem>>, vector<1x128x128xbf16>
    %38 = vector.shape_cast %37 : vector<1x128x128xbf16> to vector<128x128xbf16>
    %cst_27 = arith.constant dense<0.000000e+00> : vector<128x128xf32>
    %39 = tpu.matmul %36, %38, %cst_27 {dimension_numbers = #tpu.dot_dimension_numbers<[1], [0], [0], [1], [0, 0, 1, 1], [], []>} : vector<128x128xbf16>, vector<128x128xbf16>, vector<128x128xf32> -> vector<128x128xf32>
    %c4 = arith.constant 4 : index
    %c0_28 = arith.constant 0 : index
    %40 = vector.load %arg5[%c4, %c0_28] : memref<9x128xf32, #tpu.memory_space<vmem>>, vector<1x128xf32>
    %41 = vector.broadcast %40 : vector<1x128xf32> to vector<128x128xf32>
    %42 = arith.addf %39, %41 : vector<128x128xf32>
    %43 = arith.truncf %42 : vector<128x128xf32> to vector<128x128xbf16>
    %c4_29 = arith.constant 4 : index
    %c0_30 = arith.constant 0 : index
    %c0_31 = arith.constant 0 : index
    %44 = vector.load %arg3[%c4_29, %c0_30, %c0_31] : memref<8x128x128xbf16, #tpu.memory_space<vmem>>, vector<1x128x128xbf16>
    %45 = vector.shape_cast %44 : vector<1x128x128xbf16> to vector<128x128xbf16>
    %cst_32 = arith.constant dense<0.000000e+00> : vector<128x128xf32>
    %46 = tpu.matmul %43, %45, %cst_32 {dimension_numbers = #tpu.dot_dimension_numbers<[1], [0], [0], [1], [0, 0, 1, 1], [], []>} : vector<128x128xbf16>, vector<128x128xbf16>, vector<128x128xf32> -> vector<128x128xf32>
    %c5 = arith.constant 5 : index
    %c0_33 = arith.constant 0 : index
    %47 = vector.load %arg5[%c5, %c0_33] : memref<9x128xf32, #tpu.memory_space<vmem>>, vector<1x128xf32>
    %48 = vector.broadcast %47 : vector<1x128xf32> to vector<128x128xf32>
    %49 = arith.addf %46, %48 : vector<128x128xf32>
    %cst_34 = arith.constant 0.000000e+00 : f32
    %50 = vector.broadcast %cst_34 : f32 to vector<128x128xf32>
    %51 = arith.maximumf %49, %50 : vector<128x128xf32>
    %52 = arith.truncf %51 : vector<128x128xf32> to vector<128x128xbf16>
    %c5_35 = arith.constant 5 : index
    %c0_36 = arith.constant 0 : index
    %c0_37 = arith.constant 0 : index
    %53 = vector.load %arg3[%c5_35, %c0_36, %c0_37] : memref<8x128x128xbf16, #tpu.memory_space<vmem>>, vector<1x128x128xbf16>
    %54 = vector.shape_cast %53 : vector<1x128x128xbf16> to vector<128x128xbf16>
    %cst_38 = arith.constant dense<0.000000e+00> : vector<128x128xf32>
    %55 = tpu.matmul %52, %54, %cst_38 {dimension_numbers = #tpu.dot_dimension_numbers<[1], [0], [0], [1], [0, 0, 1, 1], [], []>} : vector<128x128xbf16>, vector<128x128xbf16>, vector<128x128xf32> -> vector<128x128xf32>
    %c6 = arith.constant 6 : index
    %c0_39 = arith.constant 0 : index
    %56 = vector.load %arg5[%c6, %c0_39] : memref<9x128xf32, #tpu.memory_space<vmem>>, vector<1x128xf32>
    %57 = vector.broadcast %56 : vector<1x128xf32> to vector<128x128xf32>
    %58 = arith.addf %55, %57 : vector<128x128xf32>
    %cst_40 = arith.constant 0.000000e+00 : f32
    %59 = vector.broadcast %cst_40 : f32 to vector<128x128xf32>
    %60 = arith.maximumf %58, %59 : vector<128x128xf32>
    %61 = arith.truncf %60 : vector<128x128xf32> to vector<128x128xbf16>
    %c6_41 = arith.constant 6 : index
    %c0_42 = arith.constant 0 : index
    %c0_43 = arith.constant 0 : index
    %62 = vector.load %arg3[%c6_41, %c0_42, %c0_43] : memref<8x128x128xbf16, #tpu.memory_space<vmem>>, vector<1x128x128xbf16>
    %63 = vector.shape_cast %62 : vector<1x128x128xbf16> to vector<128x128xbf16>
    %cst_44 = arith.constant dense<0.000000e+00> : vector<128x128xf32>
    %64 = tpu.matmul %61, %63, %cst_44 {dimension_numbers = #tpu.dot_dimension_numbers<[1], [0], [0], [1], [0, 0, 1, 1], [], []>} : vector<128x128xbf16>, vector<128x128xbf16>, vector<128x128xf32> -> vector<128x128xf32>
    %c7 = arith.constant 7 : index
    %c0_45 = arith.constant 0 : index
    %65 = vector.load %arg5[%c7, %c0_45] : memref<9x128xf32, #tpu.memory_space<vmem>>, vector<1x128xf32>
    %66 = vector.broadcast %65 : vector<1x128xf32> to vector<128x128xf32>
    %67 = arith.addf %64, %66 : vector<128x128xf32>
    %cst_46 = arith.constant 0.000000e+00 : f32
    %68 = vector.broadcast %cst_46 : f32 to vector<128x128xf32>
    %69 = arith.maximumf %67, %68 : vector<128x128xf32>
    %70 = arith.truncf %69 : vector<128x128xf32> to vector<128x128xbf16>
    %c7_47 = arith.constant 7 : index
    %c0_48 = arith.constant 0 : index
    %c0_49 = arith.constant 0 : index
    %71 = vector.load %arg3[%c7_47, %c0_48, %c0_49] : memref<8x128x128xbf16, #tpu.memory_space<vmem>>, vector<1x128x128xbf16>
    %72 = vector.shape_cast %71 : vector<1x128x128xbf16> to vector<128x128xbf16>
    %cst_50 = arith.constant dense<0.000000e+00> : vector<128x128xf32>
    %73 = tpu.matmul %70, %72, %cst_50 {dimension_numbers = #tpu.dot_dimension_numbers<[1], [0], [0], [1], [0, 0, 1, 1], [], []>} : vector<128x128xbf16>, vector<128x128xbf16>, vector<128x128xf32> -> vector<128x128xf32>
    %c8 = arith.constant 8 : index
    %c0_51 = arith.constant 0 : index
    %74 = vector.load %arg5[%c8, %c0_51] : memref<9x128xf32, #tpu.memory_space<vmem>>, vector<1x128xf32>
    %75 = vector.broadcast %74 : vector<1x128xf32> to vector<128x128xf32>
    %76 = arith.addf %73, %75 : vector<128x128xf32>
    %cst_52 = arith.constant 0.000000e+00 : f32
    %77 = vector.broadcast %cst_52 : f32 to vector<128x128xf32>
    %78 = arith.maximumf %76, %77 : vector<128x128xf32>
    %79 = arith.truncf %78 : vector<128x128xf32> to vector<128x128xbf16>
    %c0_53 = arith.constant 0 : index
    %c0_54 = arith.constant 0 : index
    %80 = vector.load %arg4[%c0_53, %c0_54] : memref<128x784xbf16, #tpu.memory_space<vmem>>, vector<128x784xbf16>
    %cst_55 = arith.constant dense<0.000000e+00> : vector<128x784xf32>
    %81 = tpu.matmul %79, %80, %cst_55 {dimension_numbers = #tpu.dot_dimension_numbers<[1], [0], [0], [1], [0, 0, 1, 1], [], []>} : vector<128x128xbf16>, vector<128x784xbf16>, vector<128x784xf32> -> vector<128x784xf32>
    %c0_56 = arith.constant 0 : index
    %c0_57 = arith.constant 0 : index
    %82 = vector.load %arg6[%c0_56, %c0_57] : memref<1x784xf32, #tpu.memory_space<vmem>>, vector<1x784xf32>
    %83 = vector.broadcast %82 : vector<1x784xf32> to vector<128x784xf32>
    %84 = arith.addf %81, %83 : vector<128x784xf32>
    %85 = arith.negf %84 : vector<128x784xf32>
    %86 = math.exp %85 : vector<128x784xf32>
    %cst_58 = arith.constant 1.000000e+00 : f32
    %87 = vector.broadcast %cst_58 : f32 to vector<128x784xf32>
    %88 = arith.addf %87, %86 : vector<128x784xf32>
    %89 = arith.divf %87, %88 : vector<128x784xf32>
    %90 = arith.truncf %89 : vector<128x784xf32> to vector<128x784xbf16>
    %c0_59 = arith.constant 0 : index
    %c0_60 = arith.constant 0 : index
    %91 = vector.load %arg7[%c0_59, %c0_60] : memref<128x784xbf16, #tpu.memory_space<vmem>>, vector<128x784xbf16>
    tpu.vector_store %arg7[%c0_59, %c0_60], %90 {strides = array<i32>} : memref<128x784xbf16, #tpu.memory_space<vmem>>, vector<128x784xbf16>,
    return
  }
  func.func @transform_0(%arg0: i32) -> (i32, i32) {
    %c0_i32 = arith.constant 0 : i32
    %c0_i32_0 = arith.constant 0 : i32
    return %arg0, %c0_i32 : i32, i32
  }
  func.func @transform_1(%arg0: i32) -> (i32, i32) {
    %c0_i32 = arith.constant 0 : i32
    %c0_i32_0 = arith.constant 0 : i32
    %c0_i32_1 = arith.constant 0 : i32
    return %c0_i32, %c0_i32_0 : i32, i32
  }
  func.func @transform_2(%arg0: i32) -> (i32, i32, i32) {
    %c0_i32 = arith.constant 0 : i32
    %c0_i32_0 = arith.constant 0 : i32
    %c0_i32_1 = arith.constant 0 : i32
    %c0_i32_2 = arith.constant 0 : i32
    return %c0_i32, %c0_i32_0, %c0_i32_1 : i32, i32, i32
  }
  func.func @transform_3(%arg0: i32) -> (i32, i32) {
    %c0_i32 = arith.constant 0 : i32
    %c0_i32_0 = arith.constant 0 : i32
    %c0_i32_1 = arith.constant 0 : i32
    return %c0_i32, %c0_i32_0 : i32, i32
  }
  func.func @transform_4(%arg0: i32) -> (i32, i32) {
    %c0_i32 = arith.constant 0 : i32
    %c0_i32_0 = arith.constant 0 : i32
    %c0_i32_1 = arith.constant 0 : i32
    return %c0_i32, %c0_i32_0 : i32, i32
  }
  func.func @transform_5(%arg0: i32) -> (i32, i32) {
    %c0_i32 = arith.constant 0 : i32
    %c0_i32_0 = arith.constant 0 : i32
    %c0_i32_1 = arith.constant 0 : i32
    return %c0_i32, %c0_i32_0 : i32, i32
  }
  func.func @transform_6(%arg0: i32) -> (i32, i32) {
    %c0_i32 = arith.constant 0 : i32
    %c0_i32_0 = arith.constant 0 : i32
    return %arg0, %c0_i32 : i32, i32
  }
}

</mosaic_0001>

<llo_original>
// kernel: ae_forward.1
$region0: #{ae_forward.1}
  #allocation0 [shape = 'u32[]', space=smem, size = 0x4, offset = 0x4, fixed_abs, tag = 'smem constant byte address 0x4 - core index']
  #allocation1 [shape = 'u32[72,128]{1,0:T(1,128)}', space=vmem, size = 0x9000, scoped, tag = 'internal scratch']
  %s0 = inlined_call_operand.vmem [shape: f32[256,784], index: 0, kind: input, shape index: {}]
  %s1 = inlined_call_operand.vmem [shape: bf16[784,128], index: 1, kind: input, shape index: {}]
  %s2 = inlined_call_operand.vmem [shape: bf16[8,128,128], index: 2, kind: input, shape index: {}]
  %s3 = inlined_call_operand.vmem [shape: bf16[128,784], index: 3, kind: input, shape index: {}]
  %s4 = inlined_call_operand.vmem [shape: f32[9,128], index: 4, kind: input, shape index: {}]
  %s5 = inlined_call_operand.vmem [shape: f32[1,784], index: 5, kind: input, shape index: {}]
  %s6 = inlined_call_operand.vmem [shape: bf16[256,784], index: 6, kind: output, shape index: {}]
  %s7 = sld [smem:[#allocation0]]
  $region57: #{ae_forward.1} parent=0
    _
  %s9 = ssub.s32 1, %s7
  %s10 = scalar_select 0, %s9, %s7
  loop: start=0, step=1, limit=4
  $region2: #{ae_forward.1} parent=0 // loop_pre_header
    _
  $region3: #{ae_forward.1} parent=0 // loop_header
    %s12 = sphi 0, %s16
    %p13 = scmp.ge.s32.totalorder %s12, 4
    %s22 = sphi 0, %s24
    %s25 = sphi 0, %s22
    %s26 = sphi 0, %s25
    %s42 = sphi 0, %s26
    %s46 = sphi 0, %s46
    %s48 = sphi 0, %s46
    %s49 = sphi 0, %s48
    %s63 = sphi 0, %s49
    %s67 = sphi 0, %s67
    %s69 = sphi 0, %s67
    %s70 = sphi 0, %s69
    %s84 = sphi 0, %s70
    %s88 = sphi 0, %s88
    %s90 = sphi 0, %s88
    %s91 = sphi 0, %s90
    %s105 = sphi 0, %s91
    %s109 = sphi 0, %s109
    %s111 = sphi 0, %s109
    %s112 = sphi 0, %s111
    %s126 = sphi 0, %s112
    %s130 = sphi 0, %s130
    %s132 = sphi 0, %s130
    %s133 = sphi 0, %s132
    %s147 = sphi 0, %s133
    %s153 = sphi 0, %s155
    %s156 = sphi 0, %s153
    %s157 = sphi 0, %s156
    %s173 = sphi 0, %s157
  $region4: #{ae_forward.1} parent=0 // loop_header_branch
    %15 = sbr.rel (%p13) target = $region8
  $region5: #{ae_forward.1} parent=0 // loop_body
    %s17 = ssub.s32 %s12, 1
    %s18 = ssub.s32 %s12, 2
    %s19 = sadd.s32 %s12, 1
    %s20 = ssub.s32 %s12, %s19
    %p21 = scmp.eq.s32.totalorder %s20, 0
    %s23 = sadd.s32 %s22, 1
    %s24 = scalar_select %p21, %s22, %s23
    %p27 = pneg %p21
    %p28 = scmp.eq.s32.totalorder %s12, 1
    %p29 = por %p27, %p28
    %p30 = scmp.ne.s32.totalorder %s22, %s25
    %p31 = scmp.eq.s32.totalorder %s12, 0
    %p32 = por %p30, %p31
    %p33 = scmp.ne.s32.totalorder %s22, %s25
    %p34 = scmp.eq.s32.totalorder %s17, 1
    %p35 = por %p33, %p34
    %p36 = scmp.ne.s32.totalorder %s25, %s26
    %p37 = scmp.eq.s32.totalorder %s17, 0
    %p38 = por %p36, %p37
    %p39 = scmp.ne.s32.totalorder %s25, %s26
    %p40 = scmp.eq.s32.totalorder %s18, 1
    %p41 = por %p39, %p40
    %p43 = scmp.ne.s32.totalorder %s26, %s42
    %p44 = scmp.eq.s32.totalorder %s18, 0
    %p45 = por %p43, %p44
    %s47 = sadd.s32 %s46, 1
    %p50 = scmp.eq.s32.totalorder %s12, 1
    %p51 = scmp.ne.s32.totalorder %s46, %s48
    %p52 = scmp.eq.s32.totalorder %s12, 0
    %p53 = por %p51, %p52
    %p54 = scmp.ne.s32.totalorder %s46, %s48
    %p55 = scmp.eq.s32.totalorder %s17, 1
    %p56 = por %p54, %p55
    %p57 = scmp.ne.s32.totalorder %s48, %s49
    %p58 = scmp.eq.s32.totalorder %s17, 0
    %p59 = por %p57, %p58
    %p60 = scmp.ne.s32.totalorder %s48, %s49
    %p61 = scmp.eq.s32.totalorder %s18, 1
    %p62 = por %p60, %p61
    %p64 = scmp.ne.s32.totalorder %s49, %s63
    %p65 = scmp.eq.s32.totalorder %s18, 0
    %p66 = por %p64, %p65
    %s68 = sadd.s32 %s67, 1
    %p71 = scmp.eq.s32.totalorder %s12, 1
    %p72 = scmp.ne.s32.totalorder %s67, %s69
    %p73 = scmp.eq.s32.totalorder %s12, 0
    %p74 = por %p72, %p73
    %p75 = scmp.ne.s32.totalorder %s67, %s69
    %p76 = scmp.eq.s32.totalorder %s17, 1
    %p77 = por %p75, %p76
    %p78 = scmp.ne.s32.totalorder %s69, %s70
    %p79 = scmp.eq.s32.totalorder %s17, 0
    %p80 = por %p78, %p79
    %p81 = scmp.ne.s32.totalorder %s69, %s70
    %p82 = scmp.eq.s32.totalorder %s18, 1
    %p83 = por %p81, %p82
    %p85 = scmp.ne.s32.totalorder %s70, %s84
    %p86 = scmp.eq.s32.totalorder %s18, 0
    %p87 = por %p85, %p86
    %s89 = sadd.s32 %s88, 1
    %p92 = scmp.eq.s32.totalorder %s12, 1
    %p93 = scmp.ne.s32.totalorder %s88, %s90
    %p94 = scmp.eq.s32.totalorder %s12, 0
    %p95 = por %p93, %p94
    %p96 = scmp.ne.s32.totalorder %s88, %s90
    %p97 = scmp.eq.s32.totalorder %s17, 1
    %p98 = por %p96, %p97
    %p99 = scmp.ne.s32.totalorder %s90, %s91
    %p100 = scmp.eq.s32.totalorder %s17, 0
    %p101 = por %p99, %p100
    %p102 = scmp.ne.s32.totalorder %s90, %s91
    %p103 = scmp.eq.s32.totalorder %s18, 1
    %p104 = por %p102, %p103
    %p106 = scmp.ne.s32.totalorder %s91, %s105
    %p107 = scmp.eq.s32.totalorder %s18, 0
    %p108 = por %p106, %p107
    %s110 = sadd.s32 %s109, 1
    %p113 = scmp.eq.s32.totalorder %s12, 1
    %p114 = scmp.ne.s32.totalorder %s109, %s111
    %p115 = scmp.eq.s32.totalorder %s12, 0
    %p116 = por %p114, %p115
    %p117 = scmp.ne.s32.totalorder %s109, %s111
    %p118 = scmp.eq.s32.totalorder %s17, 1
    %p119 = por %p117, %p118
    %p120 = scmp.ne.s32.totalorder %s111, %s112
    %p121 = scmp.eq.s32.totalorder %s17, 0
    %p122 = por %p120, %p121
    %p123 = scmp.ne.s32.totalorder %s111, %s112
    %p124 = scmp.eq.s32.totalorder %s18, 1
    %p125 = por %p123, %p124
    %p127 = scmp.ne.s32.totalorder %s112, %s126
    %p128 = scmp.eq.s32.totalorder %s18, 0
    %p129 = por %p127, %p128
    %s131 = sadd.s32 %s130, 1
    %p134 = scmp.eq.s32.totalorder %s12, 1
    %p135 = scmp.ne.s32.totalorder %s130, %s132
    %p136 = scmp.eq.s32.totalorder %s12, 0
    %p137 = por %p135, %p136
    %p138 = scmp.ne.s32.totalorder %s130, %s132
    %p139 = scmp.eq.s32.totalorder %s17, 1
    %p140 = por %p138, %p139
    %p141 = scmp.ne.s32.totalorder %s132, %s133
    %p142 = scmp.eq.s32.totalorder %s17, 0
    %p143 = por %p141, %p142
    %p144 = scmp.ne.s32.totalorder %s132, %s133
    %p145 = scmp.eq.s32.totalorder %s18, 1
    %p146 = por %p144, %p145
    %p148 = scmp.ne.s32.totalorder %s133, %s147
    %p149 = scmp.eq.s32.totalorder %s18, 0
    %p150 = por %p148, %p149
    %s151 = ssub.s32 %s12, %s19
    %p152 = scmp.eq.s32.totalorder %s151, 0
    %s154 = sadd.s32 %s153, 1
    %s155 = scalar_select %p152, %s153, %s154
    %p158 = pneg %p152
    %p159 = scmp.eq.s32.totalorder %s12, 1
    %p160 = por %p158, %p159
    %p161 = scmp.ne.s32.totalorder %s153, %s156
    %p162 = scmp.eq.s32.totalorder %s12, 0
    %p163 = por %p161, %p162
    %p164 = scmp.ne.s32.totalorder %s153, %s156
    %p165 = scmp.eq.s32.totalorder %s17, 1
    %p166 = por %p164, %p165
    %p167 = scmp.ne.s32.totalorder %s156, %s157
    %p168 = scmp.eq.s32.totalorder %s17, 0
    %p169 = por %p167, %p168
    %p170 = scmp.ne.s32.totalorder %s156, %s157
    %p171 = scmp.eq.s32.totalorder %s18, 1
    %p172 = por %p170, %p171
    %p174 = scmp.ne.s32.totalorder %s157, %s173
    %p175 = scmp.eq.s32.totalorder %s18, 0
    %p176 = por %p174, %p175
    %p177 = scmp.le.s32.totalorder 1, %s12
    %p178 = scmp.lt.s32.totalorder %s12, 3
    %p179 = pnand %p177, %p178
    %p180 = pneg %p179
    // Predicated region
    $region9: #{ae_forward.1} parent=5 // pred_check
      _
    $region10: #{ae_forward.1} parent=5 // pred_check_branch
      %182 = sbr.rel (%p179) target = $region12
    $region11: #{ae_forward.1} parent=5 // pred_region
      %s183 = ssub.s32 %s12, 1
      // Predicated region
      $region13: #{ae_forward.1} parent=11 // pred_check
        %p184 = pneg %p59
      $region14: #{ae_forward.1} parent=11 // pred_check_branch
        %186 = sbr.rel (%p184) target = $region16
      $region15: #{ae_forward.1} parent=11 // pred_region
        _
      $region16: #{ae_forward.1} parent=11 // pred_fallthru
        _
      // Predicated region
      $region17: #{ae_forward.1} parent=11 // pred_check
        %p187 = pneg %p80
      $region18: #{ae_forward.1} parent=11 // pred_check_branch
        %189 = sbr.rel (%p187) target = $region20
      $region19: #{ae_forward.1} parent=11 // pred_region
        _
      $region20: #{ae_forward.1} parent=11 // pred_fallthru
        _
      // Predicated region
      $region21: #{ae_forward.1} parent=11 // pred_check
        %p190 = pneg %p101
      $region22: #{ae_forward.1} parent=11 // pred_check_branch
        %192 = sbr.rel (%p190) target = $region24
      $region23: #{ae_forward.1} parent=11 // pred_region
        _
      $region24: #{ae_forward.1} parent=11 // pred_fallthru
        _
      // Predicated region
      $region25: #{ae_forward.1} parent=11 // pred_check
        %p193 = pneg %p122
      $region26: #{ae_forward.1} parent=11 // pred_check_branch
        %195 = sbr.rel (%p193) target = $region28
      $region27: #{ae_forward.1} parent=11 // pred_region
        _
      $region28: #{ae_forward.1} parent=11 // pred_fallthru
        _
      // Predicated region
      $region29: #{ae_forward.1} parent=11 // pred_check
        %p196 = pneg %p143
      $region30: #{ae_forward.1} parent=11 // pred_check_branch
        %198 = sbr.rel (%p196) target = $region32
      $region31: #{ae_forward.1} parent=11 // pred_region
        _
      $region32: #{ae_forward.1} parent=11 // pred_fallthru
        _
    $region12: #{ae_forward.1} parent=5 // pred_fallthru
      _
    %p199 = scmp.lt.s32.totalorder %s12, 2
    // Predicated region
    $region33: #{ae_forward.1} parent=5 // pred_check
      %p200 = pneg %p199
    $region34: #{ae_forward.1} parent=5 // pred_check_branch
      %202 = sbr.rel (%p200) target = $region36
    $region35: #{ae_forward.1} parent=5 // pred_region
      // Predicated region
      $region37: #{ae_forward.1} parent=35 // pred_check
        %p203 = pneg %p32
      $region38: #{ae_forward.1} parent=35 // pred_check_branch
        %205 = sbr.rel (%p203) target = $region40
      $region39: #{ae_forward.1} parent=35 // pred_region
        %s206 = smul.u32 16, %s12
        %p207 = scmp.lt.s32.totalorder %s206, 31
        %s208 = scalar_select %p207, %s206, 31
        %s209 = smul.addr %s208, 7
        %s210 = smul.addr %s209, 8
        %s211 = scalar_lea.vmem %s0, %s210
        %s212 = smul.u32 16, %s12
      $region40: #{ae_forward.1} parent=35 // pred_fallthru
        _
    $region36: #{ae_forward.1} parent=5 // pred_fallthru
      _
    %p213 = scmp.le.s32.totalorder 1, %s12
    %p214 = scmp.lt.s32.totalorder %s12, 3
    %p215 = pnand %p213, %p214
    %p216 = pneg %p215
    // Predicated region
    $region41: #{ae_forward.1} parent=5 // pred_check
      _
    $region42: #{ae_forward.1} parent=5 // pred_check_branch
      %218 = sbr.rel (%p215) target = $region44
    $region43: #{ae_forward.1} parent=5 // pred_region
      %s219 = ssub.s32 %s12, 1
      %s220 = smul.u32 16, %s17
      %p221 = scmp.lt.s32.totalorder %s220, 31
      %s222 = scalar_select %p221, %s220, 31
      %s223 = smul.addr %s222, 7
      %s224 = smul.addr %s223, 8
      %s225 = scalar_lea.vmem %s0, %s224
      %p226 = pneg %p38
      %p227 = pneg %p35
      %p228 = pneg %p59
      %p229 = pneg %p56
      %p230 = pneg %p80
      %p231 = pneg %p77
      %p232 = pneg %p101
      %p233 = pneg %p98
      %p234 = pneg %p122
      %p235 = pneg %p119
      %p236 = pneg %p143
      %p237 = pneg %p140
      %p238 = pneg %p169
      %p239 = pneg %p166
      %s240 = smul.u32 16, %s17
      %p241 = scmp.lt.s32.totalorder %s240, 31
      %s242 = scalar_select %p241, %s240, 31
      %s243 = smul.addr %s242, 7
      %s244 = smul.addr %s243, 4
      %s245 = scalar_lea.vmem %s6, %s244
      %s246 = smul.u32 16, %s17
      %p247 = scmp.lt.s32.totalorder %s246, 31
      %s248 = scalar_select %p247, %s246, 31
      %s249 = smul.addr %s248, 7
      %s250 = smul.addr %s249, 8
      %s251 = scalar_lea.vmem %s0, %s250
      %s252 = smul.u32 16, %s17
      %s253 = smul.u32 16, %s17
      %p254 = scmp.lt.s32.totalorder %s253, 31
      %s255 = scalar_select %p254, %s253, 31
      %s256 = smul.addr %s255, 7
      %s257 = smul.addr %s256, 4
      %s258 = scalar_lea.vmem %s6, %s257
      %s259 = smul.u32 16, %s17
      %v261 = vld [vmem:[%s251] sm:$0xff]
      %v262 = vld [vmem:[%s251 + $0x8] sm:$0xff]
      %v263 = vld [vmem:[%s251 + $0x10] sm:$0xff]
      %v264 = vld [vmem:[%s251 + $0x18] sm:$0xff]
      %v265 = vld [vmem:[%s251 + $0x20] sm:$0xff]
      %v266 = vld [vmem:[%s251 + $0x28] sm:$0xff]
      %v267 = vld [vmem:[%s251 + $0x30] sm:$0xff]
      %v268 = vld [vmem:[%s251 + $0x38] sm:$0xff]
      %v269 = vld [vmem:[%s251 + $0x40] sm:$0xff]
      %v270 = vld [vmem:[%s251 + $0x48] sm:$0xff]
      %v271 = vld [vmem:[%s251 + $0x50] sm:$0xff]
      %v272 = vld [vmem:[%s251 + $0x58] sm:$0xff]
      %v273 = vld [vmem:[%s251 + $0x60] sm:$0xff]
      %v274 = vld [vmem:[%s251 + $0x68] sm:$0xff]
      %v275 = vld [vmem:[%s251 + $0x70] sm:$0xff]
      %v276 = vld [vmem:[%s251 + $0x78] sm:$0xff]
      %v277 = vld [vmem:[%s251 + $0x80] sm:$0xff]
      %v278 = vld [vmem:[%s251 + $0x88] sm:$0xff]
      %v279 = vld [vmem:[%s251 + $0x90] sm:$0xff]
      %v280 = vld [vmem:[%s251 + $0x98] sm:$0xff]
      %v281 = vld [vmem:[%s251 + $0xa0] sm:$0xff]
      %v282 = vld [vmem:[%s251 + $0xa8] sm:$0xff]
      %v283 = vld [vmem:[%s251 + $0xb0] sm:$0xff]
      %v284 = vld [vmem:[%s251 + $0xb8] sm:$0xff]
      %v285 = vld [vmem:[%s251 + $0xc0] sm:$0xff]
      %v286 = vld [vmem:[%s251 + $0xc8] sm:$0xff]
      %v287 = vld [vmem:[%s251 + $0xd0] sm:$0xff]
      %v288 = vld [vmem:[%s251 + $0xd8] sm:$0xff]
      %v289 = vld [vmem:[%s251 + $0xe0] sm:$0xff]
      %v290 = vld [vmem:[%s251 + $0xe8] sm:$0xff]
      %v291 = vld [vmem:[%s251 + $0xf0] sm:$0xff]
      %v292 = vld [vmem:[%s251 + $0xf8] sm:$0xff]
      %v293 = vld [vmem:[%s251 + $0x100] sm:$0xff]
      %v294 = vld [vmem:[%s251 + $0x108] sm:$0xff]
      %v295 = vld [vmem:[%s251 + $0x110] sm:$0xff]
      %v296 = vld [vmem:[%s251 + $0x118] sm:$0xff]
      %v297 = vld [vmem:[%s251 + $0x120] sm:$0xff]
      %v298 = vld [vmem:[%s251 + $0x128] sm:$0xff]
      %v299 = vld [vmem:[%s251 + $0x130] sm:$0xff]
      %v300 = vld [vmem:[%s251 + $0x138] sm:$0xff]
      %v301 = vld [vmem:[%s251 + $0x140] sm:$0xff]
      %v302 = vld [vmem:[%s251 + $0x148] sm:$0xff]
      %v303 = vld [vmem:[%s251 + $0x150] sm:$0xff]
      %v304 = vld [vmem:[%s251 + $0x158] sm:$0xff]
      %v305 = vld [vmem:[%s251 + $0x160] sm:$0xff]
      %v306 = vld [vmem:[%s251 + $0x168] sm:$0xff]
      %v307 = vld [vmem:[%s251 + $0x170] sm:$0xff]
      %v308 = vld [vmem:[%s251 + $0x178] sm:$0xff]
      %v309 = vld [vmem:[%s251 + $0x180] sm:$0xff]
      %v310 = vld [vmem:[%s251 + $0x188] sm:$0xff]
      %v311 = vld [vmem:[%s251 + $0x190] sm:$0xff]
      %v312 = vld [vmem:[%s251 + $0x198] sm:$0xff]
      %v313 = vld [vmem:[%s251 + $0x1a0] sm:$0xff]
      %v314 = vld [vmem:[%s251 + $0x1a8] sm:$0xff]
      %v315 = vld [vmem:[%s251 + $0x1b0] sm:$0xff]
      %v316 = vld [vmem:[%s251 + $0x1b8] sm:$0xff]
      %v317 = vld [vmem:[%s251 + $0x1c0] sm:$0xff]
      %v318 = vld [vmem:[%s251 + $0x1c8] sm:$0xff]
      %v319 = vld [vmem:[%s251 + $0x1d0] sm:$0xff]
      %v320 = vld [vmem:[%s251 + $0x1d8] sm:$0xff]
      %v321 = vld [vmem:[%s251 + $0x1e0] sm:$0xff]
      %v322 = vld [vmem:[%s251 + $0x1e8] sm:$0xff]
      %v323 = vld [vmem:[%s251 + $0x1f0] sm:$0xff]
      %v324 = vld [vmem:[%s251 + $0x1f8] sm:$0xff]
      %v325 = vld [vmem:[%s251 + $0x200] sm:$0xff]
      %v326 = vld [vmem:[%s251 + $0x208] sm:$0xff]
      %v327 = vld [vmem:[%s251 + $0x210] sm:$0xff]
      %v328 = vld [vmem:[%s251 + $0x218] sm:$0xff]
      %v329 = vld [vmem:[%s251 + $0x220] sm:$0xff]
      %v330 = vld [vmem:[%s251 + $0x228] sm:$0xff]
      %v331 = vld [vmem:[%s251 + $0x230] sm:$0xff]
      %v332 = vld [vmem:[%s251 + $0x238] sm:$0xff]
      %v333 = vld [vmem:[%s251 + $0x240] sm:$0xff]
      %v334 = vld [vmem:[%s251 + $0x248] sm:$0xff]
      %v335 = vld [vmem:[%s251 + $0x250] sm:$0xff]
      %v336 = vld [vmem:[%s251 + $0x258] sm:$0xff]
      %v337 = vld [vmem:[%s251 + $0x260] sm:$0xff]
      %v338 = vld [vmem:[%s251 + $0x268] sm:$0xff]
      %v339 = vld [vmem:[%s251 + $0x270] sm:$0xff]
      %v340 = vld [vmem:[%s251 + $0x278] sm:$0xff]
      %v341 = vld [vmem:[%s251 + $0x280] sm:$0xff]
      %v342 = vld [vmem:[%s251 + $0x288] sm:$0xff]
      %v343 = vld [vmem:[%s251 + $0x290] sm:$0xff]
      %v344 = vld [vmem:[%s251 + $0x298] sm:$0xff]
      %v345 = vld [vmem:[%s251 + $0x2a0] sm:$0xff]
      %v346 = vld [vmem:[%s251 + $0x2a8] sm:$0xff]
      %v347 = vld [vmem:[%s251 + $0x2b0] sm:$0xff]
      %v348 = vld [vmem:[%s251 + $0x2b8] sm:$0xff]
      %v349 = vld [vmem:[%s251 + $0x2c0] sm:$0xff]
      %v350 = vld [vmem:[%s251 + $0x2c8] sm:$0xff]
      %v351 = vld [vmem:[%s251 + $0x2d0] sm:$0xff]
      %v352 = vld [vmem:[%s251 + $0x2d8] sm:$0xff]
      %v353 = vld [vmem:[%s251 + $0x2e0] sm:$0xff]
      %v354 = vld [vmem:[%s251 + $0x2e8] sm:$0xff]
      %v355 = vld [vmem:[%s251 + $0x2f0] sm:$0xff]
      %v356 = vld [vmem:[%s251 + $0x2f8] sm:$0xff]
      %v357 = vld [vmem:[%s251 + $0x300] sm:$0xff]
      %v358 = vld [vmem:[%s251 + $0x308] sm:$0xff]
      %v359 = vld [vmem:[%s251 + $0x310] sm:$0xff]
      %v360 = vld [vmem:[%s251 + $0x318] sm:$0xff]
      %v361 = vld [vmem:[%s251 + $0x320] sm:$0xff]
      %v362 = vld [vmem:[%s251 + $0x328] sm:$0xff]
      %v363 = vld [vmem:[%s251 + $0x330] sm:$0xff]
      %v364 = vld [vmem:[%s251 + $0x338] sm:$0xff]
      %v365 = vld [vmem:[%s251 + $0x340] sm:$0xff]
      %v366 = vld [vmem:[%s251 + $0x348] sm:$0xff]
      %v367 = vld [vmem:[%s251 + $0x350] sm:$0xff]
      %v368 = vld [vmem:[%s251 + $0x358] sm:$0xff]
      %v369 = vld [vmem:[%s251 + $0x360] sm:$0xff]
      %v370 = vld [vmem:[%s251 + $0x368] sm:$0xff]
      %v371 = vld [vmem:[%s251 + $0x370] sm:$0xff]
      %v372 = vld [vmem:[%s251 + $0x378] sm:$0xff]
      %v373 = vpack.c.bf16 %v268, %v261
      %v374 = vpack.c.bf16 %v269, %v262
      %v375 = vpack.c.bf16 %v270, %v263
      %v376 = vpack.c.bf16 %v271, %v264
      %v377 = vpack.c.bf16 %v272, %v265
      %v378 = vpack.c.bf16 %v273, %v266
      %v379 = vpack.c.bf16 %v274, %v267
      %v380 = vpack.c.bf16 %v282, %v275
      %v381 = vpack.c.bf16 %v283, %v276
      %v382 = vpack.c.bf16 %v284, %v277
      %v383 = vpack.c.bf16 %v285, %v278
      %v384 = vpack.c.bf16 %v286, %v279
      %v385 = vpack.c.bf16 %v287, %v280
      %v386 = vpack.c.bf16 %v288, %v281
      %v387 = vpack.c.bf16 %v296, %v289
      %v388 = vpack.c.bf16 %v297, %v290
      %v389 = vpack.c.bf16 %v298, %v291
      %v390 = vpack.c.bf16 %v299, %v292
      %v391 = vpack.c.bf16 %v300, %v293
      %v392 = vpack.c.bf16 %v301, %v294
      %v393 = vpack.c.bf16 %v302, %v295
      %v394 = vpack.c.bf16 %v310, %v303
      %v395 = vpack.c.bf16 %v311, %v304
      %v396 = vpack.c.bf16 %v312, %v305
      %v397 = vpack.c.bf16 %v313, %v306
      %v398 = vpack.c.bf16 %v314, %v307
      %v399 = vpack.c.bf16 %v315, %v308
      %v400 = vpack.c.bf16 %v316, %v309
      %v401 = vpack.c.bf16 %v324, %v317
      %v402 = vpack.c.bf16 %v325, %v318
      %v403 = vpack.c.bf16 %v326, %v319
      %v404 = vpack.c.bf16 %v327, %v320
      %v405 = vpack.c.bf16 %v328, %v321
      %v406 = vpack.c.bf16 %v329, %v322
      %v407 = vpack.c.bf16 %v330, %v323
      %v408 = vpack.c.bf16 %v338, %v331
      %v409 = vpack.c.bf16 %v339, %v332
      %v410 = vpack.c.bf16 %v340, %v333
      %v411 = vpack.c.bf16 %v341, %v334
      %v412 = vpack.c.bf16 %v342, %v335
      %v413 = vpack.c.bf16 %v343, %v336
      %v414 = vpack.c.bf16 %v344, %v337
      %v415 = vpack.c.bf16 %v352, %v345
      %v416 = vpack.c.bf16 %v353, %v346
      %v417 = vpack.c.bf16 %v354, %v347
      %v418 = vpack.c.bf16 %v355, %v348
      %v419 = vpack.c.bf16 %v356, %v349
      %v420 = vpack.c.bf16 %v357, %v350
      %v421 = vpack.c.bf16 %v358, %v351
      %v422 = vpack.c.bf16 %v366, %v359
      %v423 = vpack.c.bf16 %v367, %v360
      %v424 = vpack.c.bf16 %v368, %v361
      %v425 = vpack.c.bf16 %v369, %v362
      %v426 = vpack.c.bf16 %v370, %v363
      %v427 = vpack.c.bf16 %v371, %v364
      %v428 = vpack.c.bf16 %v372, %v365
      %v429 = vld [vmem:[%s1] sm:$0xf]
      %v430 = vld [vmem:[%s1 + $0x4] sm:$0xf]
      %v431 = vld [vmem:[%s1 + $0x8] sm:$0xf]
      %v432 = vld [vmem:[%s1 + $0xc] sm:$0xf]
      %v433 = vld [vmem:[%s1 + $0x10] sm:$0xf]
      %v434 = vld [vmem:[%s1 + $0x14] sm:$0xf]
      %v435 = vld [vmem:[%s1 + $0x18] sm:$0xf]
      %v436 = vld [vmem:[%s1 + $0x1c] sm:$0xf]
      %v437 = vld [vmem:[%s1 + $0x20] sm:$0xf]
      %v438 = vld [vmem:[%s1 + $0x24] sm:$0xf]
      %v439 = vld [vmem:[%s1 + $0x28] sm:$0xf]
      %v440 = vld [vmem:[%s1 + $0x2c] sm:$0xf]
      %v441 = vld [vmem:[%s1 + $0x30] sm:$0xf]
      %v442 = vld [vmem:[%s1 + $0x34] sm:$0xf]
      %v443 = vld [vmem:[%s1 + $0x38] sm:$0xf]
      %v444 = vld [vmem:[%s1 + $0x3c] sm:$0xf]
      %v445 = vld [vmem:[%s1 + $0x40] sm:$0xf]
      %v446 = vld [vmem:[%s1 + $0x44] sm:$0xf]
      %v447 = vld [vmem:[%s1 + $0x48] sm:$0xf]
      %v448 = vld [vmem:[%s1 + $0x4c] sm:$0xf]
      %v449 = vld [vmem:[%s1 + $0x50] sm:$0xf]
      %v450 = vld [vmem:[%s1 + $0x54] sm:$0xf]
      %v451 = vld [vmem:[%s1 + $0x58] sm:$0xf]
      %v452 = vld [vmem:[%s1 + $0x5c] sm:$0xf]
      %v453 = vld [vmem:[%s1 + $0x60] sm:$0xf]
      %v454 = vld [vmem:[%s1 + $0x64] sm:$0xf]
      %v455 = vld [vmem:[%s1 + $0x68] sm:$0xf]
      %v456 = vld [vmem:[%s1 + $0x6c] sm:$0xf]
      %v457 = vld [vmem:[%s1 + $0x70] sm:$0xf]
      %v458 = vld [vmem:[%s1 + $0x74] sm:$0xf]
      %v459 = vld [vmem:[%s1 + $0x78] sm:$0xf]
      %v460 = vld [vmem:[%s1 + $0x7c] sm:$0xf]
      %v461 = vld [vmem:[%s1 + $0x80] sm:$0xf]
      %v462 = vld [vmem:[%s1 + $0x84] sm:$0xf]
      %v463 = vld [vmem:[%s1 + $0x88] sm:$0xf]
      %v464 = vld [vmem:[%s1 + $0x8c] sm:$0xf]
      %v465 = vld [vmem:[%s1 + $0x90] sm:$0xf]
      %v466 = vld [vmem:[%s1 + $0x94] sm:$0xf]
      %v467 = vld [vmem:[%s1 + $0x98] sm:$0xf]
      %v468 = vld [vmem:[%s1 + $0x9c] sm:$0xf]
      %v469 = vld [vmem:[%s1 + $0xa0] sm:$0xf]
      %v470 = vld [vmem:[%s1 + $0xa4] sm:$0xf]
      %v471 = vld [vmem:[%s1 + $0xa8] sm:$0xf]
      %v472 = vld [vmem:[%s1 + $0xac] sm:$0xf]
      %v473 = vld [vmem:[%s1 + $0xb0] sm:$0xf]
      %v474 = vld [vmem:[%s1 + $0xb4] sm:$0xf]
      %v475 = vld [vmem:[%s1 + $0xb8] sm:$0xf]
      %v476 = vld [vmem:[%s1 + $0xbc] sm:$0xf]
      %v477 = vld [vmem:[%s1 + $0xc0] sm:$0xf]
      %v478 = vld [vmem:[%s1 + $0xc4] sm:$0xf]
      %v479 = vld [vmem:[%s1 + $0xc8] sm:$0xf]
      %v480 = vld [vmem:[%s1 + $0xcc] sm:$0xf]
      %v481 = vld [vmem:[%s1 + $0xd0] sm:$0xf]
      %v482 = vld [vmem:[%s1 + $0xd4] sm:$0xf]
      %v483 = vld [vmem:[%s1 + $0xd8] sm:$0xf]
      %v484 = vld [vmem:[%s1 + $0xdc] sm:$0xf]
      %v485 = vld [vmem:[%s1 + $0xe0] sm:$0xf]
      %v486 = vld [vmem:[%s1 + $0xe4] sm:$0xf]
      %v487 = vld [vmem:[%s1 + $0xe8] sm:$0xf]
      %v488 = vld [vmem:[%s1 + $0xec] sm:$0xf]
      %v489 = vld [vmem:[%s1 + $0xf0] sm:$0xf]
      %v490 = vld [vmem:[%s1 + $0xf4] sm:$0xf]
      %v491 = vld [vmem:[%s1 + $0xf8] sm:$0xf]
      %v492 = vld [vmem:[%s1 + $0xfc] sm:$0xf]
      %v493 = vld [vmem:[%s1 + $0x100] sm:$0xf]
      %v494 = vld [vmem:[%s1 + $0x104] sm:$0xf]
      %v495 = vld [vmem:[%s1 + $0x108] sm:$0xf]
      %v496 = vld [vmem:[%s1 + $0x10c] sm:$0xf]
      %v497 = vld [vmem:[%s1 + $0x110] sm:$0xf]
      %v498 = vld [vmem:[%s1 + $0x114] sm:$0xf]
      %v499 = vld [vmem:[%s1 + $0x118] sm:$0xf]
      %v500 = vld [vmem:[%s1 + $0x11c] sm:$0xf]
      %v501 = vld [vmem:[%s1 + $0x120] sm:$0xf]
      %v502 = vld [vmem:[%s1 + $0x124] sm:$0xf]
      %v503 = vld [vmem:[%s1 + $0x128] sm:$0xf]
      %v504 = vld [vmem:[%s1 + $0x12c] sm:$0xf]
      %v505 = vld [vmem:[%s1 + $0x130] sm:$0xf]
      %v506 = vld [vmem:[%s1 + $0x134] sm:$0xf]
      %v507 = vld [vmem:[%s1 + $0x138] sm:$0xf]
      %v508 = vld [vmem:[%s1 + $0x13c] sm:$0xf]
      %v509 = vld [vmem:[%s1 + $0x140] sm:$0xf]
      %v510 = vld [vmem:[%s1 + $0x144] sm:$0xf]
      %v511 = vld [vmem:[%s1 + $0x148] sm:$0xf]
      %v512 = vld [vmem:[%s1 + $0x14c] sm:$0xf]
      %v513 = vld [vmem:[%s1 + $0x150] sm:$0xf]
      %v514 = vld [vmem:[%s1 + $0x154] sm:$0xf]
      %v515 = vld [vmem:[%s1 + $0x158] sm:$0xf]
      %v516 = vld [vmem:[%s1 + $0x15c] sm:$0xf]
      %v517 = vld [vmem:[%s1 + $0x160] sm:$0xf]
      %v518 = vld [vmem:[%s1 + $0x164] sm:$0xf]
      %v519 = vld [vmem:[%s1 + $0x168] sm:$0xf]
      %v520 = vld [vmem:[%s1 + $0x16c] sm:$0xf]
      %v521 = vld [vmem:[%s1 + $0x170] sm:$0xf]
      %v522 = vld [vmem:[%s1 + $0x174] sm:$0xf]
      %v523 = vld [vmem:[%s1 + $0x178] sm:$0xf]
      %v524 = vld [vmem:[%s1 + $0x17c] sm:$0xf]
      %v525 = vld [vmem:[%s1 + $0x180] sm:$0xf]
      %v526 = vld [vmem:[%s1 + $0x184] sm:$0xf]
      %v527 = vld [vmem:[%s4] sm:$0x1]
      %v528 = vperm.slane %v527, 0
      %v627 = vunpack.c.l.b16 %v429
      %v628 = vunpack.c.l.b16 %v430
      %v629 = vunpack.c.l.b16 %v431
      %v630 = vunpack.c.l.b16 %v432
      %v631 = vunpack.c.l.b16 %v433
      %v632 = vunpack.c.l.b16 %v434
      %v633 = vunpack.c.l.b16 %v435
      %v634 = vunpack.c.l.b16 %v436
      %v635 = vunpack.c.l.b16 %v437
      %v636 = vunpack.c.l.b16 %v438
      %v637 = vunpack.c.l.b16 %v439
      %v638 = vunpack.c.l.b16 %v440
      %v639 = vunpack.c.l.b16 %v441
      %v640 = vunpack.c.l.b16 %v442
      %v641 = vunpack.c.l.b16 %v443
      %v642 = vunpack.c.l.b16 %v444
      %v643 = vunpack.c.l.b16 %v445
      %v644 = vunpack.c.l.b16 %v446
      %v645 = vunpack.c.l.b16 %v447
      %v646 = vunpack.c.l.b16 %v448
      %v647 = vunpack.c.l.b16 %v449
      %v648 = vunpack.c.l.b16 %v450
      %v649 = vunpack.c.l.b16 %v451
      %v650 = vunpack.c.l.b16 %v452
      %v651 = vunpack.c.l.b16 %v453
      %v652 = vunpack.c.l.b16 %v454
      %v653 = vunpack.c.l.b16 %v455
      %v654 = vunpack.c.l.b16 %v456
      %v655 = vunpack.c.l.b16 %v457
      %v656 = vunpack.c.l.b16 %v458
      %v657 = vunpack.c.l.b16 %v459
      %v658 = vunpack.c.l.b16 %v460
      %v659 = vunpack.c.l.b16 %v461
      %v660 = vunpack.c.l.b16 %v462
      %v661 = vunpack.c.l.b16 %v463
      %v662 = vunpack.c.l.b16 %v464
      %v663 = vunpack.c.l.b16 %v465
      %v664 = vunpack.c.l.b16 %v466
      %v665 = vunpack.c.l.b16 %v467
      %v666 = vunpack.c.l.b16 %v468
      %v667 = vunpack.c.l.b16 %v469
      %v668 = vunpack.c.l.b16 %v470
      %v669 = vunpack.c.l.b16 %v471
      %v670 = vunpack.c.l.b16 %v472
      %v671 = vunpack.c.l.b16 %v473
      %v672 = vunpack.c.l.b16 %v474
      %v673 = vunpack.c.l.b16 %v475
      %v674 = vunpack.c.l.b16 %v476
      %v675 = vunpack.c.l.b16 %v477
      %v676 = vunpack.c.l.b16 %v478
      %v677 = vunpack.c.l.b16 %v479
      %v678 = vunpack.c.l.b16 %v480
      %v679 = vunpack.c.l.b16 %v481
      %v680 = vunpack.c.l.b16 %v482
      %v681 = vunpack.c.l.b16 %v483
      %v682 = vunpack.c.l.b16 %v484
      %v683 = vunpack.c.l.b16 %v485
      %v684 = vunpack.c.l.b16 %v486
      %v685 = vunpack.c.l.b16 %v487
      %v686 = vunpack.c.l.b16 %v488
      %v687 = vunpack.c.l.b16 %v489
      %v688 = vunpack.c.l.b16 %v490
      %v689 = vunpack.c.l.b16 %v491
      %v690 = vunpack.c.l.b16 %v492
      %v691 = vunpack.c.l.b16 %v493
      %v692 = vunpack.c.l.b16 %v494
      %v693 = vunpack.c.l.b16 %v495
      %v694 = vunpack.c.l.b16 %v496
      %v695 = vunpack.c.l.b16 %v497
      %v696 = vunpack.c.l.b16 %v498
      %v697 = vunpack.c.l.b16 %v499
      %v698 = vunpack.c.l.b16 %v500
      %v699 = vunpack.c.l.b16 %v501
      %v700 = vunpack.c.l.b16 %v502
      %v701 = vunpack.c.l.b16 %v503
      %v702 = vunpack.c.l.b16 %v504
      %v703 = vunpack.c.l.b16 %v505
      %v704 = vunpack.c.l.b16 %v506
      %v705 = vunpack.c.l.b16 %v507
      %v706 = vunpack.c.l.b16 %v508
      %v707 = vunpack.c.l.b16 %v509
      %v708 = vunpack.c.l.b16 %v510
      %v709 = vunpack.c.l.b16 %v511
      %v710 = vunpack.c.l.b16 %v512
      %v711 = vunpack.c.l.b16 %v513
      %v712 = vunpack.c.l.b16 %v514
      %v713 = vunpack.c.l.b16 %v515
      %v714 = vunpack.c.l.b16 %v516
      %v715 = vunpack.c.l.b16 %v517
      %v716 = vunpack.c.l.b16 %v518
      %v717 = vunpack.c.l.b16 %v519
      %v718 = vunpack.c.l.b16 %v520
      %v719 = vunpack.c.l.b16 %v521
      %v720 = vunpack.c.l.b16 %v522
      %v721 = vunpack.c.l.b16 %v523
      %v722 = vunpack.c.l.b16 %v524
      %v723 = vunpack.c.l.b16 %v525
      %v724 = vunpack.c.l.b16 %v526
      %v725 = vpack.c.b16 %v628, %v627
      %v726 = vpack.c.b16 %v630, %v629
      %v727 = vpack.c.b16 %v632, %v631
      %v728 = vpack.c.b16 %v634, %v633
      %v729 = vpack.c.b16 %v636, %v635
      %v730 = vpack.c.b16 %v638, %v637
      %v731 = vpack.c.b16 %v640, %v639
      %v732 = vpack.c.b16 %v642, %v641
      %v733 = vpack.c.b16 %v644, %v643
      %v734 = vpack.c.b16 %v646, %v645
      %v735 = vpack.c.b16 %v648, %v647
      %v736 = vpack.c.b16 %v650, %v649
      %v737 = vpack.c.b16 %v652, %v651
      %v738 = vpack.c.b16 %v654, %v653
      %v739 = vpack.c.b16 %v656, %v655
      %v740 = vpack.c.b16 %v658, %v657
      %v741 = vpack.c.b16 %v660, %v659
      %v742 = vpack.c.b16 %v662, %v661
      %v743 = vpack.c.b16 %v664, %v663
      %v744 = vpack.c.b16 %v666, %v665
      %v745 = vpack.c.b16 %v668, %v667
      %v746 = vpack.c.b16 %v670, %v669
      %v747 = vpack.c.b16 %v672, %v671
      %v748 = vpack.c.b16 %v674, %v673
      %v749 = vpack.c.b16 %v676, %v675
      %v750 = vpack.c.b16 %v678, %v677
      %v751 = vpack.c.b16 %v680, %v679
      %v752 = vpack.c.b16 %v682, %v681
      %v753 = vpack.c.b16 %v684, %v683
      %v754 = vpack.c.b16 %v686, %v685
      %v755 = vpack.c.b16 %v688, %v687
      %v756 = vpack.c.b16 %v690, %v689
      %v757 = vpack.c.b16 %v692, %v691
      %v758 = vpack.c.b16 %v694, %v693
      %v759 = vpack.c.b16 %v696, %v695
      %v760 = vpack.c.b16 %v698, %v697
      %v761 = vpack.c.b16 %v700, %v699
      %v762 = vpack.c.b16 %v702, %v701
      %v763 = vpack.c.b16 %v704, %v703
      %v764 = vpack.c.b16 %v706, %v705
      %v765 = vpack.c.b16 %v708, %v707
      %v766 = vpack.c.b16 %v710, %v709
      %v767 = vpack.c.b16 %v712, %v711
      %v768 = vpack.c.b16 %v714, %v713
      %v769 = vpack.c.b16 %v716, %v715
      %v770 = vpack.c.b16 %v718, %v717
      %v771 = vpack.c.b16 %v720, %v719
      %v772 = vpack.c.b16 %v722, %v721
      %v773 = vpack.c.b16 %v724, %v723
      %vm823 = vcmask 130048
      %v825 = vsel %vm823, %v379, 0
      %v828 = vsel %vm823, %v386, 0
      %v831 = vsel %vm823, %v393, 0
      %v834 = vsel %vm823, %v400, 0
      %v837 = vsel %vm823, %v407, 0
      %v840 = vsel %vm823, %v414, 0
      %v843 = vsel %vm823, %v421, 0
      %v846 = vsel %vm823, %v428, 0
      %848 = vmatpush.bf16.msra.mxu0 %v732
      %849 = vmatpush.bf16.msra.mxu0 %v731
      %850 = vmatpush.bf16.msra.mxu0 %v730
      %851 = vmatpush.bf16.msra.mxu0 %v729
      %852 = vmatpush.bf16.msra.mxu0 %v728
      %853 = vmatpush.bf16.msra.mxu0 %v727
      %854 = vmatpush.bf16.msra.mxu0 %v726
      %855 = vmatpush.bf16.msra.mxu0 %v725
      %856 = vmatmul.bf16.gmra.mxu0 %v373
      %v857 = vpop.f32.mrf.mxu0
      %v858 = vadd.f32 %v528, %v857
      %v859 = vpop.f32.mrf.mxu0
      %v860 = vadd.f32 %v528, %v859
      %861 = vmatmul.bf16.gmra.mxu0 %v380
      %v862 = vpop.f32.mrf.mxu0
      %v863 = vadd.f32 %v528, %v862
      %v864 = vpop.f32.mrf.mxu0
      %v865 = vadd.f32 %v528, %v864
      %866 = vmatmul.bf16.gmra.mxu0 %v387
      %v867 = vpop.f32.mrf.mxu0
      %v868 = vadd.f32 %v528, %v867
      %v869 = vpop.f32.mrf.mxu0
      %v870 = vadd.f32 %v528, %v869
      %871 = vmatmul.bf16.gmra.mxu0 %v394
      %v872 = vpop.f32.mrf.mxu0
      %v873 = vadd.f32 %v528, %v872
      %v874 = vpop.f32.mrf.mxu0
      %v875 = vadd.f32 %v528, %v874
      %876 = vmatmul.bf16.gmra.mxu0 %v401
      %v877 = vpop.f32.mrf.mxu0
      %v878 = vadd.f32 %v528, %v877
      %v879 = vpop.f32.mrf.mxu0
      %v880 = vadd.f32 %v528, %v879
      %881 = vmatmul.bf16.gmra.mxu0 %v408
      %v882 = vpop.f32.mrf.mxu0
      %v883 = vadd.f32 %v528, %v882
      %v884 = vpop.f32.mrf.mxu0
      %v885 = vadd.f32 %v528, %v884
      %886 = vmatmul.bf16.gmra.mxu0 %v415
      %v887 = vpop.f32.mrf.mxu0
      %v888 = vadd.f32 %v528, %v887
      %v889 = vpop.f32.mrf.mxu0
      %v890 = vadd.f32 %v528, %v889
      %891 = vmatmul.bf16.gmra.mxu0 %v422
      %v892 = vpop.f32.mrf.mxu0
      %v893 = vadd.f32 %v528, %v892
      %v894 = vpop.f32.mrf.mxu0
      %v895 = vadd.f32 %v528, %v894
      %896 = vdwg.mxu0
      %897 = vmatpush.bf16.msra.mxu0 %v740
      %898 = vmatpush.bf16.msra.mxu0 %v739
      %899 = vmatpush.bf16.msra.mxu0 %v738
      %900 = vmatpush.bf16.msra.mxu0 %v737
      %901 = vmatpush.bf16.msra.mxu0 %v736
      %902 = vmatpush.bf16.msra.mxu0 %v735
      %903 = vmatpush.bf16.msra.mxu0 %v734
      %904 = vmatpush.bf16.msra.mxu0 %v733
      %905 = vmatmul.bf16.gmra.mxu0 %v374
      %v906 = vpop.f32.mrf.mxu0
      %v907 = vadd.f32 %v858, %v906
      %v908 = vpop.f32.mrf.mxu0
      %v909 = vadd.f32 %v860, %v908
      %910 = vmatmul.bf16.gmra.mxu0 %v381
      %v911 = vpop.f32.mrf.mxu0
      %v912 = vadd.f32 %v863, %v911
      %v913 = vpop.f32.mrf.mxu0
      %v914 = vadd.f32 %v865, %v913
      %915 = vmatmul.bf16.gmra.mxu0 %v388
      %v916 = vpop.f32.mrf.mxu0
      %v917 = vadd.f32 %v868, %v916
      %v918 = vpop.f32.mrf.mxu0
      %v919 = vadd.f32 %v870, %v918
      %920 = vmatmul.bf16.gmra.mxu0 %v395
      %v921 = vpop.f32.mrf.mxu0
      %v922 = vadd.f32 %v873, %v921
      %v923 = vpop.f32.mrf.mxu0
      %v924 = vadd.f32 %v875, %v923
      %925 = vmatmul.bf16.gmra.mxu0 %v402
      %v926 = vpop.f32.mrf.mxu0
      %v927 = vadd.f32 %v878, %v926
      %v928 = vpop.f32.mrf.mxu0
      %v929 = vadd.f32 %v880, %v928
      %930 = vmatmul.bf16.gmra.mxu0 %v409
      %v931 = vpop.f32.mrf.mxu0
      %v932 = vadd.f32 %v883, %v931
      %v933 = vpop.f32.mrf.mxu0
      %v934 = vadd.f32 %v885, %v933
      %935 = vmatmul.bf16.gmra.mxu0 %v416
      %v936 = vpop.f32.mrf.mxu0
      %v937 = vadd.f32 %v888, %v936
      %v938 = vpop.f32.mrf.mxu0
      %v939 = vadd.f32 %v890, %v938
      %940 = vmatmul.bf16.gmra.mxu0 %v423
      %v941 = vpop.f32.mrf.mxu0
      %v942 = vadd.f32 %v893, %v941
      %v943 = vpop.f32.mrf.mxu0
      %v944 = vadd.f32 %v895, %v943
      %945 = vdwg.mxu0
      %946 = vmatpush.bf16.msra.mxu0 %v748
      %947 = vmatpush.bf16.msra.mxu0 %v747
      %948 = vmatpush.bf16.msra.mxu0 %v746
      %949 = vmatpush.bf16.msra.mxu0 %v745
      %950 = vmatpush.bf16.msra.mxu0 %v744
      %951 = vmatpush.bf16.msra.mxu0 %v743
      %952 = vmatpush.bf16.msra.mxu0 %v742
      %953 = vmatpush.bf16.msra.mxu0 %v741
      %954 = vmatmul.bf16.gmra.mxu0 %v375
      %v955 = vpop.f32.mrf.mxu0
      %v956 = vadd.f32 %v907, %v955
      %v957 = vpop.f32.mrf.mxu0
      %v958 = vadd.f32 %v909, %v957
      %959 = vmatmul.bf16.gmra.mxu0 %v382
      %v960 = vpop.f32.mrf.mxu0
      %v961 = vadd.f32 %v912, %v960
      %v962 = vpop.f32.mrf.mxu0
      %v963 = vadd.f32 %v914, %v962
      %964 = vmatmul.bf16.gmra.mxu0 %v389
      %v965 = vpop.f32.mrf.mxu0
      %v966 = vadd.f32 %v917, %v965
      %v967 = vpop.f32.mrf.mxu0
      %v968 = vadd.f32 %v919, %v967
      %969 = vmatmul.bf16.gmra.mxu0 %v396
      %v970 = vpop.f32.mrf.mxu0
      %v971 = vadd.f32 %v922, %v970
      %v972 = vpop.f32.mrf.mxu0
      %v973 = vadd.f32 %v924, %v972
      %974 = vmatmul.bf16.gmra.mxu0 %v403
      %v975 = vpop.f32.mrf.mxu0
      %v976 = vadd.f32 %v927, %v975
      %v977 = vpop.f32.mrf.mxu0
      %v978 = vadd.f32 %v929, %v977
      %979 = vmatmul.bf16.gmra.mxu0 %v410
      %v980 = vpop.f32.mrf.mxu0
      %v981 = vadd.f32 %v932, %v980
      %v982 = vpop.f32.mrf.mxu0
      %v983 = vadd.f32 %v934, %v982
      %984 = vmatmul.bf16.gmra.mxu0 %v417
      %v985 = vpop.f32.mrf.mxu0
      %v986 = vadd.f32 %v937, %v985
      %v987 = vpop.f32.mrf.mxu0
      %v988 = vadd.f32 %v939, %v987
      %989 = vmatmul.bf16.gmra.mxu0 %v424
      %v990 = vpop.f32.mrf.mxu0
      %v991 = vadd.f32 %v942, %v990
      %v992 = vpop.f32.mrf.mxu0
      %v993 = vadd.f32 %v944, %v992
      %994 = vdwg.mxu0
      %995 = vmatpush.bf16.msra.mxu0 %v756
      %996 = vmatpush.bf16.msra.mxu0 %v755
      %997 = vmatpush.bf16.msra.mxu0 %v754
      %998 = vmatpush.bf16.msra.mxu0 %v753
      %999 = vmatpush.bf16.msra.mxu0 %v752
      %1000 = vmatpush.bf16.msra.mxu0 %v751
      %1001 = vmatpush.bf16.msra.mxu0 %v750
      %1002 = vmatpush.bf16.msra.mxu0 %v749
      %1003 = vmatmul.bf16.gmra.mxu0 %v376
      %v1004 = vpop.f32.mrf.mxu0
      %v1005 = vadd.f32 %v956, %v1004
      %v1006 = vpop.f32.mrf.mxu0
      %v1007 = vadd.f32 %v958, %v1006
      %1008 = vmatmul.bf16.gmra.mxu0 %v383
      %v1009 = vpop.f32.mrf.mxu0
      %v1010 = vadd.f32 %v961, %v1009
      %v1011 = vpop.f32.mrf.mxu0
      %v1012 = vadd.f32 %v963, %v1011
      %1013 = vmatmul.bf16.gmra.mxu0 %v390
      %v1014 = vpop.f32.mrf.mxu0
      %v1015 = vadd.f32 %v966, %v1014
      %v1016 = vpop.f32.mrf.mxu0
      %v1017 = vadd.f32 %v968, %v1016
      %1018 = vmatmul.bf16.gmra.mxu0 %v397
      %v1019 = vpop.f32.mrf.mxu0
      %v1020 = vadd.f32 %v971, %v1019
      %v1021 = vpop.f32.mrf.mxu0
      %v1022 = vadd.f32 %v973, %v1021
      %1023 = vmatmul.bf16.gmra.mxu0 %v404
      %v1024 = vpop.f32.mrf.mxu0
      %v1025 = vadd.f32 %v976, %v1024
      %v1026 = vpop.f32.mrf.mxu0
      %v1027 = vadd.f32 %v978, %v1026
      %1028 = vmatmul.bf16.gmra.mxu0 %v411
      %v1029 = vpop.f32.mrf.mxu0
      %v1030 = vadd.f32 %v981, %v1029
      %v1031 = vpop.f32.mrf.mxu0
      %v1032 = vadd.f32 %v983, %v1031
      %1033 = vmatmul.bf16.gmra.mxu0 %v418
      %v1034 = vpop.f32.mrf.mxu0
      %v1035 = vadd.f32 %v986, %v1034
      %v1036 = vpop.f32.mrf.mxu0
      %v1037 = vadd.f32 %v988, %v1036
      %1038 = vmatmul.bf16.gmra.mxu0 %v425
      %v1039 = vpop.f32.mrf.mxu0
      %v1040 = vadd.f32 %v991, %v1039
      %v1041 = vpop.f32.mrf.mxu0
      %v1042 = vadd.f32 %v993, %v1041
      %1043 = vdwg.mxu0
      %1044 = vmatpush.bf16.msra.mxu0 %v764
      %1045 = vmatpush.bf16.msra.mxu0 %v763
      %1046 = vmatpush.bf16.msra.mxu0 %v762
      %1047 = vmatpush.bf16.msra.mxu0 %v761
      %1048 = vmatpush.bf16.msra.mxu0 %v760
      %1049 = vmatpush.bf16.msra.mxu0 %v759
      %1050 = vmatpush.bf16.msra.mxu0 %v758
      %1051 = vmatpush.bf16.msra.mxu0 %v757
      %1052 = vmatmul.bf16.gmra.mxu0 %v377
      %v1053 = vpop.f32.mrf.mxu0
      %v1054 = vadd.f32 %v1005, %v1053
      %v1055 = vpop.f32.mrf.mxu0
      %v1056 = vadd.f32 %v1007, %v1055
      %1057 = vmatmul.bf16.gmra.mxu0 %v384
      %v1058 = vpop.f32.mrf.mxu0
      %v1059 = vadd.f32 %v1010, %v1058
      %v1060 = vpop.f32.mrf.mxu0
      %v1061 = vadd.f32 %v1012, %v1060
      %1062 = vmatmul.bf16.gmra.mxu0 %v391
      %v1063 = vpop.f32.mrf.mxu0
      %v1064 = vadd.f32 %v1015, %v1063
      %v1065 = vpop.f32.mrf.mxu0
      %v1066 = vadd.f32 %v1017, %v1065
      %1067 = vmatmul.bf16.gmra.mxu0 %v398
      %v1068 = vpop.f32.mrf.mxu0
      %v1069 = vadd.f32 %v1020, %v1068
      %v1070 = vpop.f32.mrf.mxu0
      %v1071 = vadd.f32 %v1022, %v1070
      %1072 = vmatmul.bf16.gmra.mxu0 %v405
      %v1073 = vpop.f32.mrf.mxu0
      %v1074 = vadd.f32 %v1025, %v1073
      %v1075 = vpop.f32.mrf.mxu0
      %v1076 = vadd.f32 %v1027, %v1075
      %1077 = vmatmul.bf16.gmra.mxu0 %v412
      %v1078 = vpop.f32.mrf.mxu0
      %v1079 = vadd.f32 %v1030, %v1078
      %v1080 = vpop.f32.mrf.mxu0
      %v1081 = vadd.f32 %v1032, %v1080
      %1082 = vmatmul.bf16.gmra.mxu0 %v419
      %v1083 = vpop.f32.mrf.mxu0
      %v1084 = vadd.f32 %v1035, %v1083
      %v1085 = vpop.f32.mrf.mxu0
      %v1086 = vadd.f32 %v1037, %v1085
      %1087 = vmatmul.bf16.gmra.mxu0 %v426
      %v1088 = vpop.f32.mrf.mxu0
      %v1089 = vadd.f32 %v1040, %v1088
      %v1090 = vpop.f32.mrf.mxu0
      %v1091 = vadd.f32 %v1042, %v1090
      %1092 = vdwg.mxu0
      %1093 = vmatpush.bf16.msra.mxu0 %v772
      %1094 = vmatpush.bf16.msra.mxu0 %v771
      %1095 = vmatpush.bf16.msra.mxu0 %v770
      %1096 = vmatpush.bf16.msra.mxu0 %v769
      %1097 = vmatpush.bf16.msra.mxu0 %v768
      %1098 = vmatpush.bf16.msra.mxu0 %v767
      %1099 = vmatpush.bf16.msra.mxu0 %v766
      %1100 = vmatpush.bf16.msra.mxu0 %v765
      %1101 = vmatmul.bf16.gmra.mxu0 %v378
      %v1102 = vpop.f32.mrf.mxu0
      %v1103 = vadd.f32 %v1054, %v1102
      %v1104 = vpop.f32.mrf.mxu0
      %v1105 = vadd.f32 %v1056, %v1104
      %1106 = vmatmul.bf16.gmra.mxu0 %v385
      %v1107 = vpop.f32.mrf.mxu0
      %v1108 = vadd.f32 %v1059, %v1107
      %v1109 = vpop.f32.mrf.mxu0
      %v1110 = vadd.f32 %v1061, %v1109
      %1111 = vmatmul.bf16.gmra.mxu0 %v392
      %v1112 = vpop.f32.mrf.mxu0
      %v1113 = vadd.f32 %v1064, %v1112
      %v1114 = vpop.f32.mrf.mxu0
      %v1115 = vadd.f32 %v1066, %v1114
      %1116 = vmatmul.bf16.gmra.mxu0 %v399
      %v1117 = vpop.f32.mrf.mxu0
      %v1118 = vadd.f32 %v1069, %v1117
      %v1119 = vpop.f32.mrf.mxu0
      %v1120 = vadd.f32 %v1071, %v1119
      %1121 = vmatmul.bf16.gmra.mxu0 %v406
      %v1122 = vpop.f32.mrf.mxu0
      %v1123 = vadd.f32 %v1074, %v1122
      %v1124 = vpop.f32.mrf.mxu0
      %v1125 = vadd.f32 %v1076, %v1124
      %1126 = vmatmul.bf16.gmra.mxu0 %v413
      %v1127 = vpop.f32.mrf.mxu0
      %v1128 = vadd.f32 %v1079, %v1127
      %v1129 = vpop.f32.mrf.mxu0
      %v1130 = vadd.f32 %v1081, %v1129
      %1131 = vmatmul.bf16.gmra.mxu0 %v420
      %v1132 = vpop.f32.mrf.mxu0
      %v1133 = vadd.f32 %v1084, %v1132
      %v1134 = vpop.f32.mrf.mxu0
      %v1135 = vadd.f32 %v1086, %v1134
      %1136 = vmatmul.bf16.gmra.mxu0 %v427
      %v1137 = vpop.f32.mrf.mxu0
      %v1138 = vadd.f32 %v1089, %v1137
      %v1139 = vpop.f32.mrf.mxu0
      %v1140 = vadd.f32 %v1091, %v1139
      %1141 = vdwg.mxu0
      %1142 = vmatpush.bf16.msra.mxu0 0
      %1143 = vmatpush.bf16.msra.mxu0 0
      %1144 = vmatpush.bf16.msra.mxu0 0
      %1145 = vmatpush.bf16.msra.mxu0 0
      %1146 = vmatpush.bf16.msra.mxu0 0
      %1147 = vmatpush.bf16.msra.mxu0 0
      %1148 = vmatpush.bf16.msra.mxu0 0
      %1149 = vmatpush.bf16.msra.mxu0 %v773
      %1150 = vmatmul.bf16.gmra.mxu0 %v825
      %v1151 = vpop.f32.mrf.mxu0
      %v1152 = vadd.f32 %v1103, %v1151
      %v1153 = vpop.f32.mrf.mxu0
      %v1154 = vadd.f32 %v1105, %v1153
      %1155 = vmatmul.bf16.gmra.mxu0 %v828
      %v1156 = vpop.f32.mrf.mxu0
      %v1157 = vadd.f32 %v1108, %v1156
      %v1158 = vpop.f32.mrf.mxu0
      %v1159 = vadd.f32 %v1110, %v1158
      %1160 = vmatmul.bf16.gmra.mxu0 %v831
      %v1161 = vpop.f32.mrf.mxu0
      %v1162 = vadd.f32 %v1113, %v1161
      %v1163 = vpop.f32.mrf.mxu0
      %v1164 = vadd.f32 %v1115, %v1163
      %1165 = vmatmul.bf16.gmra.mxu0 %v834
      %v1166 = vpop.f32.mrf.mxu0
      %v1167 = vadd.f32 %v1118, %v1166
      %v1168 = vpop.f32.mrf.mxu0
      %v1169 = vadd.f32 %v1120, %v1168
      %1170 = vmatmul.bf16.gmra.mxu0 %v837
      %v1171 = vpop.f32.mrf.mxu0
      %v1172 = vadd.f32 %v1123, %v1171
      %v1173 = vpop.f32.mrf.mxu0
      %v1174 = vadd.f32 %v1125, %v1173
      %1175 = vmatmul.bf16.gmra.mxu0 %v840
      %v1176 = vpop.f32.mrf.mxu0
      %v1177 = vadd.f32 %v1128, %v1176
      %v1178 = vpop.f32.mrf.mxu0
      %v1179 = vadd.f32 %v1130, %v1178
      %1180 = vmatmul.bf16.gmra.mxu0 %v843
      %v1181 = vpop.f32.mrf.mxu0
      %v1182 = vadd.f32 %v1133, %v1181
      %v1183 = vpop.f32.mrf.mxu0
      %v1184 = vadd.f32 %v1135, %v1183
      %1185 = vmatmul.bf16.gmra.mxu0 %v846
      %v1186 = vpop.f32.mrf.mxu0
      %v1187 = vadd.f32 %v1138, %v1186
      %v1188 = vpop.f32.mrf.mxu0
      %v1189 = vadd.f32 %v1140, %v1188
      %1190 = vdwg.mxu0
      %v1191 = vmax.f32 %v1152, 0.0
      %v1192 = vmax.f32 %v1154, 0.0
      %v1193 = vmax.f32 %v1157, 0.0
      %v1194 = vmax.f32 %v1159, 0.0
      %v1195 = vmax.f32 %v1162, 0.0
      %v1196 = vmax.f32 %v1164, 0.0
      %v1197 = vmax.f32 %v1167, 0.0
      %v1198 = vmax.f32 %v1169, 0.0
      %v1199 = vmax.f32 %v1172, 0.0
      %v1200 = vmax.f32 %v1174, 0.0
      %v1201 = vmax.f32 %v1177, 0.0
      %v1202 = vmax.f32 %v1179, 0.0
      %v1203 = vmax.f32 %v1182, 0.0
      %v1204 = vmax.f32 %v1184, 0.0
      %v1205 = vmax.f32 %v1187, 0.0
      %v1206 = vmax.f32 %v1189, 0.0
      %v1207 = vpack.c.bf16 %v1192, %v1191
      %v1208 = vpack.c.bf16 %v1194, %v1193
      %v1209 = vpack.c.bf16 %v1196, %v1195
      %v1210 = vpack.c.bf16 %v1198, %v1197
      %v1211 = vpack.c.bf16 %v1200, %v1199
      %v1212 = vpack.c.bf16 %v1202, %v1201
      %v1213 = vpack.c.bf16 %v1204, %v1203
      %v1214 = vpack.c.bf16 %v1206, %v1205
      %v1215 = vld [vmem:[%s2] sm:$0xf]
      %v1216 = vld [vmem:[%s2 + $0x4] sm:$0xf]
      %v1217 = vld [vmem:[%s2 + $0x8] sm:$0xf]
      %v1218 = vld [vmem:[%s2 + $0xc] sm:$0xf]
      %v1219 = vld [vmem:[%s2 + $0x10] sm:$0xf]
      %v1220 = vld [vmem:[%s2 + $0x14] sm:$0xf]
      %v1221 = vld [vmem:[%s2 + $0x18] sm:$0xf]
      %v1222 = vld [vmem:[%s2 + $0x1c] sm:$0xf]
      %v1223 = vld [vmem:[%s2 + $0x20] sm:$0xf]
      %v1224 = vld [vmem:[%s2 + $0x24] sm:$0xf]
      %v1225 = vld [vmem:[%s2 + $0x28] sm:$0xf]
      %v1226 = vld [vmem:[%s2 + $0x2c] sm:$0xf]
      %v1227 = vld [vmem:[%s2 + $0x30] sm:$0xf]
      %v1228 = vld [vmem:[%s2 + $0x34] sm:$0xf]
      %v1229 = vld [vmem:[%s2 + $0x38] sm:$0xf]
      %v1230 = vld [vmem:[%s2 + $0x3c] sm:$0xf]
      %v1231 = vld [vmem:[%s4 + $0x1] sm:$0x1]
      %v1232 = vperm.slane %v1231, 0
      %v1249 = vunpack.c.l.b16 %v1215
      %v1250 = vunpack.c.l.b16 %v1216
      %v1251 = vunpack.c.l.b16 %v1217
      %v1252 = vunpack.c.l.b16 %v1218
      %v1253 = vunpack.c.l.b16 %v1219
      %v1254 = vunpack.c.l.b16 %v1220
      %v1255 = vunpack.c.l.b16 %v1221
      %v1256 = vunpack.c.l.b16 %v1222
      %v1257 = vunpack.c.l.b16 %v1223
      %v1258 = vunpack.c.l.b16 %v1224
      %v1259 = vunpack.c.l.b16 %v1225
      %v1260 = vunpack.c.l.b16 %v1226
      %v1261 = vunpack.c.l.b16 %v1227
      %v1262 = vunpack.c.l.b16 %v1228
      %v1263 = vunpack.c.l.b16 %v1229
      %v1264 = vunpack.c.l.b16 %v1230
      %v1265 = vpack.c.b16 %v1250, %v1249
      %v1266 = vpack.c.b16 %v1252, %v1251
      %v1267 = vpack.c.b16 %v1254, %v1253
      %v1268 = vpack.c.b16 %v1256, %v1255
      %v1269 = vpack.c.b16 %v1258, %v1257
      %v1270 = vpack.c.b16 %v1260, %v1259
      %v1271 = vpack.c.b16 %v1262, %v1261
      %v1272 = vpack.c.b16 %v1264, %v1263
      %1281 = vmatpush.bf16.msra.mxu0 %v1272
      %1282 = vmatpush.bf16.msra.mxu0 %v1271
      %1283 = vmatpush.bf16.msra.mxu0 %v1270
      %1284 = vmatpush.bf16.msra.mxu0 %v1269
      %1285 = vmatpush.bf16.msra.mxu0 %v1268
      %1286 = vmatpush.bf16.msra.mxu0 %v1267
      %1287 = vmatpush.bf16.msra.mxu0 %v1266
      %1288 = vmatpush.bf16.msra.mxu0 %v1265
      %1289 = vmatmul.bf16.gmra.mxu0 %v1207
      %v1290 = vpop.f32.mrf.mxu0
      %v1291 = vadd.f32 %v1232, %v1290
      %v1292 = vpop.f32.mrf.mxu0
      %v1293 = vadd.f32 %v1232, %v1292
      %1294 = vmatmul.bf16.gmra.mxu0 %v1208
      %v1295 = vpop.f32.mrf.mxu0
      %v1296 = vadd.f32 %v1232, %v1295
      %v1297 = vpop.f32.mrf.mxu0
      %v1298 = vadd.f32 %v1232, %v1297
      %1299 = vmatmul.bf16.gmra.mxu0 %v1209
      %v1300 = vpop.f32.mrf.mxu0
      %v1301 = vadd.f32 %v1232, %v1300
      %v1302 = vpop.f32.mrf.mxu0
      %v1303 = vadd.f32 %v1232, %v1302
      %1304 = vmatmul.bf16.gmra.mxu0 %v1210
      %v1305 = vpop.f32.mrf.mxu0
      %v1306 = vadd.f32 %v1232, %v1305
      %v1307 = vpop.f32.mrf.mxu0
      %v1308 = vadd.f32 %v1232, %v1307
      %1309 = vmatmul.bf16.gmra.mxu0 %v1211
      %v1310 = vpop.f32.mrf.mxu0
      %v1311 = vadd.f32 %v1232, %v1310
      %v1312 = vpop.f32.mrf.mxu0
      %v1313 = vadd.f32 %v1232, %v1312
      %1314 = vmatmul.bf16.gmra.mxu0 %v1212
      %v1315 = vpop.f32.mrf.mxu0
      %v1316 = vadd.f32 %v1232, %v1315
      %v1317 = vpop.f32.mrf.mxu0
      %v1318 = vadd.f32 %v1232, %v1317
      %1319 = vmatmul.bf16.gmra.mxu0 %v1213
      %v1320 = vpop.f32.mrf.mxu0
      %v1321 = vadd.f32 %v1232, %v1320
      %v1322 = vpop.f32.mrf.mxu0
      %v1323 = vadd.f32 %v1232, %v1322
      %1324 = vmatmul.bf16.gmra.mxu0 %v1214
      %v1325 = vpop.f32.mrf.mxu0
      %v1326 = vadd.f32 %v1232, %v1325
      %v1327 = vpop.f32.mrf.mxu0
      %v1328 = vadd.f32 %v1232, %v1327
      %1329 = vdwg.mxu0
      %v1330 = vmax.f32 %v1291, 0.0
      %v1331 = vmax.f32 %v1293, 0.0
      %v1332 = vmax.f32 %v1296, 0.0
      %v1333 = vmax.f32 %v1298, 0.0
      %v1334 = vmax.f32 %v1301, 0.0
      %v1335 = vmax.f32 %v1303, 0.0
      %v1336 = vmax.f32 %v1306, 0.0
      %v1337 = vmax.f32 %v1308, 0.0
      %v1338 = vmax.f32 %v1311, 0.0
      %v1339 = vmax.f32 %v1313, 0.0
      %v1340 = vmax.f32 %v1316, 0.0
      %v1341 = vmax.f32 %v1318, 0.0
      %v1342 = vmax.f32 %v1321, 0.0
      %v1343 = vmax.f32 %v1323, 0.0
      %v1344 = vmax.f32 %v1326, 0.0
      %v1345 = vmax.f32 %v1328, 0.0
      %v1346 = vpack.c.bf16 %v1331, %v1330
      %v1347 = vpack.c.bf16 %v1333, %v1332
      %v1348 = vpack.c.bf16 %v1335, %v1334
      %v1349 = vpack.c.bf16 %v1337, %v1336
      %v1350 = vpack.c.bf16 %v1339, %v1338
      %v1351 = vpack.c.bf16 %v1341, %v1340
      %v1352 = vpack.c.bf16 %v1343, %v1342
      %v1353 = vpack.c.bf16 %v1345, %v1344
      %s1354 = scalar_lea.vmem %s2, 64
      %v1355 = vld [vmem:[%s1354] sm:$0xf]
      %v1356 = vld [vmem:[%s1354 + $0x4] sm:$0xf]
      %v1357 = vld [vmem:[%s1354 + $0x8] sm:$0xf]
      %v1358 = vld [vmem:[%s1354 + $0xc] sm:$0xf]
      %v1359 = vld [vmem:[%s1354 + $0x10] sm:$0xf]
      %v1360 = vld [vmem:[%s1354 + $0x14] sm:$0xf]
      %v1361 = vld [vmem:[%s1354 + $0x18] sm:$0xf]
      %v1362 = vld [vmem:[%s1354 + $0x1c] sm:$0xf]
      %v1363 = vld [vmem:[%s1354 + $0x20] sm:$0xf]
      %v1364 = vld [vmem:[%s1354 + $0x24] sm:$0xf]
      %v1365 = vld [vmem:[%s1354 + $0x28] sm:$0xf]
      %v1366 = vld [vmem:[%s1354 + $0x2c] sm:$0xf]
      %v1367 = vld [vmem:[%s1354 + $0x30] sm:$0xf]
      %v1368 = vld [vmem:[%s1354 + $0x34] sm:$0xf]
      %v1369 = vld [vmem:[%s1354 + $0x38] sm:$0xf]
      %v1370 = vld [vmem:[%s1354 + $0x3c] sm:$0xf]
      %v1371 = vld [vmem:[%s4 + $0x2] sm:$0x1]
      %v1372 = vperm.slane %v1371, 0
      %v1389 = vunpack.c.l.b16 %v1355
      %v1390 = vunpack.c.l.b16 %v1356
      %v1391 = vunpack.c.l.b16 %v1357
      %v1392 = vunpack.c.l.b16 %v1358
      %v1393 = vunpack.c.l.b16 %v1359
      %v1394 = vunpack.c.l.b16 %v1360
      %v1395 = vunpack.c.l.b16 %v1361
      %v1396 = vunpack.c.l.b16 %v1362
      %v1397 = vunpack.c.l.b16 %v1363
      %v1398 = vunpack.c.l.b16 %v1364
      %v1399 = vunpack.c.l.b16 %v1365
      %v1400 = vunpack.c.l.b16 %v1366
      %v1401 = vunpack.c.l.b16 %v1367
      %v1402 = vunpack.c.l.b16 %v1368
      %v1403 = vunpack.c.l.b16 %v1369
      %v1404 = vunpack.c.l.b16 %v1370
      %v1405 = vpack.c.b16 %v1390, %v1389
      %v1406 = vpack.c.b16 %v1392, %v1391
      %v1407 = vpack.c.b16 %v1394, %v1393
      %v1408 = vpack.c.b16 %v1396, %v1395
      %v1409 = vpack.c.b16 %v1398, %v1397
      %v1410 = vpack.c.b16 %v1400, %v1399
      %v1411 = vpack.c.b16 %v1402, %v1401
      %v1412 = vpack.c.b16 %v1404, %v1403
      %1421 = vmatpush.bf16.msra.mxu0 %v1412
      %1422 = vmatpush.bf16.msra.mxu0 %v1411
      %1423 = vmatpush.bf16.msra.mxu0 %v1410
      %1424 = vmatpush.bf16.msra.mxu0 %v1409
      %1425 = vmatpush.bf16.msra.mxu0 %v1408
      %1426 = vmatpush.bf16.msra.mxu0 %v1407
      %1427 = vmatpush.bf16.msra.mxu0 %v1406
      %1428 = vmatpush.bf16.msra.mxu0 %v1405
      %1429 = vmatmul.bf16.gmra.mxu0 %v1346
      %v1430 = vpop.f32.mrf.mxu0
      %v1431 = vadd.f32 %v1372, %v1430
      %v1432 = vpop.f32.mrf.mxu0
      %v1433 = vadd.f32 %v1372, %v1432
      %1434 = vmatmul.bf16.gmra.mxu0 %v1347
      %v1435 = vpop.f32.mrf.mxu0
      %v1436 = vadd.f32 %v1372, %v1435
      %v1437 = vpop.f32.mrf.mxu0
      %v1438 = vadd.f32 %v1372, %v1437
      %1439 = vmatmul.bf16.gmra.mxu0 %v1348
      %v1440 = vpop.f32.mrf.mxu0
      %v1441 = vadd.f32 %v1372, %v1440
      %v1442 = vpop.f32.mrf.mxu0
      %v1443 = vadd.f32 %v1372, %v1442
      %1444 = vmatmul.bf16.gmra.mxu0 %v1349
      %v1445 = vpop.f32.mrf.mxu0
      %v1446 = vadd.f32 %v1372, %v1445
      %v1447 = vpop.f32.mrf.mxu0
      %v1448 = vadd.f32 %v1372, %v1447
      %1449 = vmatmul.bf16.gmra.mxu0 %v1350
      %v1450 = vpop.f32.mrf.mxu0
      %v1451 = vadd.f32 %v1372, %v1450
      %v1452 = vpop.f32.mrf.mxu0
      %v1453 = vadd.f32 %v1372, %v1452
      %1454 = vmatmul.bf16.gmra.mxu0 %v1351
      %v1455 = vpop.f32.mrf.mxu0
      %v1456 = vadd.f32 %v1372, %v1455
      %v1457 = vpop.f32.mrf.mxu0
      %v1458 = vadd.f32 %v1372, %v1457
      %1459 = vmatmul.bf16.gmra.mxu0 %v1352
      %v1460 = vpop.f32.mrf.mxu0
      %v1461 = vadd.f32 %v1372, %v1460
      %v1462 = vpop.f32.mrf.mxu0
      %v1463 = vadd.f32 %v1372, %v1462
      %1464 = vmatmul.bf16.gmra.mxu0 %v1353
      %v1465 = vpop.f32.mrf.mxu0
      %v1466 = vadd.f32 %v1372, %v1465
      %v1467 = vpop.f32.mrf.mxu0
      %v1468 = vadd.f32 %v1372, %v1467
      %1469 = vdwg.mxu0
      %v1470 = vmax.f32 %v1431, 0.0
      %v1471 = vmax.f32 %v1433, 0.0
      %v1472 = vmax.f32 %v1436, 0.0
      %v1473 = vmax.f32 %v1438, 0.0
      %v1474 = vmax.f32 %v1441, 0.0
      %v1475 = vmax.f32 %v1443, 0.0
      %v1476 = vmax.f32 %v1446, 0.0
      %v1477 = vmax.f32 %v1448, 0.0
      %v1478 = vmax.f32 %v1451, 0.0
      %v1479 = vmax.f32 %v1453, 0.0
      %v1480 = vmax.f32 %v1456, 0.0
      %v1481 = vmax.f32 %v1458, 0.0
      %v1482 = vmax.f32 %v1461, 0.0
      %v1483 = vmax.f32 %v1463, 0.0
      %v1484 = vmax.f32 %v1466, 0.0
      %v1485 = vmax.f32 %v1468, 0.0
      %v1486 = vpack.c.bf16 %v1471, %v1470
      %v1487 = vpack.c.bf16 %v1473, %v1472
      %v1488 = vpack.c.bf16 %v1475, %v1474
      %v1489 = vpack.c.bf16 %v1477, %v1476
      %v1490 = vpack.c.bf16 %v1479, %v1478
      %v1491 = vpack.c.bf16 %v1481, %v1480
      %v1492 = vpack.c.bf16 %v1483, %v1482
      %v1493 = vpack.c.bf16 %v1485, %v1484
      %s1494 = scalar_lea.vmem %s2, 128
      %v1495 = vld [vmem:[%s1494] sm:$0xf]
      %v1496 = vld [vmem:[%s1494 + $0x4] sm:$0xf]
      %v1497 = vld [vmem:[%s1494 + $0x8] sm:$0xf]
      %v1498 = vld [vmem:[%s1494 + $0xc] sm:$0xf]
      %v1499 = vld [vmem:[%s1494 + $0x10] sm:$0xf]
      %v1500 = vld [vmem:[%s1494 + $0x14] sm:$0xf]
      %v1501 = vld [vmem:[%s1494 + $0x18] sm:$0xf]
      %v1502 = vld [vmem:[%s1494 + $0x1c] sm:$0xf]
      %v1503 = vld [vmem:[%s1494 + $0x20] sm:$0xf]
      %v1504 = vld [vmem:[%s1494 + $0x24] sm:$0xf]
      %v1505 = vld [vmem:[%s1494 + $0x28] sm:$0xf]
      %v1506 = vld [vmem:[%s1494 + $0x2c] sm:$0xf]
      %v1507 = vld [vmem:[%s1494 + $0x30] sm:$0xf]
      %v1508 = vld [vmem:[%s1494 + $0x34] sm:$0xf]
      %v1509 = vld [vmem:[%s1494 + $0x38] sm:$0xf]
      %v1510 = vld [vmem:[%s1494 + $0x3c] sm:$0xf]
      %v1511 = vld [vmem:[%s4 + $0x3] sm:$0x1]
      %v1512 = vperm.slane %v1511, 0
      %v1529 = vunpack.c.l.b16 %v1495
      %v1530 = vunpack.c.l.b16 %v1496
      %v1531 = vunpack.c.l.b16 %v1497
      %v1532 = vunpack.c.l.b16 %v1498
      %v1533 = vunpack.c.l.b16 %v1499
      %v1534 = vunpack.c.l.b16 %v1500
      %v1535 = vunpack.c.l.b16 %v1501
      %v1536 = vunpack.c.l.b16 %v1502
      %v1537 = vunpack.c.l.b16 %v1503
      %v1538 = vunpack.c.l.b16 %v1504
      %v1539 = vunpack.c.l.b16 %v1505
      %v1540 = vunpack.c.l.b16 %v1506
      %v1541 = vunpack.c.l.b16 %v1507
      %v1542 = vunpack.c.l.b16 %v1508
      %v1543 = vunpack.c.l.b16 %v1509
      %v1544 = vunpack.c.l.b16 %v1510
      %v1545 = vpack.c.b16 %v1530, %v1529
      %v1546 = vpack.c.b16 %v1532, %v1531
      %v1547 = vpack.c.b16 %v1534, %v1533
      %v1548 = vpack.c.b16 %v1536, %v1535
      %v1549 = vpack.c.b16 %v1538, %v1537
      %v1550 = vpack.c.b16 %v1540, %v1539
      %v1551 = vpack.c.b16 %v1542, %v1541
      %v1552 = vpack.c.b16 %v1544, %v1543
      %1561 = vmatpush.bf16.msra.mxu0 %v1552
      %1562 = vmatpush.bf16.msra.mxu0 %v1551
      %1563 = vmatpush.bf16.msra.mxu0 %v1550
      %1564 = vmatpush.bf16.msra.mxu0 %v1549
      %1565 = vmatpush.bf16.msra.mxu0 %v1548
      %1566 = vmatpush.bf16.msra.mxu0 %v1547
      %1567 = vmatpush.bf16.msra.mxu0 %v1546
      %1568 = vmatpush.bf16.msra.mxu0 %v1545
      %1569 = vmatmul.bf16.gmra.mxu0 %v1486
      %v1570 = vpop.f32.mrf.mxu0
      %v1571 = vadd.f32 %v1512, %v1570
      %v1572 = vpop.f32.mrf.mxu0
      %v1573 = vadd.f32 %v1512, %v1572
      %1574 = vmatmul.bf16.gmra.mxu0 %v1487
      %v1575 = vpop.f32.mrf.mxu0
      %v1576 = vadd.f32 %v1512, %v1575
      %v1577 = vpop.f32.mrf.mxu0
      %v1578 = vadd.f32 %v1512, %v1577
      %1579 = vmatmul.bf16.gmra.mxu0 %v1488
      %v1580 = vpop.f32.mrf.mxu0
      %v1581 = vadd.f32 %v1512, %v1580
      %v1582 = vpop.f32.mrf.mxu0
      %v1583 = vadd.f32 %v1512, %v1582
      %1584 = vmatmul.bf16.gmra.mxu0 %v1489
      %v1585 = vpop.f32.mrf.mxu0
      %v1586 = vadd.f32 %v1512, %v1585
      %v1587 = vpop.f32.mrf.mxu0
      %v1588 = vadd.f32 %v1512, %v1587
      %1589 = vmatmul.bf16.gmra.mxu0 %v1490
      %v1590 = vpop.f32.mrf.mxu0
      %v1591 = vadd.f32 %v1512, %v1590
      %v1592 = vpop.f32.mrf.mxu0
      %v1593 = vadd.f32 %v1512, %v1592
      %1594 = vmatmul.bf16.gmra.mxu0 %v1491
      %v1595 = vpop.f32.mrf.mxu0
      %v1596 = vadd.f32 %v1512, %v1595
      %v1597 = vpop.f32.mrf.mxu0
      %v1598 = vadd.f32 %v1512, %v1597
      %1599 = vmatmul.bf16.gmra.mxu0 %v1492
      %v1600 = vpop.f32.mrf.mxu0
      %v1601 = vadd.f32 %v1512, %v1600
      %v1602 = vpop.f32.mrf.mxu0
      %v1603 = vadd.f32 %v1512, %v1602
      %1604 = vmatmul.bf16.gmra.mxu0 %v1493
      %v1605 = vpop.f32.mrf.mxu0
      %v1606 = vadd.f32 %v1512, %v1605
      %v1607 = vpop.f32.mrf.mxu0
      %v1608 = vadd.f32 %v1512, %v1607
      %1609 = vdwg.mxu0
      %v1610 = vmax.f32 %v1571, 0.0
      %v1611 = vmax.f32 %v1573, 0.0
      %v1612 = vmax.f32 %v1576, 0.0
      %v1613 = vmax.f32 %v1578, 0.0
      %v1614 = vmax.f32 %v1581, 0.0
      %v1615 = vmax.f32 %v1583, 0.0
      %v1616 = vmax.f32 %v1586, 0.0
      %v1617 = vmax.f32 %v1588, 0.0
      %v1618 = vmax.f32 %v1591, 0.0
      %v1619 = vmax.f32 %v1593, 0.0
      %v1620 = vmax.f32 %v1596, 0.0
      %v1621 = vmax.f32 %v1598, 0.0
      %v1622 = vmax.f32 %v1601, 0.0
      %v1623 = vmax.f32 %v1603, 0.0
      %v1624 = vmax.f32 %v1606, 0.0
      %v1625 = vmax.f32 %v1608, 0.0
      %v1626 = vpack.c.bf16 %v1611, %v1610
      %v1627 = vpack.c.bf16 %v1613, %v1612
      %v1628 = vpack.c.bf16 %v1615, %v1614
      %v1629 = vpack.c.bf16 %v1617, %v1616
      %v1630 = vpack.c.bf16 %v1619, %v1618
      %v1631 = vpack.c.bf16 %v1621, %v1620
      %v1632 = vpack.c.bf16 %v1623, %v1622
      %v1633 = vpack.c.bf16 %v1625, %v1624
      %s1634 = scalar_lea.vmem %s2, 192
      %v1635 = vld [vmem:[%s1634] sm:$0xf]
      %v1636 = vld [vmem:[%s1634 + $0x4] sm:$0xf]
      %v1637 = vld [vmem:[%s1634 + $0x8] sm:$0xf]
      %v1638 = vld [vmem:[%s1634 + $0xc] sm:$0xf]
      %v1639 = vld [vmem:[%s1634 + $0x10] sm:$0xf]
      %v1640 = vld [vmem:[%s1634 + $0x14] sm:$0xf]
      %v1641 = vld [vmem:[%s1634 + $0x18] sm:$0xf]
      %v1642 = vld [vmem:[%s1634 + $0x1c] sm:$0xf]
      %v1643 = vld [vmem:[%s1634 + $0x20] sm:$0xf]
      %v1644 = vld [vmem:[%s1634 + $0x24] sm:$0xf]
      %v1645 = vld [vmem:[%s1634 + $0x28] sm:$0xf]
      %v1646 = vld [vmem:[%s1634 + $0x2c] sm:$0xf]
      %v1647 = vld [vmem:[%s1634 + $0x30] sm:$0xf]
      %v1648 = vld [vmem:[%s1634 + $0x34] sm:$0xf]
      %v1649 = vld [vmem:[%s1634 + $0x38] sm:$0xf]
      %v1650 = vld [vmem:[%s1634 + $0x3c] sm:$0xf]
      %v1651 = vld [vmem:[%s4 + $0x4] sm:$0x1]
      %v1652 = vperm.slane %v1651, 0
      %v1669 = vunpack.c.l.b16 %v1635
      %v1670 = vunpack.c.l.b16 %v1636
      %v1671 = vunpack.c.l.b16 %v1637
      %v1672 = vunpack.c.l.b16 %v1638
      %v1673 = vunpack.c.l.b16 %v1639
      %v1674 = vunpack.c.l.b16 %v1640
      %v1675 = vunpack.c.l.b16 %v1641
      %v1676 = vunpack.c.l.b16 %v1642
      %v1677 = vunpack.c.l.b16 %v1643
      %v1678 = vunpack.c.l.b16 %v1644
      %v1679 = vunpack.c.l.b16 %v1645
      %v1680 = vunpack.c.l.b16 %v1646
      %v1681 = vunpack.c.l.b16 %v1647
      %v1682 = vunpack.c.l.b16 %v1648
      %v1683 = vunpack.c.l.b16 %v1649
      %v1684 = vunpack.c.l.b16 %v1650
      %v1685 = vpack.c.b16 %v1670, %v1669
      %v1686 = vpack.c.b16 %v1672, %v1671
      %v1687 = vpack.c.b16 %v1674, %v1673
      %v1688 = vpack.c.b16 %v1676, %v1675
      %v1689 = vpack.c.b16 %v1678, %v1677
      %v1690 = vpack.c.b16 %v1680, %v1679
      %v1691 = vpack.c.b16 %v1682, %v1681
      %v1692 = vpack.c.b16 %v1684, %v1683
      %1701 = vmatpush.bf16.msra.mxu0 %v1692
      %1702 = vmatpush.bf16.msra.mxu0 %v1691
      %1703 = vmatpush.bf16.msra.mxu0 %v1690
      %1704 = vmatpush.bf16.msra.mxu0 %v1689
      %1705 = vmatpush.bf16.msra.mxu0 %v1688
      %1706 = vmatpush.bf16.msra.mxu0 %v1687
      %1707 = vmatpush.bf16.msra.mxu0 %v1686
      %1708 = vmatpush.bf16.msra.mxu0 %v1685
      %1709 = vmatmul.bf16.gmra.mxu0 %v1626
      %v1710 = vpop.f32.mrf.mxu0
      %v1711 = vadd.f32 %v1652, %v1710
      %v1712 = vpop.f32.mrf.mxu0
      %v1713 = vadd.f32 %v1652, %v1712
      %1714 = vmatmul.bf16.gmra.mxu0 %v1627
      %v1715 = vpop.f32.mrf.mxu0
      %v1716 = vadd.f32 %v1652, %v1715
      %v1717 = vpop.f32.mrf.mxu0
      %v1718 = vadd.f32 %v1652, %v1717
      %1719 = vmatmul.bf16.gmra.mxu0 %v1628
      %v1720 = vpop.f32.mrf.mxu0
      %v1721 = vadd.f32 %v1652, %v1720
      %v1722 = vpop.f32.mrf.mxu0
      %v1723 = vadd.f32 %v1652, %v1722
      %1724 = vmatmul.bf16.gmra.mxu0 %v1629
      %v1725 = vpop.f32.mrf.mxu0
      %v1726 = vadd.f32 %v1652, %v1725
      %v1727 = vpop.f32.mrf.mxu0
      %v1728 = vadd.f32 %v1652, %v1727
      %1729 = vmatmul.bf16.gmra.mxu0 %v1630
      %v1730 = vpop.f32.mrf.mxu0
      %v1731 = vadd.f32 %v1652, %v1730
      %v1732 = vpop.f32.mrf.mxu0
      %v1733 = vadd.f32 %v1652, %v1732
      %1734 = vmatmul.bf16.gmra.mxu0 %v1631
      %v1735 = vpop.f32.mrf.mxu0
      %v1736 = vadd.f32 %v1652, %v1735
      %v1737 = vpop.f32.mrf.mxu0
      %v1738 = vadd.f32 %v1652, %v1737
      %1739 = vmatmul.bf16.gmra.mxu0 %v1632
      %v1740 = vpop.f32.mrf.mxu0
      %v1741 = vadd.f32 %v1652, %v1740
      %v1742 = vpop.f32.mrf.mxu0
      %v1743 = vadd.f32 %v1652, %v1742
      %1744 = vmatmul.bf16.gmra.mxu0 %v1633
      %v1745 = vpop.f32.mrf.mxu0
      %v1746 = vadd.f32 %v1652, %v1745
      %v1747 = vpop.f32.mrf.mxu0
      %v1748 = vadd.f32 %v1652, %v1747
      %1749 = vdwg.mxu0
      %v1750 = vpack.c.bf16 %v1713, %v1711
      %v1751 = vpack.c.bf16 %v1718, %v1716
      %v1752 = vpack.c.bf16 %v1723, %v1721
      %v1753 = vpack.c.bf16 %v1728, %v1726
      %v1754 = vpack.c.bf16 %v1733, %v1731
      %v1755 = vpack.c.bf16 %v1738, %v1736
      %v1756 = vpack.c.bf16 %v1743, %v1741
      %v1757 = vpack.c.bf16 %v1748, %v1746
      %s1758 = scalar_lea.vmem %s2, 256
      %v1759 = vld [vmem:[%s1758] sm:$0xf]
      %v1760 = vld [vmem:[%s1758 + $0x4] sm:$0xf]
      %v1761 = vld [vmem:[%s1758 + $0x8] sm:$0xf]
      %v1762 = vld [vmem:[%s1758 + $0xc] sm:$0xf]
      %v1763 = vld [vmem:[%s1758 + $0x10] sm:$0xf]
      %v1764 = vld [vmem:[%s1758 + $0x14] sm:$0xf]
      %v1765 = vld [vmem:[%s1758 + $0x18] sm:$0xf]
      %v1766 = vld [vmem:[%s1758 + $0x1c] sm:$0xf]
      %v1767 = vld [vmem:[%s1758 + $0x20] sm:$0xf]
      %v1768 = vld [vmem:[%s1758 + $0x24] sm:$0xf]
      %v1769 = vld [vmem:[%s1758 + $0x28] sm:$0xf]
      %v1770 = vld [vmem:[%s1758 + $0x2c] sm:$0xf]
      %v1771 = vld [vmem:[%s1758 + $0x30] sm:$0xf]
      %v1772 = vld [vmem:[%s1758 + $0x34] sm:$0xf]
      %v1773 = vld [vmem:[%s1758 + $0x38] sm:$0xf]
      %v1774 = vld [vmem:[%s1758 + $0x3c] sm:$0xf]
      %v1775 = vld [vmem:[%s4 + $0x5] sm:$0x1]
      %v1776 = vperm.slane %v1775, 0
      %v1793 = vunpack.c.l.b16 %v1759
      %v1794 = vunpack.c.l.b16 %v1760
      %v1795 = vunpack.c.l.b16 %v1761
      %v1796 = vunpack.c.l.b16 %v1762
      %v1797 = vunpack.c.l.b16 %v1763
      %v1798 = vunpack.c.l.b16 %v1764
      %v1799 = vunpack.c.l.b16 %v1765
      %v1800 = vunpack.c.l.b16 %v1766
      %v1801 = vunpack.c.l.b16 %v1767
      %v1802 = vunpack.c.l.b16 %v1768
      %v1803 = vunpack.c.l.b16 %v1769
      %v1804 = vunpack.c.l.b16 %v1770
      %v1805 = vunpack.c.l.b16 %v1771
      %v1806 = vunpack.c.l.b16 %v1772
      %v1807 = vunpack.c.l.b16 %v1773
      %v1808 = vunpack.c.l.b16 %v1774
      %v1809 = vpack.c.b16 %v1794, %v1793
      %v1810 = vpack.c.b16 %v1796, %v1795
      %v1811 = vpack.c.b16 %v1798, %v1797
      %v1812 = vpack.c.b16 %v1800, %v1799
      %v1813 = vpack.c.b16 %v1802, %v1801
      %v1814 = vpack.c.b16 %v1804, %v1803
      %v1815 = vpack.c.b16 %v1806, %v1805
      %v1816 = vpack.c.b16 %v1808, %v1807
      %1825 = vmatpush.bf16.msra.mxu0 %v1816
      %1826 = vmatpush.bf16.msra.mxu0 %v1815
      %1827 = vmatpush.bf16.msra.mxu0 %v1814
      %1828 = vmatpush.bf16.msra.mxu0 %v1813
      %1829 = vmatpush.bf16.msra.mxu0 %v1812
      %1830 = vmatpush.bf16.msra.mxu0 %v1811
      %1831 = vmatpush.bf16.msra.mxu0 %v1810
      %1832 = vmatpush.bf16.msra.mxu0 %v1809
      %1833 = vmatmul.bf16.gmra.mxu0 %v1750
      %v1834 = vpop.f32.mrf.mxu0
      %v1835 = vadd.f32 %v1776, %v1834
      %v1836 = vpop.f32.mrf.mxu0
      %v1837 = vadd.f32 %v1776, %v1836
      %1838 = vmatmul.bf16.gmra.mxu0 %v1751
      %v1839 = vpop.f32.mrf.mxu0
      %v1840 = vadd.f32 %v1776, %v1839
      %v1841 = vpop.f32.mrf.mxu0
      %v1842 = vadd.f32 %v1776, %v1841
      %1843 = vmatmul.bf16.gmra.mxu0 %v1752
      %v1844 = vpop.f32.mrf.mxu0
      %v1845 = vadd.f32 %v1776, %v1844
      %v1846 = vpop.f32.mrf.mxu0
      %v1847 = vadd.f32 %v1776, %v1846
      %1848 = vmatmul.bf16.gmra.mxu0 %v1753
      %v1849 = vpop.f32.mrf.mxu0
      %v1850 = vadd.f32 %v1776, %v1849
      %v1851 = vpop.f32.mrf.mxu0
      %v1852 = vadd.f32 %v1776, %v1851
      %1853 = vmatmul.bf16.gmra.mxu0 %v1754
      %v1854 = vpop.f32.mrf.mxu0
      %v1855 = vadd.f32 %v1776, %v1854
      %v1856 = vpop.f32.mrf.mxu0
      %v1857 = vadd.f32 %v1776, %v1856
      %1858 = vmatmul.bf16.gmra.mxu0 %v1755
      %v1859 = vpop.f32.mrf.mxu0
      %v1860 = vadd.f32 %v1776, %v1859
      %v1861 = vpop.f32.mrf.mxu0
      %v1862 = vadd.f32 %v1776, %v1861
      %1863 = vmatmul.bf16.gmra.mxu0 %v1756
      %v1864 = vpop.f32.mrf.mxu0
      %v1865 = vadd.f32 %v1776, %v1864
      %v1866 = vpop.f32.mrf.mxu0
      %v1867 = vadd.f32 %v1776, %v1866
      %1868 = vmatmul.bf16.gmra.mxu0 %v1757
      %v1869 = vpop.f32.mrf.mxu0
      %v1870 = vadd.f32 %v1776, %v1869
      %v1871 = vpop.f32.mrf.mxu0
      %v1872 = vadd.f32 %v1776, %v1871
      %1873 = vdwg.mxu0
      %v1874 = vmax.f32 %v1835, 0.0
      %v1875 = vmax.f32 %v1837, 0.0
      %v1876 = vmax.f32 %v1840, 0.0
      %v1877 = vmax.f32 %v1842, 0.0
      %v1878 = vmax.f32 %v1845, 0.0
      %v1879 = vmax.f32 %v1847, 0.0
      %v1880 = vmax.f32 %v1850, 0.0
      %v1881 = vmax.f32 %v1852, 0.0
      %v1882 = vmax.f32 %v1855, 0.0
      %v1883 = vmax.f32 %v1857, 0.0
      %v1884 = vmax.f32 %v1860, 0.0
      %v1885 = vmax.f32 %v1862, 0.0
      %v1886 = vmax.f32 %v1865, 0.0
      %v1887 = vmax.f32 %v1867, 0.0
      %v1888 = vmax.f32 %v1870, 0.0
      %v1889 = vmax.f32 %v1872, 0.0
      %v1890 = vpack.c.bf16 %v1875, %v1874
      %v1891 = vpack.c.bf16 %v1877, %v1876
      %v1892 = vpack.c.bf16 %v1879, %v1878
      %v1893 = vpack.c.bf16 %v1881, %v1880
      %v1894 = vpack.c.bf16 %v1883, %v1882
      %v1895 = vpack.c.bf16 %v1885, %v1884
      %v1896 = vpack.c.bf16 %v1887, %v1886
      %v1897 = vpack.c.bf16 %v1889, %v1888
      %s1898 = scalar_lea.vmem %s2, 320
      %v1899 = vld [vmem:[%s1898] sm:$0xf]
      %v1900 = vld [vmem:[%s1898 + $0x4] sm:$0xf]
      %v1901 = vld [vmem:[%s1898 + $0x8] sm:$0xf]
      %v1902 = vld [vmem:[%s1898 + $0xc] sm:$0xf]
      %v1903 = vld [vmem:[%s1898 + $0x10] sm:$0xf]
      %v1904 = vld [vmem:[%s1898 + $0x14] sm:$0xf]
      %v1905 = vld [vmem:[%s1898 + $0x18] sm:$0xf]
      %v1906 = vld [vmem:[%s1898 + $0x1c] sm:$0xf]
      %v1907 = vld [vmem:[%s1898 + $0x20] sm:$0xf]
      %v1908 = vld [vmem:[%s1898 + $0x24] sm:$0xf]
      %v1909 = vld [vmem:[%s1898 + $0x28] sm:$0xf]
      %v1910 = vld [vmem:[%s1898 + $0x2c] sm:$0xf]
      %v1911 = vld [vmem:[%s1898 + $0x30] sm:$0xf]
      %v1912 = vld [vmem:[%s1898 + $0x34] sm:$0xf]
      %v1913 = vld [vmem:[%s1898 + $0x38] sm:$0xf]
      %v1914 = vld [vmem:[%s1898 + $0x3c] sm:$0xf]
      %v1915 = vld [vmem:[%s4 + $0x6] sm:$0x1]
      %v1916 = vperm.slane %v1915, 0
      %v1933 = vunpack.c.l.b16 %v1899
      %v1934 = vunpack.c.l.b16 %v1900
      %v1935 = vunpack.c.l.b16 %v1901
      %v1936 = vunpack.c.l.b16 %v1902
      %v1937 = vunpack.c.l.b16 %v1903
      %v1938 = vunpack.c.l.b16 %v1904
      %v1939 = vunpack.c.l.b16 %v1905
      %v1940 = vunpack.c.l.b16 %v1906
      %v1941 = vunpack.c.l.b16 %v1907
      %v1942 = vunpack.c.l.b16 %v1908
      %v1943 = vunpack.c.l.b16 %v1909
      %v1944 = vunpack.c.l.b16 %v1910
      %v1945 = vunpack.c.l.b16 %v1911
      %v1946 = vunpack.c.l.b16 %v1912
      %v1947 = vunpack.c.l.b16 %v1913
      %v1948 = vunpack.c.l.b16 %v1914
      %v1949 = vpack.c.b16 %v1934, %v1933
      %v1950 = vpack.c.b16 %v1936, %v1935
      %v1951 = vpack.c.b16 %v1938, %v1937
      %v1952 = vpack.c.b16 %v1940, %v1939
      %v1953 = vpack.c.b16 %v1942, %v1941
      %v1954 = vpack.c.b16 %v1944, %v1943
      %v1955 = vpack.c.b16 %v1946, %v1945
      %v1956 = vpack.c.b16 %v1948, %v1947
      %1965 = vmatpush.bf16.msra.mxu0 %v1956
      %1966 = vmatpush.bf16.msra.mxu0 %v1955
      %1967 = vmatpush.bf16.msra.mxu0 %v1954
      %1968 = vmatpush.bf16.msra.mxu0 %v1953
      %1969 = vmatpush.bf16.msra.mxu0 %v1952
      %1970 = vmatpush.bf16.msra.mxu0 %v1951
      %1971 = vmatpush.bf16.msra.mxu0 %v1950
      %1972 = vmatpush.bf16.msra.mxu0 %v1949
      %1973 = vmatmul.bf16.gmra.mxu0 %v1890
      %v1974 = vpop.f32.mrf.mxu0
      %v1975 = vadd.f32 %v1916, %v1974
      %v1976 = vpop.f32.mrf.mxu0
      %v1977 = vadd.f32 %v1916, %v1976
      %1978 = vmatmul.bf16.gmra.mxu0 %v1891
      %v1979 = vpop.f32.mrf.mxu0
      %v1980 = vadd.f32 %v1916, %v1979
      %v1981 = vpop.f32.mrf.mxu0
      %v1982 = vadd.f32 %v1916, %v1981
      %1983 = vmatmul.bf16.gmra.mxu0 %v1892
      %v1984 = vpop.f32.mrf.mxu0
      %v1985 = vadd.f32 %v1916, %v1984
      %v1986 = vpop.f32.mrf.mxu0
      %v1987 = vadd.f32 %v1916, %v1986
      %1988 = vmatmul.bf16.gmra.mxu0 %v1893
      %v1989 = vpop.f32.mrf.mxu0
      %v1990 = vadd.f32 %v1916, %v1989
      %v1991 = vpop.f32.mrf.mxu0
      %v1992 = vadd.f32 %v1916, %v1991
      %1993 = vmatmul.bf16.gmra.mxu0 %v1894
      %v1994 = vpop.f32.mrf.mxu0
      %v1995 = vadd.f32 %v1916, %v1994
      %v1996 = vpop.f32.mrf.mxu0
      %v1997 = vadd.f32 %v1916, %v1996
      %1998 = vmatmul.bf16.gmra.mxu0 %v1895
      %v1999 = vpop.f32.mrf.mxu0
      %v2000 = vadd.f32 %v1916, %v1999
      %v2001 = vpop.f32.mrf.mxu0
      %v2002 = vadd.f32 %v1916, %v2001
      %2003 = vmatmul.bf16.gmra.mxu0 %v1896
      %v2004 = vpop.f32.mrf.mxu0
      %v2005 = vadd.f32 %v1916, %v2004
      %v2006 = vpop.f32.mrf.mxu0
      %v2007 = vadd.f32 %v1916, %v2006
      %2008 = vmatmul.bf16.gmra.mxu0 %v1897
      %v2009 = vpop.f32.mrf.mxu0
      %v2010 = vadd.f32 %v1916, %v2009
      %v2011 = vpop.f32.mrf.mxu0
      %v2012 = vadd.f32 %v1916, %v2011
      %2013 = vdwg.mxu0
      %v2014 = vmax.f32 %v1975, 0.0
      %v2015 = vmax.f32 %v1977, 0.0
      %v2016 = vmax.f32 %v1980, 0.0
      %v2017 = vmax.f32 %v1982, 0.0
      %v2018 = vmax.f32 %v1985, 0.0
      %v2019 = vmax.f32 %v1987, 0.0
      %v2020 = vmax.f32 %v1990, 0.0
      %v2021 = vmax.f32 %v1992, 0.0
      %v2022 = vmax.f32 %v1995, 0.0
      %v2023 = vmax.f32 %v1997, 0.0
      %v2024 = vmax.f32 %v2000, 0.0
      %v2025 = vmax.f32 %v2002, 0.0
      %v2026 = vmax.f32 %v2005, 0.0
      %v2027 = vmax.f32 %v2007, 0.0
      %v2028 = vmax.f32 %v2010, 0.0
      %v2029 = vmax.f32 %v2012, 0.0
      %v2030 = vpack.c.bf16 %v2015, %v2014
      %v2031 = vpack.c.bf16 %v2017, %v2016
      %v2032 = vpack.c.bf16 %v2019, %v2018
      %v2033 = vpack.c.bf16 %v2021, %v2020
      %v2034 = vpack.c.bf16 %v2023, %v2022
      %v2035 = vpack.c.bf16 %v2025, %v2024
      %v2036 = vpack.c.bf16 %v2027, %v2026
      %v2037 = vpack.c.bf16 %v2029, %v2028
      %s2038 = scalar_lea.vmem %s2, 384
      %v2039 = vld [vmem:[%s2038] sm:$0xf]
      %v2040 = vld [vmem:[%s2038 + $0x4] sm:$0xf]
      %v2041 = vld [vmem:[%s2038 + $0x8] sm:$0xf]
      %v2042 = vld [vmem:[%s2038 + $0xc] sm:$0xf]
      %v2043 = vld [vmem:[%s2038 + $0x10] sm:$0xf]
      %v2044 = vld [vmem:[%s2038 + $0x14] sm:$0xf]
      %v2045 = vld [vmem:[%s2038 + $0x18] sm:$0xf]
      %v2046 = vld [vmem:[%s2038 + $0x1c] sm:$0xf]
      %v2047 = vld [vmem:[%s2038 + $0x20] sm:$0xf]
      %v2048 = vld [vmem:[%s2038 + $0x24] sm:$0xf]
      %v2049 = vld [vmem:[%s2038 + $0x28] sm:$0xf]
      %v2050 = vld [vmem:[%s2038 + $0x2c] sm:$0xf]
      %v2051 = vld [vmem:[%s2038 + $0x30] sm:$0xf]
      %v2052 = vld [vmem:[%s2038 + $0x34] sm:$0xf]
      %v2053 = vld [vmem:[%s2038 + $0x38] sm:$0xf]
      %v2054 = vld [vmem:[%s2038 + $0x3c] sm:$0xf]
      %v2055 = vld [vmem:[%s4 + $0x7] sm:$0x1]
      %v2056 = vperm.slane %v2055, 0
      %v2073 = vunpack.c.l.b16 %v2039
      %v2074 = vunpack.c.l.b16 %v2040
      %v2075 = vunpack.c.l.b16 %v2041
      %v2076 = vunpack.c.l.b16 %v2042
      %v2077 = vunpack.c.l.b16 %v2043
      %v2078 = vunpack.c.l.b16 %v2044
      %v2079 = vunpack.c.l.b16 %v2045
      %v2080 = vunpack.c.l.b16 %v2046
      %v2081 = vunpack.c.l.b16 %v2047
      %v2082 = vunpack.c.l.b16 %v2048
      %v2083 = vunpack.c.l.b16 %v2049
      %v2084 = vunpack.c.l.b16 %v2050
      %v2085 = vunpack.c.l.b16 %v2051
      %v2086 = vunpack.c.l.b16 %v2052
      %v2087 = vunpack.c.l.b16 %v2053
      %v2088 = vunpack.c.l.b16 %v2054
      %v2089 = vpack.c.b16 %v2074, %v2073
      %v2090 = vpack.c.b16 %v2076, %v2075
      %v2091 = vpack.c.b16 %v2078, %v2077
      %v2092 = vpack.c.b16 %v2080, %v2079
      %v2093 = vpack.c.b16 %v2082, %v2081
      %v2094 = vpack.c.b16 %v2084, %v2083
      %v2095 = vpack.c.b16 %v2086, %v2085
      %v2096 = vpack.c.b16 %v2088, %v2087
      %2105 = vmatpush.bf16.msra.mxu0 %v2096
      %2106 = vmatpush.bf16.msra.mxu0 %v2095
      %2107 = vmatpush.bf16.msra.mxu0 %v2094
      %2108 = vmatpush.bf16.msra.mxu0 %v2093
      %2109 = vmatpush.bf16.msra.mxu0 %v2092
      %2110 = vmatpush.bf16.msra.mxu0 %v2091
      %2111 = vmatpush.bf16.msra.mxu0 %v2090
      %2112 = vmatpush.bf16.msra.mxu0 %v2089
      %2113 = vmatmul.bf16.gmra.mxu0 %v2030
      %v2114 = vpop.f32.mrf.mxu0
      %v2115 = vadd.f32 %v2056, %v2114
      %v2116 = vpop.f32.mrf.mxu0
      %v2117 = vadd.f32 %v2056, %v2116
      %2118 = vmatmul.bf16.gmra.mxu0 %v2031
      %v2119 = vpop.f32.mrf.mxu0
      %v2120 = vadd.f32 %v2056, %v2119
      %v2121 = vpop.f32.mrf.mxu0
      %v2122 = vadd.f32 %v2056, %v2121
      %2123 = vmatmul.bf16.gmra.mxu0 %v2032
      %v2124 = vpop.f32.mrf.mxu0
      %v2125 = vadd.f32 %v2056, %v2124
      %v2126 = vpop.f32.mrf.mxu0
      %v2127 = vadd.f32 %v2056, %v2126
      %2128 = vmatmul.bf16.gmra.mxu0 %v2033
      %v2129 = vpop.f32.mrf.mxu0
      %v2130 = vadd.f32 %v2056, %v2129
      %v2131 = vpop.f32.mrf.mxu0
      %v2132 = vadd.f32 %v2056, %v2131
      %2133 = vmatmul.bf16.gmra.mxu0 %v2034
      %v2134 = vpop.f32.mrf.mxu0
      %v2135 = vadd.f32 %v2056, %v2134
      %v2136 = vpop.f32.mrf.mxu0
      %v2137 = vadd.f32 %v2056, %v2136
      %2138 = vmatmul.bf16.gmra.mxu0 %v2035
      %v2139 = vpop.f32.mrf.mxu0
      %v2140 = vadd.f32 %v2056, %v2139
      %v2141 = vpop.f32.mrf.mxu0
      %v2142 = vadd.f32 %v2056, %v2141
      %2143 = vmatmul.bf16.gmra.mxu0 %v2036
      %v2144 = vpop.f32.mrf.mxu0
      %v2145 = vadd.f32 %v2056, %v2144
      %v2146 = vpop.f32.mrf.mxu0
      %v2147 = vadd.f32 %v2056, %v2146
      %2148 = vmatmul.bf16.gmra.mxu0 %v2037
      %v2149 = vpop.f32.mrf.mxu0
      %v2150 = vadd.f32 %v2056, %v2149
      %v2151 = vpop.f32.mrf.mxu0
      %v2152 = vadd.f32 %v2056, %v2151
      %2153 = vdwg.mxu0
      %v2154 = vmax.f32 %v2115, 0.0
      %v2155 = vmax.f32 %v2117, 0.0
      %v2156 = vmax.f32 %v2120, 0.0
      %v2157 = vmax.f32 %v2122, 0.0
      %v2158 = vmax.f32 %v2125, 0.0
      %v2159 = vmax.f32 %v2127, 0.0
      %v2160 = vmax.f32 %v2130, 0.0
      %v2161 = vmax.f32 %v2132, 0.0
      %v2162 = vmax.f32 %v2135, 0.0
      %v2163 = vmax.f32 %v2137, 0.0
      %v2164 = vmax.f32 %v2140, 0.0
      %v2165 = vmax.f32 %v2142, 0.0
      %v2166 = vmax.f32 %v2145, 0.0
      %v2167 = vmax.f32 %v2147, 0.0
      %v2168 = vmax.f32 %v2150, 0.0
      %v2169 = vmax.f32 %v2152, 0.0
      %v2170 = vpack.c.bf16 %v2155, %v2154
      %v2171 = vpack.c.bf16 %v2157, %v2156
      %v2172 = vpack.c.bf16 %v2159, %v2158
      %v2173 = vpack.c.bf16 %v2161, %v2160
      %v2174 = vpack.c.bf16 %v2163, %v2162
      %v2175 = vpack.c.bf16 %v2165, %v2164
      %v2176 = vpack.c.bf16 %v2167, %v2166
      %v2177 = vpack.c.bf16 %v2169, %v2168
      %s2178 = scalar_lea.vmem %s2, 448
      %v2179 = vld [vmem:[%s2178] sm:$0xf]
      %v2180 = vld [vmem:[%s2178 + $0x4] sm:$0xf]
      %v2181 = vld [vmem:[%s2178 + $0x8] sm:$0xf]
      %v2182 = vld [vmem:[%s2178 + $0xc] sm:$0xf]
      %v2183 = vld [vmem:[%s2178 + $0x10] sm:$0xf]
      %v2184 = vld [vmem:[%s2178 + $0x14] sm:$0xf]
      %v2185 = vld [vmem:[%s2178 + $0x18] sm:$0xf]
      %v2186 = vld [vmem:[%s2178 + $0x1c] sm:$0xf]
      %v2187 = vld [vmem:[%s2178 + $0x20] sm:$0xf]
      %v2188 = vld [vmem:[%s2178 + $0x24] sm:$0xf]
      %v2189 = vld [vmem:[%s2178 + $0x28] sm:$0xf]
      %v2190 = vld [vmem:[%s2178 + $0x2c] sm:$0xf]
      %v2191 = vld [vmem:[%s2178 + $0x30] sm:$0xf]
      %v2192 = vld [vmem:[%s2178 + $0x34] sm:$0xf]
      %v2193 = vld [vmem:[%s2178 + $0x38] sm:$0xf]
      %v2194 = vld [vmem:[%s2178 + $0x3c] sm:$0xf]
      %v2195 = vld [vmem:[%s4 + $0x8] sm:$0x1]
      %v2196 = vperm.slane %v2195, 0
      %v2213 = vunpack.c.l.b16 %v2179
      %v2214 = vunpack.c.l.b16 %v2180
      %v2215 = vunpack.c.l.b16 %v2181
      %v2216 = vunpack.c.l.b16 %v2182
      %v2217 = vunpack.c.l.b16 %v2183
      %v2218 = vunpack.c.l.b16 %v2184
      %v2219 = vunpack.c.l.b16 %v2185
      %v2220 = vunpack.c.l.b16 %v2186
      %v2221 = vunpack.c.l.b16 %v2187
      %v2222 = vunpack.c.l.b16 %v2188
      %v2223 = vunpack.c.l.b16 %v2189
      %v2224 = vunpack.c.l.b16 %v2190
      %v2225 = vunpack.c.l.b16 %v2191
      %v2226 = vunpack.c.l.b16 %v2192
      %v2227 = vunpack.c.l.b16 %v2193
      %v2228 = vunpack.c.l.b16 %v2194
      %v2229 = vpack.c.b16 %v2214, %v2213
      %v2230 = vpack.c.b16 %v2216, %v2215
      %v2231 = vpack.c.b16 %v2218, %v2217
      %v2232 = vpack.c.b16 %v2220, %v2219
      %v2233 = vpack.c.b16 %v2222, %v2221
      %v2234 = vpack.c.b16 %v2224, %v2223
      %v2235 = vpack.c.b16 %v2226, %v2225
      %v2236 = vpack.c.b16 %v2228, %v2227
      %2245 = vmatpush.bf16.msra.mxu0 %v2236
      %2246 = vmatpush.bf16.msra.mxu0 %v2235
      %2247 = vmatpush.bf16.msra.mxu0 %v2234
      %2248 = vmatpush.bf16.msra.mxu0 %v2233
      %2249 = vmatpush.bf16.msra.mxu0 %v2232
      %2250 = vmatpush.bf16.msra.mxu0 %v2231
      %2251 = vmatpush.bf16.msra.mxu0 %v2230
      %2252 = vmatpush.bf16.msra.mxu0 %v2229
      %2253 = vmatmul.bf16.gmra.mxu0 %v2170
      %v2254 = vpop.f32.mrf.mxu0
      %v2255 = vadd.f32 %v2196, %v2254
      %v2256 = vpop.f32.mrf.mxu0
      %v2257 = vadd.f32 %v2196, %v2256
      %2258 = vmatmul.bf16.gmra.mxu0 %v2171
      %v2259 = vpop.f32.mrf.mxu0
      %v2260 = vadd.f32 %v2196, %v2259
      %v2261 = vpop.f32.mrf.mxu0
      %v2262 = vadd.f32 %v2196, %v2261
      %2263 = vmatmul.bf16.gmra.mxu0 %v2172
      %v2264 = vpop.f32.mrf.mxu0
      %v2265 = vadd.f32 %v2196, %v2264
      %v2266 = vpop.f32.mrf.mxu0
      %v2267 = vadd.f32 %v2196, %v2266
      %2268 = vmatmul.bf16.gmra.mxu0 %v2173
      %v2269 = vpop.f32.mrf.mxu0
      %v2270 = vadd.f32 %v2196, %v2269
      %v2271 = vpop.f32.mrf.mxu0
      %v2272 = vadd.f32 %v2196, %v2271
      %2273 = vmatmul.bf16.gmra.mxu0 %v2174
      %v2274 = vpop.f32.mrf.mxu0
      %v2275 = vadd.f32 %v2196, %v2274
      %v2276 = vpop.f32.mrf.mxu0
      %v2277 = vadd.f32 %v2196, %v2276
      %2278 = vmatmul.bf16.gmra.mxu0 %v2175
      %v2279 = vpop.f32.mrf.mxu0
      %v2280 = vadd.f32 %v2196, %v2279
      %v2281 = vpop.f32.mrf.mxu0
      %v2282 = vadd.f32 %v2196, %v2281
      %2283 = vmatmul.bf16.gmra.mxu0 %v2176
      %v2284 = vpop.f32.mrf.mxu0
      %v2285 = vadd.f32 %v2196, %v2284
      %v2286 = vpop.f32.mrf.mxu0
      %v2287 = vadd.f32 %v2196, %v2286
      %2288 = vmatmul.bf16.gmra.mxu0 %v2177
      %v2289 = vpop.f32.mrf.mxu0
      %v2290 = vadd.f32 %v2196, %v2289
      %v2291 = vpop.f32.mrf.mxu0
      %v2292 = vadd.f32 %v2196, %v2291
      %2293 = vdwg.mxu0
      %v2294 = vmax.f32 %v2255, 0.0
      %v2295 = vmax.f32 %v2257, 0.0
      %v2296 = vmax.f32 %v2260, 0.0
      %v2297 = vmax.f32 %v2262, 0.0
      %v2298 = vmax.f32 %v2265, 0.0
      %v2299 = vmax.f32 %v2267, 0.0
      %v2300 = vmax.f32 %v2270, 0.0
      %v2301 = vmax.f32 %v2272, 0.0
      %v2302 = vmax.f32 %v2275, 0.0
      %v2303 = vmax.f32 %v2277, 0.0
      %v2304 = vmax.f32 %v2280, 0.0
      %v2305 = vmax.f32 %v2282, 0.0
      %v2306 = vmax.f32 %v2285, 0.0
      %v2307 = vmax.f32 %v2287, 0.0
      %v2308 = vmax.f32 %v2290, 0.0
      %v2309 = vmax.f32 %v2292, 0.0
      %v2310 = vpack.c.bf16 %v2295, %v2294
      %v2311 = vpack.c.bf16 %v2297, %v2296
      %v2312 = vpack.c.bf16 %v2299, %v2298
      %v2313 = vpack.c.bf16 %v2301, %v2300
      %v2314 = vpack.c.bf16 %v2303, %v2302
      %v2315 = vpack.c.bf16 %v2305, %v2304
      %v2316 = vpack.c.bf16 %v2307, %v2306
      %v2317 = vpack.c.bf16 %v2309, %v2308
      %v2318 = vld [vmem:[%s3] sm:$0xff]
      %v2319 = vld [vmem:[%s3 + $0x8] sm:$0xff]
      %v2320 = vld [vmem:[%s3 + $0x10] sm:$0xff]
      %v2321 = vld [vmem:[%s3 + $0x18] sm:$0xf]
      %v2322 = vld [vmem:[%s3 + $0x1c] sm:$0xff]
      %v2323 = vld [vmem:[%s3 + $0x24] sm:$0xff]
      %v2324 = vld [vmem:[%s3 + $0x2c] sm:$0xff]
      %v2325 = vld [vmem:[%s3 + $0x34] sm:$0xf]
      %v2326 = vld [vmem:[%s3 + $0x38] sm:$0xff]
      %v2327 = vld [vmem:[%s3 + $0x40] sm:$0xff]
      %v2328 = vld [vmem:[%s3 + $0x48] sm:$0xff]
      %v2329 = vld [vmem:[%s3 + $0x50] sm:$0xf]
      %v2330 = vld [vmem:[%s3 + $0x54] sm:$0xff]
      %v2331 = vld [vmem:[%s3 + $0x5c] sm:$0xff]
      %v2332 = vld [vmem:[%s3 + $0x64] sm:$0xff]
      %v2333 = vld [vmem:[%s3 + $0x6c] sm:$0xf]
      %v2334 = vld [vmem:[%s3 + $0x70] sm:$0xff]
      %v2335 = vld [vmem:[%s3 + $0x78] sm:$0xff]
      %v2336 = vld [vmem:[%s3 + $0x80] sm:$0xff]
      %v2337 = vld [vmem:[%s3 + $0x88] sm:$0xf]
      %v2338 = vld [vmem:[%s3 + $0x8c] sm:$0xff]
      %v2339 = vld [vmem:[%s3 + $0x94] sm:$0xff]
      %v2340 = vld [vmem:[%s3 + $0x9c] sm:$0xff]
      %v2341 = vld [vmem:[%s3 + $0xa4] sm:$0xf]
      %v2342 = vld [vmem:[%s3 + $0xa8] sm:$0xff]
      %v2343 = vld [vmem:[%s3 + $0xb0] sm:$0xff]
      %v2344 = vld [vmem:[%s3 + $0xb8] sm:$0xff]
      %v2345 = vld [vmem:[%s3 + $0xc0] sm:$0xf]
      %v2346 = vld [vmem:[%s3 + $0xc4] sm:$0xff]
      %v2347 = vld [vmem:[%s3 + $0xcc] sm:$0xff]
      %v2348 = vld [vmem:[%s3 + $0xd4] sm:$0xff]
      %v2349 = vld [vmem:[%s3 + $0xdc] sm:$0xf]
      %v2350 = vld [vmem:[%s3 + $0xe0] sm:$0xff]
      %v2351 = vld [vmem:[%s3 + $0xe8] sm:$0xff]
      %v2352 = vld [vmem:[%s3 + $0xf0] sm:$0xff]
      %v2353 = vld [vmem:[%s3 + $0xf8] sm:$0xf]
      %v2354 = vld [vmem:[%s3 + $0xfc] sm:$0xff]
      %v2355 = vld [vmem:[%s3 + $0x104] sm:$0xff]
      %v2356 = vld [vmem:[%s3 + $0x10c] sm:$0xff]
      %v2357 = vld [vmem:[%s3 + $0x114] sm:$0xf]
      %v2358 = vld [vmem:[%s3 + $0x118] sm:$0xff]
      %v2359 = vld [vmem:[%s3 + $0x120] sm:$0xff]
      %v2360 = vld [vmem:[%s3 + $0x128] sm:$0xff]
      %v2361 = vld [vmem:[%s3 + $0x130] sm:$0xf]
      %v2362 = vld [vmem:[%s3 + $0x134] sm:$0xff]
      %v2363 = vld [vmem:[%s3 + $0x13c] sm:$0xff]
      %v2364 = vld [vmem:[%s3 + $0x144] sm:$0xff]
      %v2365 = vld [vmem:[%s3 + $0x14c] sm:$0xf]
      %v2366 = vld [vmem:[%s3 + $0x150] sm:$0xff]
      %v2367 = vld [vmem:[%s3 + $0x158] sm:$0xff]
      %v2368 = vld [vmem:[%s3 + $0x160] sm:$0xff]
      %v2369 = vld [vmem:[%s3 + $0x168] sm:$0xf]
      %v2370 = vld [vmem:[%s3 + $0x16c] sm:$0xff]
      %v2371 = vld [vmem:[%s3 + $0x174] sm:$0xff]
      %v2372 = vld [vmem:[%s3 + $0x17c] sm:$0xff]
      %v2373 = vld [vmem:[%s3 + $0x184] sm:$0xf]
      %v2374 = vld [vmem:[%s3 + $0x188] sm:$0xff]
      %v2375 = vld [vmem:[%s3 + $0x190] sm:$0xff]
      %v2376 = vld [vmem:[%s3 + $0x198] sm:$0xff]
      %v2377 = vld [vmem:[%s3 + $0x1a0] sm:$0xf]
      %v2378 = vld [vmem:[%s3 + $0x1a4] sm:$0xff]
      %v2379 = vld [vmem:[%s3 + $0x1ac] sm:$0xff]
      %v2380 = vld [vmem:[%s3 + $0x1b4] sm:$0xff]
      %v2381 = vld [vmem:[%s3 + $0x1bc] sm:$0xf]
      %v2382 = vld [vmem:[%s5] sm:$0x7f]
      %v2384 = vperm.slane %v2382, 0
      %v2385 = vperm.slane %v2382, 1
      %v2386 = vperm.slane %v2382, 2
      %v2387 = vperm.slane %v2382, 3
      %v2388 = vperm.slane %v2382, 4
      %v2389 = vperm.slane %v2382, 5
      %v2390 = vperm.slane %v2382, 6
      %v2462 = vunpack.c.l.b16 %v2318
      %v2463 = vunpack.c.h.b16 %v2318
      %v2464 = vunpack.c.l.b16 %v2319
      %v2465 = vunpack.c.h.b16 %v2319
      %v2466 = vunpack.c.l.b16 %v2320
      %v2467 = vunpack.c.h.b16 %v2320
      %v2468 = vunpack.c.l.b16 %v2321
      %v2469 = vunpack.c.l.b16 %v2322
      %v2470 = vunpack.c.h.b16 %v2322
      %v2471 = vunpack.c.l.b16 %v2323
      %v2472 = vunpack.c.h.b16 %v2323
      %v2473 = vunpack.c.l.b16 %v2324
      %v2474 = vunpack.c.h.b16 %v2324
      %v2475 = vunpack.c.l.b16 %v2325
      %v2476 = vunpack.c.l.b16 %v2326
      %v2477 = vunpack.c.h.b16 %v2326
      %v2478 = vunpack.c.l.b16 %v2327
      %v2479 = vunpack.c.h.b16 %v2327
      %v2480 = vunpack.c.l.b16 %v2328
      %v2481 = vunpack.c.h.b16 %v2328
      %v2482 = vunpack.c.l.b16 %v2329
      %v2483 = vunpack.c.l.b16 %v2330
      %v2484 = vunpack.c.h.b16 %v2330
      %v2485 = vunpack.c.l.b16 %v2331
      %v2486 = vunpack.c.h.b16 %v2331
      %v2487 = vunpack.c.l.b16 %v2332
      %v2488 = vunpack.c.h.b16 %v2332
      %v2489 = vunpack.c.l.b16 %v2333
      %v2490 = vunpack.c.l.b16 %v2334
      %v2491 = vunpack.c.h.b16 %v2334
      %v2492 = vunpack.c.l.b16 %v2335
      %v2493 = vunpack.c.h.b16 %v2335
      %v2494 = vunpack.c.l.b16 %v2336
      %v2495 = vunpack.c.h.b16 %v2336
      %v2496 = vunpack.c.l.b16 %v2337
      %v2497 = vunpack.c.l.b16 %v2338
      %v2498 = vunpack.c.h.b16 %v2338
      %v2499 = vunpack.c.l.b16 %v2339
      %v2500 = vunpack.c.h.b16 %v2339
      %v2501 = vunpack.c.l.b16 %v2340
      %v2502 = vunpack.c.h.b16 %v2340
      %v2503 = vunpack.c.l.b16 %v2341
      %v2504 = vunpack.c.l.b16 %v2342
      %v2505 = vunpack.c.h.b16 %v2342
      %v2506 = vunpack.c.l.b16 %v2343
      %v2507 = vunpack.c.h.b16 %v2343
      %v2508 = vunpack.c.l.b16 %v2344
      %v2509 = vunpack.c.h.b16 %v2344
      %v2510 = vunpack.c.l.b16 %v2345
      %v2511 = vunpack.c.l.b16 %v2346
      %v2512 = vunpack.c.h.b16 %v2346
      %v2513 = vunpack.c.l.b16 %v2347
      %v2514 = vunpack.c.h.b16 %v2347
      %v2515 = vunpack.c.l.b16 %v2348
      %v2516 = vunpack.c.h.b16 %v2348
      %v2517 = vunpack.c.l.b16 %v2349
      %v2518 = vunpack.c.l.b16 %v2350
      %v2519 = vunpack.c.h.b16 %v2350
      %v2520 = vunpack.c.l.b16 %v2351
      %v2521 = vunpack.c.h.b16 %v2351
      %v2522 = vunpack.c.l.b16 %v2352
      %v2523 = vunpack.c.h.b16 %v2352
      %v2524 = vunpack.c.l.b16 %v2353
      %v2525 = vunpack.c.l.b16 %v2354
      %v2526 = vunpack.c.h.b16 %v2354
      %v2527 = vunpack.c.l.b16 %v2355
      %v2528 = vunpack.c.h.b16 %v2355
      %v2529 = vunpack.c.l.b16 %v2356
      %v2530 = vunpack.c.h.b16 %v2356
      %v2531 = vunpack.c.l.b16 %v2357
      %v2532 = vunpack.c.l.b16 %v2358
      %v2533 = vunpack.c.h.b16 %v2358
      %v2534 = vunpack.c.l.b16 %v2359
      %v2535 = vunpack.c.h.b16 %v2359
      %v2536 = vunpack.c.l.b16 %v2360
      %v2537 = vunpack.c.h.b16 %v2360
      %v2538 = vunpack.c.l.b16 %v2361
      %v2539 = vunpack.c.l.b16 %v2362
      %v2540 = vunpack.c.h.b16 %v2362
      %v2541 = vunpack.c.l.b16 %v2363
      %v2542 = vunpack.c.h.b16 %v2363
      %v2543 = vunpack.c.l.b16 %v2364
      %v2544 = vunpack.c.h.b16 %v2364
      %v2545 = vunpack.c.l.b16 %v2365
      %v2546 = vunpack.c.l.b16 %v2366
      %v2547 = vunpack.c.h.b16 %v2366
      %v2548 = vunpack.c.l.b16 %v2367
      %v2549 = vunpack.c.h.b16 %v2367
      %v2550 = vunpack.c.l.b16 %v2368
      %v2551 = vunpack.c.h.b16 %v2368
      %v2552 = vunpack.c.l.b16 %v2369
      %v2553 = vunpack.c.l.b16 %v2370
      %v2554 = vunpack.c.h.b16 %v2370
      %v2555 = vunpack.c.l.b16 %v2371
      %v2556 = vunpack.c.h.b16 %v2371
      %v2557 = vunpack.c.l.b16 %v2372
      %v2558 = vunpack.c.h.b16 %v2372
      %v2559 = vunpack.c.l.b16 %v2373
      %v2560 = vunpack.c.l.b16 %v2374
      %v2561 = vunpack.c.h.b16 %v2374
      %v2562 = vunpack.c.l.b16 %v2375
      %v2563 = vunpack.c.h.b16 %v2375
      %v2564 = vunpack.c.l.b16 %v2376
      %v2565 = vunpack.c.h.b16 %v2376
      %v2566 = vunpack.c.l.b16 %v2377
      %v2567 = vunpack.c.l.b16 %v2378
      %v2568 = vunpack.c.h.b16 %v2378
      %v2569 = vunpack.c.l.b16 %v2379
      %v2570 = vunpack.c.h.b16 %v2379
      %v2571 = vunpack.c.l.b16 %v2380
      %v2572 = vunpack.c.h.b16 %v2380
      %v2573 = vunpack.c.l.b16 %v2381
      %v2574 = vpack.c.b16 %v2469, %v2462
      %v2575 = vpack.c.b16 %v2470, %v2463
      %v2576 = vpack.c.b16 %v2471, %v2464
      %v2577 = vpack.c.b16 %v2472, %v2465
      %v2578 = vpack.c.b16 %v2473, %v2466
      %v2579 = vpack.c.b16 %v2474, %v2467
      %v2580 = vpack.c.b16 %v2475, %v2468
      %v2581 = vpack.c.b16 %v2483, %v2476
      %v2582 = vpack.c.b16 %v2484, %v2477
      %v2583 = vpack.c.b16 %v2485, %v2478
      %v2584 = vpack.c.b16 %v2486, %v2479
      %v2585 = vpack.c.b16 %v2487, %v2480
      %v2586 = vpack.c.b16 %v2488, %v2481
      %v2587 = vpack.c.b16 %v2489, %v2482
      %v2588 = vpack.c.b16 %v2497, %v2490
      %v2589 = vpack.c.b16 %v2498, %v2491
      %v2590 = vpack.c.b16 %v2499, %v2492
      %v2591 = vpack.c.b16 %v2500, %v2493
      %v2592 = vpack.c.b16 %v2501, %v2494
      %v2593 = vpack.c.b16 %v2502, %v2495
      %v2594 = vpack.c.b16 %v2503, %v2496
      %v2595 = vpack.c.b16 %v2511, %v2504
      %v2596 = vpack.c.b16 %v2512, %v2505
      %v2597 = vpack.c.b16 %v2513, %v2506
      %v2598 = vpack.c.b16 %v2514, %v2507
      %v2599 = vpack.c.b16 %v2515, %v2508
      %v2600 = vpack.c.b16 %v2516, %v2509
      %v2601 = vpack.c.b16 %v2517, %v2510
      %v2602 = vpack.c.b16 %v2525, %v2518
      %v2603 = vpack.c.b16 %v2526, %v2519
      %v2604 = vpack.c.b16 %v2527, %v2520
      %v2605 = vpack.c.b16 %v2528, %v2521
      %v2606 = vpack.c.b16 %v2529, %v2522
      %v2607 = vpack.c.b16 %v2530, %v2523
      %v2608 = vpack.c.b16 %v2531, %v2524
      %v2609 = vpack.c.b16 %v2539, %v2532
      %v2610 = vpack.c.b16 %v2540, %v2533
      %v2611 = vpack.c.b16 %v2541, %v2534
      %v2612 = vpack.c.b16 %v2542, %v2535
      %v2613 = vpack.c.b16 %v2543, %v2536
      %v2614 = vpack.c.b16 %v2544, %v2537
      %v2615 = vpack.c.b16 %v2545, %v2538
      %v2616 = vpack.c.b16 %v2553, %v2546
      %v2617 = vpack.c.b16 %v2554, %v2547
      %v2618 = vpack.c.b16 %v2555, %v2548
      %v2619 = vpack.c.b16 %v2556, %v2549
      %v2620 = vpack.c.b16 %v2557, %v2550
      %v2621 = vpack.c.b16 %v2558, %v2551
      %v2622 = vpack.c.b16 %v2559, %v2552
      %v2623 = vpack.c.b16 %v2567, %v2560
      %v2624 = vpack.c.b16 %v2568, %v2561
      %v2625 = vpack.c.b16 %v2569, %v2562
      %v2626 = vpack.c.b16 %v2570, %v2563
      %v2627 = vpack.c.b16 %v2571, %v2564
      %v2628 = vpack.c.b16 %v2572, %v2565
      %v2629 = vpack.c.b16 %v2573, %v2566
      %2686 = vmatpush.bf16.msra.mxu0 %v2623
      %2687 = vmatpush.bf16.msra.mxu0 %v2616
      %2688 = vmatpush.bf16.msra.mxu0 %v2609
      %2689 = vmatpush.bf16.msra.mxu0 %v2602
      %2690 = vmatpush.bf16.msra.mxu0 %v2595
      %2691 = vmatpush.bf16.msra.mxu0 %v2588
      %2692 = vmatpush.bf16.msra.mxu0 %v2581
      %2693 = vmatpush.bf16.msra.mxu0 %v2574
      %2694 = vmatmul.bf16.gmra.mxu0 %v2310
      %v2695 = vpop.f32.mrf.mxu0
      %v2696 = vadd.f32 %v2384, %v2695
      %v2697 = vpop.f32.mrf.mxu0
      %v2698 = vadd.f32 %v2384, %v2697
      %2699 = vmatmul.bf16.gmra.mxu0 %v2311
      %v2700 = vpop.f32.mrf.mxu0
      %v2701 = vadd.f32 %v2384, %v2700
      %v2702 = vpop.f32.mrf.mxu0
      %v2703 = vadd.f32 %v2384, %v2702
      %2704 = vmatmul.bf16.gmra.mxu0 %v2312
      %v2705 = vpop.f32.mrf.mxu0
      %v2706 = vadd.f32 %v2384, %v2705
      %v2707 = vpop.f32.mrf.mxu0
      %v2708 = vadd.f32 %v2384, %v2707
      %2709 = vmatmul.bf16.gmra.mxu0 %v2313
      %v2710 = vpop.f32.mrf.mxu0
      %v2711 = vadd.f32 %v2384, %v2710
      %v2712 = vpop.f32.mrf.mxu0
      %v2713 = vadd.f32 %v2384, %v2712
      %2714 = vmatmul.bf16.gmra.mxu0 %v2314
      %v2715 = vpop.f32.mrf.mxu0
      %v2716 = vadd.f32 %v2384, %v2715
      %v2717 = vpop.f32.mrf.mxu0
      %v2718 = vadd.f32 %v2384, %v2717
      %2719 = vmatmul.bf16.gmra.mxu0 %v2315
      %v2720 = vpop.f32.mrf.mxu0
      %v2721 = vadd.f32 %v2384, %v2720
      %v2722 = vpop.f32.mrf.mxu0
      %v2723 = vadd.f32 %v2384, %v2722
      %2724 = vmatmul.bf16.gmra.mxu0 %v2316
      %v2725 = vpop.f32.mrf.mxu0
      %v2726 = vadd.f32 %v2384, %v2725
      %v2727 = vpop.f32.mrf.mxu0
      %v2728 = vadd.f32 %v2384, %v2727
      %2729 = vmatmul.bf16.gmra.mxu0 %v2317
      %v2730 = vpop.f32.mrf.mxu0
      %v2731 = vadd.f32 %v2384, %v2730
      %v2732 = vpop.f32.mrf.mxu0
      %v2733 = vadd.f32 %v2384, %v2732
      %2734 = vdwg.mxu0
      %2735 = vmatpush.bf16.msra.mxu0 %v2624
      %2736 = vmatpush.bf16.msra.mxu0 %v2617
      %2737 = vmatpush.bf16.msra.mxu0 %v2610
      %2738 = vmatpush.bf16.msra.mxu0 %v2603
      %2739 = vmatpush.bf16.msra.mxu0 %v2596
      %2740 = vmatpush.bf16.msra.mxu0 %v2589
      %2741 = vmatpush.bf16.msra.mxu0 %v2582
      %2742 = vmatpush.bf16.msra.mxu0 %v2575
      %2743 = vmatmul.bf16.gmra.mxu0 %v2310
      %v2744 = vpop.f32.mrf.mxu0
      %v2745 = vadd.f32 %v2385, %v2744
      %v2746 = vpop.f32.mrf.mxu0
      %v2747 = vadd.f32 %v2385, %v2746
      %2748 = vmatmul.bf16.gmra.mxu0 %v2311
      %v2749 = vpop.f32.mrf.mxu0
      %v2750 = vadd.f32 %v2385, %v2749
      %v2751 = vpop.f32.mrf.mxu0
      %v2752 = vadd.f32 %v2385, %v2751
      %2753 = vmatmul.bf16.gmra.mxu0 %v2312
      %v2754 = vpop.f32.mrf.mxu0
      %v2755 = vadd.f32 %v2385, %v2754
      %v2756 = vpop.f32.mrf.mxu0
      %v2757 = vadd.f32 %v2385, %v2756
      %2758 = vmatmul.bf16.gmra.mxu0 %v2313
      %v2759 = vpop.f32.mrf.mxu0
      %v2760 = vadd.f32 %v2385, %v2759
      %v2761 = vpop.f32.mrf.mxu0
      %v2762 = vadd.f32 %v2385, %v2761
      %2763 = vmatmul.bf16.gmra.mxu0 %v2314
      %v2764 = vpop.f32.mrf.mxu0
      %v2765 = vadd.f32 %v2385, %v2764
      %v2766 = vpop.f32.mrf.mxu0
      %v2767 = vadd.f32 %v2385, %v2766
      %2768 = vmatmul.bf16.gmra.mxu0 %v2315
      %v2769 = vpop.f32.mrf.mxu0
      %v2770 = vadd.f32 %v2385, %v2769
      %v2771 = vpop.f32.mrf.mxu0
      %v2772 = vadd.f32 %v2385, %v2771
      %2773 = vmatmul.bf16.gmra.mxu0 %v2316
      %v2774 = vpop.f32.mrf.mxu0
      %v2775 = vadd.f32 %v2385, %v2774
      %v2776 = vpop.f32.mrf.mxu0
      %v2777 = vadd.f32 %v2385, %v2776
      %2778 = vmatmul.bf16.gmra.mxu0 %v2317
      %v2779 = vpop.f32.mrf.mxu0
      %v2780 = vadd.f32 %v2385, %v2779
      %v2781 = vpop.f32.mrf.mxu0
      %v2782 = vadd.f32 %v2385, %v2781
      %2783 = vdwg.mxu0
      %2784 = vmatpush.bf16.msra.mxu0 %v2625
      %2785 = vmatpush.bf16.msra.mxu0 %v2618
      %2786 = vmatpush.bf16.msra.mxu0 %v2611
      %2787 = vmatpush.bf16.msra.mxu0 %v2604
      %2788 = vmatpush.bf16.msra.mxu0 %v2597
      %2789 = vmatpush.bf16.msra.mxu0 %v2590
      %2790 = vmatpush.bf16.msra.mxu0 %v2583
      %2791 = vmatpush.bf16.msra.mxu0 %v2576
      %2792 = vmatmul.bf16.gmra.mxu0 %v2310
      %v2793 = vpop.f32.mrf.mxu0
      %v2794 = vadd.f32 %v2386, %v2793
      %v2795 = vpop.f32.mrf.mxu0
      %v2796 = vadd.f32 %v2386, %v2795
      %2797 = vmatmul.bf16.gmra.mxu0 %v2311
      %v2798 = vpop.f32.mrf.mxu0
      %v2799 = vadd.f32 %v2386, %v2798
      %v2800 = vpop.f32.mrf.mxu0
      %v2801 = vadd.f32 %v2386, %v2800
      %2802 = vmatmul.bf16.gmra.mxu0 %v2312
      %v2803 = vpop.f32.mrf.mxu0
      %v2804 = vadd.f32 %v2386, %v2803
      %v2805 = vpop.f32.mrf.mxu0
      %v2806 = vadd.f32 %v2386, %v2805
      %2807 = vmatmul.bf16.gmra.mxu0 %v2313
      %v2808 = vpop.f32.mrf.mxu0
      %v2809 = vadd.f32 %v2386, %v2808
      %v2810 = vpop.f32.mrf.mxu0
      %v2811 = vadd.f32 %v2386, %v2810
      %2812 = vmatmul.bf16.gmra.mxu0 %v2314
      %v2813 = vpop.f32.mrf.mxu0
      %v2814 = vadd.f32 %v2386, %v2813
      %v2815 = vpop.f32.mrf.mxu0
      %v2816 = vadd.f32 %v2386, %v2815
      %2817 = vmatmul.bf16.gmra.mxu0 %v2315
      %v2818 = vpop.f32.mrf.mxu0
      %v2819 = vadd.f32 %v2386, %v2818
      %v2820 = vpop.f32.mrf.mxu0
      %v2821 = vadd.f32 %v2386, %v2820
      %2822 = vmatmul.bf16.gmra.mxu0 %v2316
      %v2823 = vpop.f32.mrf.mxu0
      %v2824 = vadd.f32 %v2386, %v2823
      %v2825 = vpop.f32.mrf.mxu0
      %v2826 = vadd.f32 %v2386, %v2825
      %2827 = vmatmul.bf16.gmra.mxu0 %v2317
      %v2828 = vpop.f32.mrf.mxu0
      %v2829 = vadd.f32 %v2386, %v2828
      %v2830 = vpop.f32.mrf.mxu0
      %v2831 = vadd.f32 %v2386, %v2830
      %2832 = vdwg.mxu0
      %2833 = vmatpush.bf16.msra.mxu0 %v2626
      %2834 = vmatpush.bf16.msra.mxu0 %v2619
      %2835 = vmatpush.bf16.msra.mxu0 %v2612
      %2836 = vmatpush.bf16.msra.mxu0 %v2605
      %2837 = vmatpush.bf16.msra.mxu0 %v2598
      %2838 = vmatpush.bf16.msra.mxu0 %v2591
      %2839 = vmatpush.bf16.msra.mxu0 %v2584
      %2840 = vmatpush.bf16.msra.mxu0 %v2577
      %2841 = vmatmul.bf16.gmra.mxu0 %v2310
      %v2842 = vpop.f32.mrf.mxu0
      %v2843 = vadd.f32 %v2387, %v2842
      %v2844 = vpop.f32.mrf.mxu0
      %v2845 = vadd.f32 %v2387, %v2844
      %2846 = vmatmul.bf16.gmra.mxu0 %v2311
      %v2847 = vpop.f32.mrf.mxu0
      %v2848 = vadd.f32 %v2387, %v2847
      %v2849 = vpop.f32.mrf.mxu0
      %v2850 = vadd.f32 %v2387, %v2849
      %2851 = vmatmul.bf16.gmra.mxu0 %v2312
      %v2852 = vpop.f32.mrf.mxu0
      %v2853 = vadd.f32 %v2387, %v2852
      %v2854 = vpop.f32.mrf.mxu0
      %v2855 = vadd.f32 %v2387, %v2854
      %2856 = vmatmul.bf16.gmra.mxu0 %v2313
      %v2857 = vpop.f32.mrf.mxu0
      %v2858 = vadd.f32 %v2387, %v2857
      %v2859 = vpop.f32.mrf.mxu0
      %v2860 = vadd.f32 %v2387, %v2859
      %2861 = vmatmul.bf16.gmra.mxu0 %v2314
      %v2862 = vpop.f32.mrf.mxu0
      %v2863 = vadd.f32 %v2387, %v2862
      %v2864 = vpop.f32.mrf.mxu0
      %v2865 = vadd.f32 %v2387, %v2864
      %2866 = vmatmul.bf16.gmra.mxu0 %v2315
      %v2867 = vpop.f32.mrf.mxu0
      %v2868 = vadd.f32 %v2387, %v2867
      %v2869 = vpop.f32.mrf.mxu0
      %v2870 = vadd.f32 %v2387, %v2869
      %2871 = vmatmul.bf16.gmra.mxu0 %v2316
      %v2872 = vpop.f32.mrf.mxu0
      %v2873 = vadd.f32 %v2387, %v2872
      %v2874 = vpop.f32.mrf.mxu0
      %v2875 = vadd.f32 %v2387, %v2874
      %2876 = vmatmul.bf16.gmra.mxu0 %v2317
      %v2877 = vpop.f32.mrf.mxu0
      %v2878 = vadd.f32 %v2387, %v2877
      %v2879 = vpop.f32.mrf.mxu0
      %v2880 = vadd.f32 %v2387, %v2879
      %2881 = vdwg.mxu0
      %2882 = vmatpush.bf16.msra.mxu0 %v2627
      %2883 = vmatpush.bf16.msra.mxu0 %v2620
      %2884 = vmatpush.bf16.msra.mxu0 %v2613
      %2885 = vmatpush.bf16.msra.mxu0 %v2606
      %2886 = vmatpush.bf16.msra.mxu0 %v2599
      %2887 = vmatpush.bf16.msra.mxu0 %v2592
      %2888 = vmatpush.bf16.msra.mxu0 %v2585
      %2889 = vmatpush.bf16.msra.mxu0 %v2578
      %2890 = vmatmul.bf16.gmra.mxu0 %v2310
      %v2891 = vpop.f32.mrf.mxu0
      %v2892 = vadd.f32 %v2388, %v2891
      %v2893 = vpop.f32.mrf.mxu0
      %v2894 = vadd.f32 %v2388, %v2893
      %2895 = vmatmul.bf16.gmra.mxu0 %v2311
      %v2896 = vpop.f32.mrf.mxu0
      %v2897 = vadd.f32 %v2388, %v2896
      %v2898 = vpop.f32.mrf.mxu0
      %v2899 = vadd.f32 %v2388, %v2898
      %2900 = vmatmul.bf16.gmra.mxu0 %v2312
      %v2901 = vpop.f32.mrf.mxu0
      %v2902 = vadd.f32 %v2388, %v2901
      %v2903 = vpop.f32.mrf.mxu0
      %v2904 = vadd.f32 %v2388, %v2903
      %2905 = vmatmul.bf16.gmra.mxu0 %v2313
      %v2906 = vpop.f32.mrf.mxu0
      %v2907 = vadd.f32 %v2388, %v2906
      %v2908 = vpop.f32.mrf.mxu0
      %v2909 = vadd.f32 %v2388, %v2908
      %2910 = vmatmul.bf16.gmra.mxu0 %v2314
      %v2911 = vpop.f32.mrf.mxu0
      %v2912 = vadd.f32 %v2388, %v2911
      %v2913 = vpop.f32.mrf.mxu0
      %v2914 = vadd.f32 %v2388, %v2913
      %2915 = vmatmul.bf16.gmra.mxu0 %v2315
      %v2916 = vpop.f32.mrf.mxu0
      %v2917 = vadd.f32 %v2388, %v2916
      %v2918 = vpop.f32.mrf.mxu0
      %v2919 = vadd.f32 %v2388, %v2918
      %2920 = vmatmul.bf16.gmra.mxu0 %v2316
      %v2921 = vpop.f32.mrf.mxu0
      %v2922 = vadd.f32 %v2388, %v2921
      %v2923 = vpop.f32.mrf.mxu0
      %v2924 = vadd.f32 %v2388, %v2923
      %2925 = vmatmul.bf16.gmra.mxu0 %v2317
      %v2926 = vpop.f32.mrf.mxu0
      %v2927 = vadd.f32 %v2388, %v2926
      %v2928 = vpop.f32.mrf.mxu0
      %v2929 = vadd.f32 %v2388, %v2928
      %2930 = vdwg.mxu0
      %2931 = vmatpush.bf16.msra.mxu0 %v2628
      %2932 = vmatpush.bf16.msra.mxu0 %v2621
      %2933 = vmatpush.bf16.msra.mxu0 %v2614
      %2934 = vmatpush.bf16.msra.mxu0 %v2607
      %2935 = vmatpush.bf16.msra.mxu0 %v2600
      %2936 = vmatpush.bf16.msra.mxu0 %v2593
      %2937 = vmatpush.bf16.msra.mxu0 %v2586
      %2938 = vmatpush.bf16.msra.mxu0 %v2579
      %2939 = vmatmul.bf16.gmra.mxu0 %v2310
      %v2940 = vpop.f32.mrf.mxu0
      %v2941 = vadd.f32 %v2389, %v2940
      %v2942 = vpop.f32.mrf.mxu0
      %v2943 = vadd.f32 %v2389, %v2942
      %2944 = vmatmul.bf16.gmra.mxu0 %v2311
      %v2945 = vpop.f32.mrf.mxu0
      %v2946 = vadd.f32 %v2389, %v2945
      %v2947 = vpop.f32.mrf.mxu0
      %v2948 = vadd.f32 %v2389, %v2947
      %2949 = vmatmul.bf16.gmra.mxu0 %v2312
      %v2950 = vpop.f32.mrf.mxu0
      %v2951 = vadd.f32 %v2389, %v2950
      %v2952 = vpop.f32.mrf.mxu0
      %v2953 = vadd.f32 %v2389, %v2952
      %2954 = vmatmul.bf16.gmra.mxu0 %v2313
      %v2955 = vpop.f32.mrf.mxu0
      %v2956 = vadd.f32 %v2389, %v2955
      %v2957 = vpop.f32.mrf.mxu0
      %v2958 = vadd.f32 %v2389, %v2957
      %2959 = vmatmul.bf16.gmra.mxu0 %v2314
      %v2960 = vpop.f32.mrf.mxu0
      %v2961 = vadd.f32 %v2389, %v2960
      %v2962 = vpop.f32.mrf.mxu0
      %v2963 = vadd.f32 %v2389, %v2962
      %2964 = vmatmul.bf16.gmra.mxu0 %v2315
      %v2965 = vpop.f32.mrf.mxu0
      %v2966 = vadd.f32 %v2389, %v2965
      %v2967 = vpop.f32.mrf.mxu0
      %v2968 = vadd.f32 %v2389, %v2967
      %2969 = vmatmul.bf16.gmra.mxu0 %v2316
      %v2970 = vpop.f32.mrf.mxu0
      %v2971 = vadd.f32 %v2389, %v2970
      %v2972 = vpop.f32.mrf.mxu0
      %v2973 = vadd.f32 %v2389, %v2972
      %2974 = vmatmul.bf16.gmra.mxu0 %v2317
      %v2975 = vpop.f32.mrf.mxu0
      %v2976 = vadd.f32 %v2389, %v2975
      %v2977 = vpop.f32.mrf.mxu0
      %v2978 = vadd.f32 %v2389, %v2977
      %2979 = vdwg.mxu0
      %2980 = vmatpush.bf16.msra.mxu0 %v2629
      %2981 = vmatpush.bf16.msra.mxu0 %v2622
      %2982 = vmatpush.bf16.msra.mxu0 %v2615
      %2983 = vmatpush.bf16.msra.mxu0 %v2608
      %2984 = vmatpush.bf16.msra.mxu0 %v2601
      %2985 = vmatpush.bf16.msra.mxu0 %v2594
      %2986 = vmatpush.bf16.msra.mxu0 %v2587
      %2987 = vmatpush.bf16.msra.mxu0 %v2580
      %2988 = vmatmul.bf16.gmra.mxu0 %v2310
      %v2989 = vpop.f32.mrf.mxu0
      %v2990 = vadd.f32 %v2390, %v2989
      %v2991 = vpop.f32.mrf.mxu0
      %v2992 = vadd.f32 %v2390, %v2991
      %2993 = vmatmul.bf16.gmra.mxu0 %v2311
      %v2994 = vpop.f32.mrf.mxu0
      %v2995 = vadd.f32 %v2390, %v2994
      %v2996 = vpop.f32.mrf.mxu0
      %v2997 = vadd.f32 %v2390, %v2996
      %2998 = vmatmul.bf16.gmra.mxu0 %v2312
      %v2999 = vpop.f32.mrf.mxu0
      %v3000 = vadd.f32 %v2390, %v2999
      %v3001 = vpop.f32.mrf.mxu0
      %v3002 = vadd.f32 %v2390, %v3001
      %3003 = vmatmul.bf16.gmra.mxu0 %v2313
      %v3004 = vpop.f32.mrf.mxu0
      %v3005 = vadd.f32 %v2390, %v3004
      %v3006 = vpop.f32.mrf.mxu0
      %v3007 = vadd.f32 %v2390, %v3006
      %3008 = vmatmul.bf16.gmra.mxu0 %v2314
      %v3009 = vpop.f32.mrf.mxu0
      %v3010 = vadd.f32 %v2390, %v3009
      %v3011 = vpop.f32.mrf.mxu0
      %v3012 = vadd.f32 %v2390, %v3011
      %3013 = vmatmul.bf16.gmra.mxu0 %v2315
      %v3014 = vpop.f32.mrf.mxu0
      %v3015 = vadd.f32 %v2390, %v3014
      %v3016 = vpop.f32.mrf.mxu0
      %v3017 = vadd.f32 %v2390, %v3016
      %3018 = vmatmul.bf16.gmra.mxu0 %v2316
      %v3019 = vpop.f32.mrf.mxu0
      %v3020 = vadd.f32 %v2390, %v3019
      %v3021 = vpop.f32.mrf.mxu0
      %v3022 = vadd.f32 %v2390, %v3021
      %3023 = vmatmul.bf16.gmra.mxu0 %v2317
      %v3024 = vpop.f32.mrf.mxu0
      %v3025 = vadd.f32 %v2390, %v3024
      %v3026 = vpop.f32.mrf.mxu0
      %v3027 = vadd.f32 %v2390, %v3026
      %3028 = vdwg.mxu0
      %v3029 = vxor.u32 %v2696, 2147483648
      %v3030 = vxor.u32 %v2745, 2147483648
      %v3031 = vxor.u32 %v2794, 2147483648
      %v3032 = vxor.u32 %v2843, 2147483648
      %v3033 = vxor.u32 %v2892, 2147483648
      %v3034 = vxor.u32 %v2941, 2147483648
      %v3035 = vxor.u32 %v2990, 2147483648
      %v3036 = vxor.u32 %v2698, 2147483648
      %v3037 = vxor.u32 %v2747, 2147483648
      %v3038 = vxor.u32 %v2796, 2147483648
      %v3039 = vxor.u32 %v2845, 2147483648
      %v3040 = vxor.u32 %v2894, 2147483648
      %v3041 = vxor.u32 %v2943, 2147483648
      %v3042 = vxor.u32 %v2992, 2147483648
      %v3043 = vxor.u32 %v2701, 2147483648
      %v3044 = vxor.u32 %v2750, 2147483648
      %v3045 = vxor.u32 %v2799, 2147483648
      %v3046 = vxor.u32 %v2848, 2147483648
      %v3047 = vxor.u32 %v2897, 2147483648
      %v3048 = vxor.u32 %v2946, 2147483648
      %v3049 = vxor.u32 %v2995, 2147483648
      %v3050 = vxor.u32 %v2703, 2147483648
      %v3051 = vxor.u32 %v2752, 2147483648
      %v3052 = vxor.u32 %v2801, 2147483648
      %v3053 = vxor.u32 %v2850, 2147483648
      %v3054 = vxor.u32 %v2899, 2147483648
      %v3055 = vxor.u32 %v2948, 2147483648
      %v3056 = vxor.u32 %v2997, 2147483648
      %v3057 = vxor.u32 %v2706, 2147483648
      %v3058 = vxor.u32 %v2755, 2147483648
      %v3059 = vxor.u32 %v2804, 2147483648
      %v3060 = vxor.u32 %v2853, 2147483648
      %v3061 = vxor.u32 %v2902, 2147483648
      %v3062 = vxor.u32 %v2951, 2147483648
      %v3063 = vxor.u32 %v3000, 2147483648
      %v3064 = vxor.u32 %v2708, 2147483648
      %v3065 = vxor.u32 %v2757, 2147483648
      %v3066 = vxor.u32 %v2806, 2147483648
      %v3067 = vxor.u32 %v2855, 2147483648
      %v3068 = vxor.u32 %v2904, 2147483648
      %v3069 = vxor.u32 %v2953, 2147483648
      %v3070 = vxor.u32 %v3002, 2147483648
      %v3071 = vxor.u32 %v2711, 2147483648
      %v3072 = vxor.u32 %v2760, 2147483648
      %v3073 = vxor.u32 %v2809, 2147483648
      %v3074 = vxor.u32 %v2858, 2147483648
      %v3075 = vxor.u32 %v2907, 2147483648
      %v3076 = vxor.u32 %v2956, 2147483648
      %v3077 = vxor.u32 %v3005, 2147483648
      %v3078 = vxor.u32 %v2713, 2147483648
      %v3079 = vxor.u32 %v2762, 2147483648
      %v3080 = vxor.u32 %v2811, 2147483648
      %v3081 = vxor.u32 %v2860, 2147483648
      %v3082 = vxor.u32 %v2909, 2147483648
      %v3083 = vxor.u32 %v2958, 2147483648
      %v3084 = vxor.u32 %v3007, 2147483648
      %v3085 = vxor.u32 %v2716, 2147483648
      %v3086 = vxor.u32 %v2765, 2147483648
      %v3087 = vxor.u32 %v2814, 2147483648
      %v3088 = vxor.u32 %v2863, 2147483648
      %v3089 = vxor.u32 %v2912, 2147483648
      %v3090 = vxor.u32 %v2961, 2147483648
      %v3091 = vxor.u32 %v3010, 2147483648
      %v3092 = vxor.u32 %v2718, 2147483648
      %v3093 = vxor.u32 %v2767, 2147483648
      %v3094 = vxor.u32 %v2816, 2147483648
      %v3095 = vxor.u32 %v2865, 2147483648
      %v3096 = vxor.u32 %v2914, 2147483648
      %v3097 = vxor.u32 %v2963, 2147483648
      %v3098 = vxor.u32 %v3012, 2147483648
      %v3099 = vxor.u32 %v2721, 2147483648
      %v3100 = vxor.u32 %v2770, 2147483648
      %v3101 = vxor.u32 %v2819, 2147483648
      %v3102 = vxor.u32 %v2868, 2147483648
      %v3103 = vxor.u32 %v2917, 2147483648
      %v3104 = vxor.u32 %v2966, 2147483648
      %v3105 = vxor.u32 %v3015, 2147483648
      %v3106 = vxor.u32 %v2723, 2147483648
      %v3107 = vxor.u32 %v2772, 2147483648
      %v3108 = vxor.u32 %v2821, 2147483648
      %v3109 = vxor.u32 %v2870, 2147483648
      %v3110 = vxor.u32 %v2919, 2147483648
      %v3111 = vxor.u32 %v2968, 2147483648
      %v3112 = vxor.u32 %v3017, 2147483648
      %v3113 = vxor.u32 %v2726, 2147483648
      %v3114 = vxor.u32 %v2775, 2147483648
      %v3115 = vxor.u32 %v2824, 2147483648
      %v3116 = vxor.u32 %v2873, 2147483648
      %v3117 = vxor.u32 %v2922, 2147483648
      %v3118 = vxor.u32 %v2971, 2147483648
      %v3119 = vxor.u32 %v3020, 2147483648
      %v3120 = vxor.u32 %v2728, 2147483648
      %v3121 = vxor.u32 %v2777, 2147483648
      %v3122 = vxor.u32 %v2826, 2147483648
      %v3123 = vxor.u32 %v2875, 2147483648
      %v3124 = vxor.u32 %v2924, 2147483648
      %v3125 = vxor.u32 %v2973, 2147483648
      %v3126 = vxor.u32 %v3022, 2147483648
      %v3127 = vxor.u32 %v2731, 2147483648
      %v3128 = vxor.u32 %v2780, 2147483648
      %v3129 = vxor.u32 %v2829, 2147483648
      %v3130 = vxor.u32 %v2878, 2147483648
      %v3131 = vxor.u32 %v2927, 2147483648
      %v3132 = vxor.u32 %v2976, 2147483648
      %v3133 = vxor.u32 %v3025, 2147483648
      %v3134 = vxor.u32 %v2733, 2147483648
      %v3135 = vxor.u32 %v2782, 2147483648
      %v3136 = vxor.u32 %v2831, 2147483648
      %v3137 = vxor.u32 %v2880, 2147483648
      %v3138 = vxor.u32 %v2929, 2147483648
      %v3139 = vxor.u32 %v2978, 2147483648
      %v3140 = vxor.u32 %v3027, 2147483648
      %v3141 = vmul.f32 %v3029, 1.442695
      %v3142 = vpow.pop %v3141
      %v3143 = vmul.f32 %v3030, 1.442695
      %v3144 = vpow.pop %v3143
      %v3145 = vmul.f32 %v3031, 1.442695
      %v3146 = vpow.pop %v3145
      %v3147 = vmul.f32 %v3032, 1.442695
      %v3148 = vpow.pop %v3147
      %v3149 = vmul.f32 %v3033, 1.442695
      %v3150 = vpow.pop %v3149
      %v3151 = vmul.f32 %v3034, 1.442695
      %v3152 = vpow.pop %v3151
      %v3153 = vmul.f32 %v3035, 1.442695
      %v3154 = vpow.pop %v3153
      %v3155 = vmul.f32 %v3036, 1.442695
      %v3156 = vpow.pop %v3155
      %v3157 = vmul.f32 %v3037, 1.442695
      %v3158 = vpow.pop %v3157
      %v3159 = vmul.f32 %v3038, 1.442695
      %v3160 = vpow.pop %v3159
      %v3161 = vmul.f32 %v3039, 1.442695
      %v3162 = vpow.pop %v3161
      %v3163 = vmul.f32 %v3040, 1.442695
      %v3164 = vpow.pop %v3163
      %v3165 = vmul.f32 %v3041, 1.442695
      %v3166 = vpow.pop %v3165
      %v3167 = vmul.f32 %v3042, 1.442695
      %v3168 = vpow.pop %v3167
      %v3169 = vmul.f32 %v3043, 1.442695
      %v3170 = vpow.pop %v3169
      %v3171 = vmul.f32 %v3044, 1.442695
      %v3172 = vpow.pop %v3171
      %v3173 = vmul.f32 %v3045, 1.442695
      %v3174 = vpow.pop %v3173
      %v3175 = vmul.f32 %v3046, 1.442695
      %v3176 = vpow.pop %v3175
      %v3177 = vmul.f32 %v3047, 1.442695
      %v3178 = vpow.pop %v3177
      %v3179 = vmul.f32 %v3048, 1.442695
      %v3180 = vpow.pop %v3179
      %v3181 = vmul.f32 %v3049, 1.442695
      %v3182 = vpow.pop %v3181
      %v3183 = vmul.f32 %v3050, 1.442695
      %v3184 = vpow.pop %v3183
      %v3185 = vmul.f32 %v3051, 1.442695
      %v3186 = vpow.pop %v3185
      %v3187 = vmul.f32 %v3052, 1.442695
      %v3188 = vpow.pop %v3187
      %v3189 = vmul.f32 %v3053, 1.442695
      %v3190 = vpow.pop %v3189
      %v3191 = vmul.f32 %v3054, 1.442695
      %v3192 = vpow.pop %v3191
      %v3193 = vmul.f32 %v3055, 1.442695
      %v3194 = vpow.pop %v3193
      %v3195 = vmul.f32 %v3056, 1.442695
      %v3196 = vpow.pop %v3195
      %v3197 = vmul.f32 %v3057, 1.442695
      %v3198 = vpow.pop %v3197
      %v3199 = vmul.f32 %v3058, 1.442695
      %v3200 = vpow.pop %v3199
      %v3201 = vmul.f32 %v3059, 1.442695
      %v3202 = vpow.pop %v3201
      %v3203 = vmul.f32 %v3060, 1.442695
      %v3204 = vpow.pop %v3203
      %v3205 = vmul.f32 %v3061, 1.442695
      %v3206 = vpow.pop %v3205
      %v3207 = vmul.f32 %v3062, 1.442695
      %v3208 = vpow.pop %v3207
      %v3209 = vmul.f32 %v3063, 1.442695
      %v3210 = vpow.pop %v3209
      %v3211 = vmul.f32 %v3064, 1.442695
      %v3212 = vpow.pop %v3211
      %v3213 = vmul.f32 %v3065, 1.442695
      %v3214 = vpow.pop %v3213
      %v3215 = vmul.f32 %v3066, 1.442695
      %v3216 = vpow.pop %v3215
      %v3217 = vmul.f32 %v3067, 1.442695
      %v3218 = vpow.pop %v3217
      %v3219 = vmul.f32 %v3068, 1.442695
      %v3220 = vpow.pop %v3219
      %v3221 = vmul.f32 %v3069, 1.442695
      %v3222 = vpow.pop %v3221
      %v3223 = vmul.f32 %v3070, 1.442695
      %v3224 = vpow.pop %v3223
      %v3225 = vmul.f32 %v3071, 1.442695
      %v3226 = vpow.pop %v3225
      %v3227 = vmul.f32 %v3072, 1.442695
      %v3228 = vpow.pop %v3227
      %v3229 = vmul.f32 %v3073, 1.442695
      %v3230 = vpow.pop %v3229
      %v3231 = vmul.f32 %v3074, 1.442695
      %v3232 = vpow.pop %v3231
      %v3233 = vmul.f32 %v3075, 1.442695
      %v3234 = vpow.pop %v3233
      %v3235 = vmul.f32 %v3076, 1.442695
      %v3236 = vpow.pop %v3235
      %v3237 = vmul.f32 %v3077, 1.442695
      %v3238 = vpow.pop %v3237
      %v3239 = vmul.f32 %v3078, 1.442695
      %v3240 = vpow.pop %v3239
      %v3241 = vmul.f32 %v3079, 1.442695
      %v3242 = vpow.pop %v3241
      %v3243 = vmul.f32 %v3080, 1.442695
      %v3244 = vpow.pop %v3243
      %v3245 = vmul.f32 %v3081, 1.442695
      %v3246 = vpow.pop %v3245
      %v3247 = vmul.f32 %v3082, 1.442695
      %v3248 = vpow.pop %v3247
      %v3249 = vmul.f32 %v3083, 1.442695
      %v3250 = vpow.pop %v3249
      %v3251 = vmul.f32 %v3084, 1.442695
      %v3252 = vpow.pop %v3251
      %v3253 = vmul.f32 %v3085, 1.442695
      %v3254 = vpow.pop %v3253
      %v3255 = vmul.f32 %v3086, 1.442695
      %v3256 = vpow.pop %v3255
      %v3257 = vmul.f32 %v3087, 1.442695
      %v3258 = vpow.pop %v3257
      %v3259 = vmul.f32 %v3088, 1.442695
      %v3260 = vpow.pop %v3259
      %v3261 = vmul.f32 %v3089, 1.442695
      %v3262 = vpow.pop %v3261
      %v3263 = vmul.f32 %v3090, 1.442695
      %v3264 = vpow.pop %v3263
      %v3265 = vmul.f32 %v3091, 1.442695
      %v3266 = vpow.pop %v3265
      %v3267 = vmul.f32 %v3092, 1.442695
      %v3268 = vpow.pop %v3267
      %v3269 = vmul.f32 %v3093, 1.442695
      %v3270 = vpow.pop %v3269
      %v3271 = vmul.f32 %v3094, 1.442695
      %v3272 = vpow.pop %v3271
      %v3273 = vmul.f32 %v3095, 1.442695
      %v3274 = vpow.pop %v3273
      %v3275 = vmul.f32 %v3096, 1.442695
      %v3276 = vpow.pop %v3275
      %v3277 = vmul.f32 %v3097, 1.442695
      %v3278 = vpow.pop %v3277
      %v3279 = vmul.f32 %v3098, 1.442695
      %v3280 = vpow.pop %v3279
      %v3281 = vmul.f32 %v3099, 1.442695
      %v3282 = vpow.pop %v3281
      %v3283 = vmul.f32 %v3100, 1.442695
      %v3284 = vpow.pop %v3283
      %v3285 = vmul.f32 %v3101, 1.442695
      %v3286 = vpow.pop %v3285
      %v3287 = vmul.f32 %v3102, 1.442695
      %v3288 = vpow.pop %v3287
      %v3289 = vmul.f32 %v3103, 1.442695
      %v3290 = vpow.pop %v3289
      %v3291 = vmul.f32 %v3104, 1.442695
      %v3292 = vpow.pop %v3291
      %v3293 = vmul.f32 %v3105, 1.442695
      %v3294 = vpow.pop %v3293
      %v3295 = vmul.f32 %v3106, 1.442695
      %v3296 = vpow.pop %v3295
      %v3297 = vmul.f32 %v3107, 1.442695
      %v3298 = vpow.pop %v3297
      %v3299 = vmul.f32 %v3108, 1.442695
      %v3300 = vpow.pop %v3299
      %v3301 = vmul.f32 %v3109, 1.442695
      %v3302 = vpow.pop %v3301
      %v3303 = vmul.f32 %v3110, 1.442695
      %v3304 = vpow.pop %v3303
      %v3305 = vmul.f32 %v3111, 1.442695
      %v3306 = vpow.pop %v3305
      %v3307 = vmul.f32 %v3112, 1.442695
      %v3308 = vpow.pop %v3307
      %v3309 = vmul.f32 %v3113, 1.442695
      %v3310 = vpow.pop %v3309
      %v3311 = vmul.f32 %v3114, 1.442695
      %v3312 = vpow.pop %v3311
      %v3313 = vmul.f32 %v3115, 1.442695
      %v3314 = vpow.pop %v3313
      %v3315 = vmul.f32 %v3116, 1.442695
      %v3316 = vpow.pop %v3315
      %v3317 = vmul.f32 %v3117, 1.442695
      %v3318 = vpow.pop %v3317
      %v3319 = vmul.f32 %v3118, 1.442695
      %v3320 = vpow.pop %v3319
      %v3321 = vmul.f32 %v3119, 1.442695
      %v3322 = vpow.pop %v3321
      %v3323 = vmul.f32 %v3120, 1.442695
      %v3324 = vpow.pop %v3323
      %v3325 = vmul.f32 %v3121, 1.442695
      %v3326 = vpow.pop %v3325
      %v3327 = vmul.f32 %v3122, 1.442695
      %v3328 = vpow.pop %v3327
      %v3329 = vmul.f32 %v3123, 1.442695
      %v3330 = vpow.pop %v3329
      %v3331 = vmul.f32 %v3124, 1.442695
      %v3332 = vpow.pop %v3331
      %v3333 = vmul.f32 %v3125, 1.442695
      %v3334 = vpow.pop %v3333
      %v3335 = vmul.f32 %v3126, 1.442695
      %v3336 = vpow.pop %v3335
      %v3337 = vmul.f32 %v3127, 1.442695
      %v3338 = vpow.pop %v3337
      %v3339 = vmul.f32 %v3128, 1.442695
      %v3340 = vpow.pop %v3339
      %v3341 = vmul.f32 %v3129, 1.442695
      %v3342 = vpow.pop %v3341
      %v3343 = vmul.f32 %v3130, 1.442695
      %v3344 = vpow.pop %v3343
      %v3345 = vmul.f32 %v3131, 1.442695
      %v3346 = vpow.pop %v3345
      %v3347 = vmul.f32 %v3132, 1.442695
      %v3348 = vpow.pop %v3347
      %v3349 = vmul.f32 %v3133, 1.442695
      %v3350 = vpow.pop %v3349
      %v3351 = vmul.f32 %v3134, 1.442695
      %v3352 = vpow.pop %v3351
      %v3353 = vmul.f32 %v3135, 1.442695
      %v3354 = vpow.pop %v3353
      %v3355 = vmul.f32 %v3136, 1.442695
      %v3356 = vpow.pop %v3355
      %v3357 = vmul.f32 %v3137, 1.442695
      %v3358 = vpow.pop %v3357
      %v3359 = vmul.f32 %v3138, 1.442695
      %v3360 = vpow.pop %v3359
      %v3361 = vmul.f32 %v3139, 1.442695
      %v3362 = vpow.pop %v3361
      %v3363 = vmul.f32 %v3140, 1.442695
      %v3364 = vpow.pop %v3363
      %v3365 = vadd.f32 %v3142, 1.0
      %v3366 = vadd.f32 %v3144, 1.0
      %v3367 = vadd.f32 %v3146, 1.0
      %v3368 = vadd.f32 %v3148, 1.0
      %v3369 = vadd.f32 %v3150, 1.0
      %v3370 = vadd.f32 %v3152, 1.0
      %v3371 = vadd.f32 %v3154, 1.0
      %v3372 = vadd.f32 %v3156, 1.0
      %v3373 = vadd.f32 %v3158, 1.0
      %v3374 = vadd.f32 %v3160, 1.0
      %v3375 = vadd.f32 %v3162, 1.0
      %v3376 = vadd.f32 %v3164, 1.0
      %v3377 = vadd.f32 %v3166, 1.0
      %v3378 = vadd.f32 %v3168, 1.0
      %v3379 = vadd.f32 %v3170, 1.0
      %v3380 = vadd.f32 %v3172, 1.0
      %v3381 = vadd.f32 %v3174, 1.0
      %v3382 = vadd.f32 %v3176, 1.0
      %v3383 = vadd.f32 %v3178, 1.0
      %v3384 = vadd.f32 %v3180, 1.0
      %v3385 = vadd.f32 %v3182, 1.0
      %v3386 = vadd.f32 %v3184, 1.0
      %v3387 = vadd.f32 %v3186, 1.0
      %v3388 = vadd.f32 %v3188, 1.0
      %v3389 = vadd.f32 %v3190, 1.0
      %v3390 = vadd.f32 %v3192, 1.0
      %v3391 = vadd.f32 %v3194, 1.0
      %v3392 = vadd.f32 %v3196, 1.0
      %v3393 = vadd.f32 %v3198, 1.0
      %v3394 = vadd.f32 %v3200, 1.0
      %v3395 = vadd.f32 %v3202, 1.0
      %v3396 = vadd.f32 %v3204, 1.0
      %v3397 = vadd.f32 %v3206, 1.0
      %v3398 = vadd.f32 %v3208, 1.0
      %v3399 = vadd.f32 %v3210, 1.0
      %v3400 = vadd.f32 %v3212, 1.0
      %v3401 = vadd.f32 %v3214, 1.0
      %v3402 = vadd.f32 %v3216, 1.0
      %v3403 = vadd.f32 %v3218, 1.0
      %v3404 = vadd.f32 %v3220, 1.0
      %v3405 = vadd.f32 %v3222, 1.0
      %v3406 = vadd.f32 %v3224, 1.0
      %v3407 = vadd.f32 %v3226, 1.0
      %v3408 = vadd.f32 %v3228, 1.0
      %v3409 = vadd.f32 %v3230, 1.0
      %v3410 = vadd.f32 %v3232, 1.0
      %v3411 = vadd.f32 %v3234, 1.0
      %v3412 = vadd.f32 %v3236, 1.0
      %v3413 = vadd.f32 %v3238, 1.0
      %v3414 = vadd.f32 %v3240, 1.0
      %v3415 = vadd.f32 %v3242, 1.0
      %v3416 = vadd.f32 %v3244, 1.0
      %v3417 = vadd.f32 %v3246, 1.0
      %v3418 = vadd.f32 %v3248, 1.0
      %v3419 = vadd.f32 %v3250, 1.0
      %v3420 = vadd.f32 %v3252, 1.0
      %v3421 = vadd.f32 %v3254, 1.0
      %v3422 = vadd.f32 %v3256, 1.0
      %v3423 = vadd.f32 %v3258, 1.0
      %v3424 = vadd.f32 %v3260, 1.0
      %v3425 = vadd.f32 %v3262, 1.0
      %v3426 = vadd.f32 %v3264, 1.0
      %v3427 = vadd.f32 %v3266, 1.0
      %v3428 = vadd.f32 %v3268, 1.0
      %v3429 = vadd.f32 %v3270, 1.0
      %v3430 = vadd.f32 %v3272, 1.0
      %v3431 = vadd.f32 %v3274, 1.0
      %v3432 = vadd.f32 %v3276, 1.0
      %v3433 = vadd.f32 %v3278, 1.0
      %v3434 = vadd.f32 %v3280, 1.0
      %v3435 = vadd.f32 %v3282, 1.0
      %v3436 = vadd.f32 %v3284, 1.0
      %v3437 = vadd.f32 %v3286, 1.0
      %v3438 = vadd.f32 %v3288, 1.0
      %v3439 = vadd.f32 %v3290, 1.0
      %v3440 = vadd.f32 %v3292, 1.0
      %v3441 = vadd.f32 %v3294, 1.0
      %v3442 = vadd.f32 %v3296, 1.0
      %v3443 = vadd.f32 %v3298, 1.0
      %v3444 = vadd.f32 %v3300, 1.0
      %v3445 = vadd.f32 %v3302, 1.0
      %v3446 = vadd.f32 %v3304, 1.0
      %v3447 = vadd.f32 %v3306, 1.0
      %v3448 = vadd.f32 %v3308, 1.0
      %v3449 = vadd.f32 %v3310, 1.0
      %v3450 = vadd.f32 %v3312, 1.0
      %v3451 = vadd.f32 %v3314, 1.0
      %v3452 = vadd.f32 %v3316, 1.0
      %v3453 = vadd.f32 %v3318, 1.0
      %v3454 = vadd.f32 %v3320, 1.0
      %v3455 = vadd.f32 %v3322, 1.0
      %v3456 = vadd.f32 %v3324, 1.0
      %v3457 = vadd.f32 %v3326, 1.0
      %v3458 = vadd.f32 %v3328, 1.0
      %v3459 = vadd.f32 %v3330, 1.0
      %v3460 = vadd.f32 %v3332, 1.0
      %v3461 = vadd.f32 %v3334, 1.0
      %v3462 = vadd.f32 %v3336, 1.0
      %v3463 = vadd.f32 %v3338, 1.0
      %v3464 = vadd.f32 %v3340, 1.0
      %v3465 = vadd.f32 %v3342, 1.0
      %v3466 = vadd.f32 %v3344, 1.0
      %v3467 = vadd.f32 %v3346, 1.0
      %v3468 = vadd.f32 %v3348, 1.0
      %v3469 = vadd.f32 %v3350, 1.0
      %v3470 = vadd.f32 %v3352, 1.0
      %v3471 = vadd.f32 %v3354, 1.0
      %v3472 = vadd.f32 %v3356, 1.0
      %v3473 = vadd.f32 %v3358, 1.0
      %v3474 = vadd.f32 %v3360, 1.0
      %v3475 = vadd.f32 %v3362, 1.0
      %v3476 = vadd.f32 %v3364, 1.0
      %v3477 = vrcp.pop %v3365
      %v3478 = vmul.f32 %v3365, %v3477
      %v3479 = vsub.f32 1.0, %v3478
      %v3480 = vmul.f32 %v3477, %v3479
      %v3481 = vadd.f32 %v3477, %v3480
      %vm3482 = vweird.f32 %v3365
      %vm3483 = vweird.f32 %v3477
      %vm3484 = vmor %vm3482, %vm3483
      %v3485 = vsel %vm3484, %v3477, %v3481
      %v3486 = vand.u32 2147483647, %v3365
      %vm3487 = vcmp.eq.f32.partialorder %v3486, 8.507059e+37
      %v3488 = vand.u32 %v3365, 2147483648
      %v3489 = vor.u32 1.1754944e-38, %v3488
      %v3490 = vsel %vm3487, %v3489, %v3485
      %v3491 = vmul.f32 1.0, %v3490
      %v3492 = vrcp.pop %v3366
      %v3493 = vmul.f32 %v3366, %v3492
      %v3494 = vsub.f32 1.0, %v3493
      %v3495 = vmul.f32 %v3492, %v3494
      %v3496 = vadd.f32 %v3492, %v3495
      %vm3497 = vweird.f32 %v3366
      %vm3498 = vweird.f32 %v3492
      %vm3499 = vmor %vm3497, %vm3498
      %v3500 = vsel %vm3499, %v3492, %v3496
      %v3501 = vand.u32 2147483647, %v3366
      %vm3502 = vcmp.eq.f32.partialorder %v3501, 8.507059e+37
      %v3503 = vand.u32 %v3366, 2147483648
      %v3504 = vor.u32 1.1754944e-38, %v3503
      %v3505 = vsel %vm3502, %v3504, %v3500
      %v3506 = vmul.f32 1.0, %v3505
      %v3507 = vrcp.pop %v3367
      %v3508 = vmul.f32 %v3367, %v3507
      %v3509 = vsub.f32 1.0, %v3508
      %v3510 = vmul.f32 %v3507, %v3509
      %v3511 = vadd.f32 %v3507, %v3510
      %vm3512 = vweird.f32 %v3367
      %vm3513 = vweird.f32 %v3507
      %vm3514 = vmor %vm3512, %vm3513
      %v3515 = vsel %vm3514, %v3507, %v3511
      %v3516 = vand.u32 2147483647, %v3367
      %vm3517 = vcmp.eq.f32.partialorder %v3516, 8.507059e+37
      %v3518 = vand.u32 %v3367, 2147483648
      %v3519 = vor.u32 1.1754944e-38, %v3518
      %v3520 = vsel %vm3517, %v3519, %v3515
      %v3521 = vmul.f32 1.0, %v3520
      %v3522 = vrcp.pop %v3368
      %v3523 = vmul.f32 %v3368, %v3522
      %v3524 = vsub.f32 1.0, %v3523
      %v3525 = vmul.f32 %v3522, %v3524
      %v3526 = vadd.f32 %v3522, %v3525
      %vm3527 = vweird.f32 %v3368
      %vm3528 = vweird.f32 %v3522
      %vm3529 = vmor %vm3527, %vm3528
      %v3530 = vsel %vm3529, %v3522, %v3526
      %v3531 = vand.u32 2147483647, %v3368
      %vm3532 = vcmp.eq.f32.partialorder %v3531, 8.507059e+37
      %v3533 = vand.u32 %v3368, 2147483648
      %v3534 = vor.u32 1.1754944e-38, %v3533
      %v3535 = vsel %vm3532, %v3534, %v3530
      %v3536 = vmul.f32 1.0, %v3535
      %v3537 = vrcp.pop %v3369
      %v3538 = vmul.f32 %v3369, %v3537
      %v3539 = vsub.f32 1.0, %v3538
      %v3540 = vmul.f32 %v3537, %v3539
      %v3541 = vadd.f32 %v3537, %v3540
      %vm3542 = vweird.f32 %v3369
      %vm3543 = vweird.f32 %v3537
      %vm3544 = vmor %vm3542, %vm3543
      %v3545 = vsel %vm3544, %v3537, %v3541
      %v3546 = vand.u32 2147483647, %v3369
      %vm3547 = vcmp.eq.f32.partialorder %v3546, 8.507059e+37
      %v3548 = vand.u32 %v3369, 2147483648
      %v3549 = vor.u32 1.1754944e-38, %v3548
      %v3550 = vsel %vm3547, %v3549, %v3545
      %v3551 = vmul.f32 1.0, %v3550
      %v3552 = vrcp.pop %v3370
      %v3553 = vmul.f32 %v3370, %v3552
      %v3554 = vsub.f32 1.0, %v3553
      %v3555 = vmul.f32 %v3552, %v3554
      %v3556 = vadd.f32 %v3552, %v3555
      %vm3557 = vweird.f32 %v3370
      %vm3558 = vweird.f32 %v3552
      %vm3559 = vmor %vm3557, %vm3558
      %v3560 = vsel %vm3559, %v3552, %v3556
      %v3561 = vand.u32 2147483647, %v3370
      %vm3562 = vcmp.eq.f32.partialorder %v3561, 8.507059e+37
      %v3563 = vand.u32 %v3370, 2147483648
      %v3564 = vor.u32 1.1754944e-38, %v3563
      %v3565 = vsel %vm3562, %v3564, %v3560
      %v3566 = vmul.f32 1.0, %v3565
      %v3567 = vrcp.pop %v3371
      %v3568 = vmul.f32 %v3371, %v3567
      %v3569 = vsub.f32 1.0, %v3568
      %v3570 = vmul.f32 %v3567, %v3569
      %v3571 = vadd.f32 %v3567, %v3570
      %vm3572 = vweird.f32 %v3371
      %vm3573 = vweird.f32 %v3567
      %vm3574 = vmor %vm3572, %vm3573
      %v3575 = vsel %vm3574, %v3567, %v3571
      %v3576 = vand.u32 2147483647, %v3371
      %vm3577 = vcmp.eq.f32.partialorder %v3576, 8.507059e+37
      %v3578 = vand.u32 %v3371, 2147483648
      %v3579 = vor.u32 1.1754944e-38, %v3578
      %v3580 = vsel %vm3577, %v3579, %v3575
      %v3581 = vmul.f32 1.0, %v3580
      %v3582 = vrcp.pop %v3372
      %v3583 = vmul.f32 %v3372, %v3582
      %v3584 = vsub.f32 1.0, %v3583
      %v3585 = vmul.f32 %v3582, %v3584
      %v3586 = vadd.f32 %v3582, %v3585
      %vm3587 = vweird.f32 %v3372
      %vm3588 = vweird.f32 %v3582
      %vm3589 = vmor %vm3587, %vm3588
      %v3590 = vsel %vm3589, %v3582, %v3586
      %v3591 = vand.u32 2147483647, %v3372
      %vm3592 = vcmp.eq.f32.partialorder %v3591, 8.507059e+37
      %v3593 = vand.u32 %v3372, 2147483648
      %v3594 = vor.u32 1.1754944e-38, %v3593
      %v3595 = vsel %vm3592, %v3594, %v3590
      %v3596 = vmul.f32 1.0, %v3595
      %v3597 = vrcp.pop %v3373
      %v3598 = vmul.f32 %v3373, %v3597
      %v3599 = vsub.f32 1.0, %v3598
      %v3600 = vmul.f32 %v3597, %v3599
      %v3601 = vadd.f32 %v3597, %v3600
      %vm3602 = vweird.f32 %v3373
      %vm3603 = vweird.f32 %v3597
      %vm3604 = vmor %vm3602, %vm3603
      %v3605 = vsel %vm3604, %v3597, %v3601
      %v3606 = vand.u32 2147483647, %v3373
      %vm3607 = vcmp.eq.f32.partialorder %v3606, 8.507059e+37
      %v3608 = vand.u32 %v3373, 2147483648
      %v3609 = vor.u32 1.1754944e-38, %v3608
      %v3610 = vsel %vm3607, %v3609, %v3605
      %v3611 = vmul.f32 1.0, %v3610
      %v3612 = vrcp.pop %v3374
      %v3613 = vmul.f32 %v3374, %v3612
      %v3614 = vsub.f32 1.0, %v3613
      %v3615 = vmul.f32 %v3612, %v3614
      %v3616 = vadd.f32 %v3612, %v3615
      %vm3617 = vweird.f32 %v3374
      %vm3618 = vweird.f32 %v3612
      %vm3619 = vmor %vm3617, %vm3618
      %v3620 = vsel %vm3619, %v3612, %v3616
      %v3621 = vand.u32 2147483647, %v3374
      %vm3622 = vcmp.eq.f32.partialorder %v3621, 8.507059e+37
      %v3623 = vand.u32 %v3374, 2147483648
      %v3624 = vor.u32 1.1754944e-38, %v3623
      %v3625 = vsel %vm3622, %v3624, %v3620
      %v3626 = vmul.f32 1.0, %v3625
      %v3627 = vrcp.pop %v3375
      %v3628 = vmul.f32 %v3375, %v3627
      %v3629 = vsub.f32 1.0, %v3628
      %v3630 = vmul.f32 %v3627, %v3629
      %v3631 = vadd.f32 %v3627, %v3630
      %vm3632 = vweird.f32 %v3375
      %vm3633 = vweird.f32 %v3627
      %vm3634 = vmor %vm3632, %vm3633
      %v3635 = vsel %vm3634, %v3627, %v3631
      %v3636 = vand.u32 2147483647, %v3375
      %vm3637 = vcmp.eq.f32.partialorder %v3636, 8.507059e+37
      %v3638 = vand.u32 %v3375, 2147483648
      %v3639 = vor.u32 1.1754944e-38, %v3638
      %v3640 = vsel %vm3637, %v3639, %v3635
      %v3641 = vmul.f32 1.0, %v3640
      %v3642 = vrcp.pop %v3376
      %v3643 = vmul.f32 %v3376, %v3642
      %v3644 = vsub.f32 1.0, %v3643
      %v3645 = vmul.f32 %v3642, %v3644
      %v3646 = vadd.f32 %v3642, %v3645
      %vm3647 = vweird.f32 %v3376
      %vm3648 = vweird.f32 %v3642
      %vm3649 = vmor %vm3647, %vm3648
      %v3650 = vsel %vm3649, %v3642, %v3646
      %v3651 = vand.u32 2147483647, %v3376
      %vm3652 = vcmp.eq.f32.partialorder %v3651, 8.507059e+37
      %v3653 = vand.u32 %v3376, 2147483648
      %v3654 = vor.u32 1.1754944e-38, %v3653
      %v3655 = vsel %vm3652, %v3654, %v3650
      %v3656 = vmul.f32 1.0, %v3655
      %v3657 = vrcp.pop %v3377
      %v3658 = vmul.f32 %v3377, %v3657
      %v3659 = vsub.f32 1.0, %v3658
      %v3660 = vmul.f32 %v3657, %v3659
      %v3661 = vadd.f32 %v3657, %v3660
      %vm3662 = vweird.f32 %v3377
      %vm3663 = vweird.f32 %v3657
      %vm3664 = vmor %vm3662, %vm3663
      %v3665 = vsel %vm3664, %v3657, %v3661
      %v3666 = vand.u32 2147483647, %v3377
      %vm3667 = vcmp.eq.f32.partialorder %v3666, 8.507059e+37
      %v3668 = vand.u32 %v3377, 2147483648
      %v3669 = vor.u32 1.1754944e-38, %v3668
      %v3670 = vsel %vm3667, %v3669, %v3665
      %v3671 = vmul.f32 1.0, %v3670
      %v3672 = vrcp.pop %v3378
      %v3673 = vmul.f32 %v3378, %v3672
      %v3674 = vsub.f32 1.0, %v3673
      %v3675 = vmul.f32 %v3672, %v3674
      %v3676 = vadd.f32 %v3672, %v3675
      %vm3677 = vweird.f32 %v3378
      %vm3678 = vweird.f32 %v3672
      %vm3679 = vmor %vm3677, %vm3678
      %v3680 = vsel %vm3679, %v3672, %v3676
      %v3681 = vand.u32 2147483647, %v3378
      %vm3682 = vcmp.eq.f32.partialorder %v3681, 8.507059e+37
      %v3683 = vand.u32 %v3378, 2147483648
      %v3684 = vor.u32 1.1754944e-38, %v3683
      %v3685 = vsel %vm3682, %v3684, %v3680
      %v3686 = vmul.f32 1.0, %v3685
      %v3687 = vrcp.pop %v3379
      %v3688 = vmul.f32 %v3379, %v3687
      %v3689 = vsub.f32 1.0, %v3688
      %v3690 = vmul.f32 %v3687, %v3689
      %v3691 = vadd.f32 %v3687, %v3690
      %vm3692 = vweird.f32 %v3379
      %vm3693 = vweird.f32 %v3687
      %vm3694 = vmor %vm3692, %vm3693
      %v3695 = vsel %vm3694, %v3687, %v3691
      %v3696 = vand.u32 2147483647, %v3379
      %vm3697 = vcmp.eq.f32.partialorder %v3696, 8.507059e+37
      %v3698 = vand.u32 %v3379, 2147483648
      %v3699 = vor.u32 1.1754944e-38, %v3698
      %v3700 = vsel %vm3697, %v3699, %v3695
      %v3701 = vmul.f32 1.0, %v3700
      %v3702 = vrcp.pop %v3380
      %v3703 = vmul.f32 %v3380, %v3702
      %v3704 = vsub.f32 1.0, %v3703
      %v3705 = vmul.f32 %v3702, %v3704
      %v3706 = vadd.f32 %v3702, %v3705
      %vm3707 = vweird.f32 %v3380
      %vm3708 = vweird.f32 %v3702
      %vm3709 = vmor %vm3707, %vm3708
      %v3710 = vsel %vm3709, %v3702, %v3706
      %v3711 = vand.u32 2147483647, %v3380
      %vm3712 = vcmp.eq.f32.partialorder %v3711, 8.507059e+37
      %v3713 = vand.u32 %v3380, 2147483648
      %v3714 = vor.u32 1.1754944e-38, %v3713
      %v3715 = vsel %vm3712, %v3714, %v3710
      %v3716 = vmul.f32 1.0, %v3715
      %v3717 = vrcp.pop %v3381
      %v3718 = vmul.f32 %v3381, %v3717
      %v3719 = vsub.f32 1.0, %v3718
      %v3720 = vmul.f32 %v3717, %v3719
      %v3721 = vadd.f32 %v3717, %v3720
      %vm3722 = vweird.f32 %v3381
      %vm3723 = vweird.f32 %v3717
      %vm3724 = vmor %vm3722, %vm3723
      %v3725 = vsel %vm3724, %v3717, %v3721
      %v3726 = vand.u32 2147483647, %v3381
      %vm3727 = vcmp.eq.f32.partialorder %v3726, 8.507059e+37
      %v3728 = vand.u32 %v3381, 2147483648
      %v3729 = vor.u32 1.1754944e-38, %v3728
      %v3730 = vsel %vm3727, %v3729, %v3725
      %v3731 = vmul.f32 1.0, %v3730
      %v3732 = vrcp.pop %v3382
      %v3733 = vmul.f32 %v3382, %v3732
      %v3734 = vsub.f32 1.0, %v3733
      %v3735 = vmul.f32 %v3732, %v3734
      %v3736 = vadd.f32 %v3732, %v3735
      %vm3737 = vweird.f32 %v3382
      %vm3738 = vweird.f32 %v3732
      %vm3739 = vmor %vm3737, %vm3738
      %v3740 = vsel %vm3739, %v3732, %v3736
      %v3741 = vand.u32 2147483647, %v3382
      %vm3742 = vcmp.eq.f32.partialorder %v3741, 8.507059e+37
      %v3743 = vand.u32 %v3382, 2147483648
      %v3744 = vor.u32 1.1754944e-38, %v3743
      %v3745 = vsel %vm3742, %v3744, %v3740
      %v3746 = vmul.f32 1.0, %v3745
      %v3747 = vrcp.pop %v3383
      %v3748 = vmul.f32 %v3383, %v3747
      %v3749 = vsub.f32 1.0, %v3748
      %v3750 = vmul.f32 %v3747, %v3749
      %v3751 = vadd.f32 %v3747, %v3750
      %vm3752 = vweird.f32 %v3383
      %vm3753 = vweird.f32 %v3747
      %vm3754 = vmor %vm3752, %vm3753
      %v3755 = vsel %vm3754, %v3747, %v3751
      %v3756 = vand.u32 2147483647, %v3383
      %vm3757 = vcmp.eq.f32.partialorder %v3756, 8.507059e+37
      %v3758 = vand.u32 %v3383, 2147483648
      %v3759 = vor.u32 1.1754944e-38, %v3758
      %v3760 = vsel %vm3757, %v3759, %v3755
      %v3761 = vmul.f32 1.0, %v3760
      %v3762 = vrcp.pop %v3384
      %v3763 = vmul.f32 %v3384, %v3762
      %v3764 = vsub.f32 1.0, %v3763
      %v3765 = vmul.f32 %v3762, %v3764
      %v3766 = vadd.f32 %v3762, %v3765
      %vm3767 = vweird.f32 %v3384
      %vm3768 = vweird.f32 %v3762
      %vm3769 = vmor %vm3767, %vm3768
      %v3770 = vsel %vm3769, %v3762, %v3766
      %v3771 = vand.u32 2147483647, %v3384
      %vm3772 = vcmp.eq.f32.partialorder %v3771, 8.507059e+37
      %v3773 = vand.u32 %v3384, 2147483648
      %v3774 = vor.u32 1.1754944e-38, %v3773
      %v3775 = vsel %vm3772, %v3774, %v3770
      %v3776 = vmul.f32 1.0, %v3775
      %v3777 = vrcp.pop %v3385
      %v3778 = vmul.f32 %v3385, %v3777
      %v3779 = vsub.f32 1.0, %v3778
      %v3780 = vmul.f32 %v3777, %v3779
      %v3781 = vadd.f32 %v3777, %v3780
      %vm3782 = vweird.f32 %v3385
      %vm3783 = vweird.f32 %v3777
      %vm3784 = vmor %vm3782, %vm3783
      %v3785 = vsel %vm3784, %v3777, %v3781
      %v3786 = vand.u32 2147483647, %v3385
      %vm3787 = vcmp.eq.f32.partialorder %v3786, 8.507059e+37
      %v3788 = vand.u32 %v3385, 2147483648
      %v3789 = vor.u32 1.1754944e-38, %v3788
      %v3790 = vsel %vm3787, %v3789, %v3785
      %v3791 = vmul.f32 1.0, %v3790
      %v3792 = vrcp.pop %v3386
      %v3793 = vmul.f32 %v3386, %v3792
      %v3794 = vsub.f32 1.0, %v3793
      %v3795 = vmul.f32 %v3792, %v3794
      %v3796 = vadd.f32 %v3792, %v3795
      %vm3797 = vweird.f32 %v3386
      %vm3798 = vweird.f32 %v3792
      %vm3799 = vmor %vm3797, %vm3798
      %v3800 = vsel %vm3799, %v3792, %v3796
      %v3801 = vand.u32 2147483647, %v3386
      %vm3802 = vcmp.eq.f32.partialorder %v3801, 8.507059e+37
      %v3803 = vand.u32 %v3386, 2147483648
      %v3804 = vor.u32 1.1754944e-38, %v3803
      %v3805 = vsel %vm3802, %v3804, %v3800
      %v3806 = vmul.f32 1.0, %v3805
      %v3807 = vrcp.pop %v3387
      %v3808 = vmul.f32 %v3387, %v3807
      %v3809 = vsub.f32 1.0, %v3808
      %v3810 = vmul.f32 %v3807, %v3809
      %v3811 = vadd.f32 %v3807, %v3810
      %vm3812 = vweird.f32 %v3387
      %vm3813 = vweird.f32 %v3807
      %vm3814 = vmor %vm3812, %vm3813
      %v3815 = vsel %vm3814, %v3807, %v3811
      %v3816 = vand.u32 2147483647, %v3387
      %vm3817 = vcmp.eq.f32.partialorder %v3816, 8.507059e+37
      %v3818 = vand.u32 %v3387, 2147483648
      %v3819 = vor.u32 1.1754944e-38, %v3818
      %v3820 = vsel %vm3817, %v3819, %v3815
      %v3821 = vmul.f32 1.0, %v3820
      %v3822 = vrcp.pop %v3388
      %v3823 = vmul.f32 %v3388, %v3822
      %v3824 = vsub.f32 1.0, %v3823
      %v3825 = vmul.f32 %v3822, %v3824
      %v3826 = vadd.f32 %v3822, %v3825
      %vm3827 = vweird.f32 %v3388
      %vm3828 = vweird.f32 %v3822
      %vm3829 = vmor %vm3827, %vm3828
      %v3830 = vsel %vm3829, %v3822, %v3826
      %v3831 = vand.u32 2147483647, %v3388
      %vm3832 = vcmp.eq.f32.partialorder %v3831, 8.507059e+37
      %v3833 = vand.u32 %v3388, 2147483648
      %v3834 = vor.u32 1.1754944e-38, %v3833
      %v3835 = vsel %vm3832, %v3834, %v3830
      %v3836 = vmul.f32 1.0, %v3835
      %v3837 = vrcp.pop %v3389
      %v3838 = vmul.f32 %v3389, %v3837
      %v3839 = vsub.f32 1.0, %v3838
      %v3840 = vmul.f32 %v3837, %v3839
      %v3841 = vadd.f32 %v3837, %v3840
      %vm3842 = vweird.f32 %v3389
      %vm3843 = vweird.f32 %v3837
      %vm3844 = vmor %vm3842, %vm3843
      %v3845 = vsel %vm3844, %v3837, %v3841
      %v3846 = vand.u32 2147483647, %v3389
      %vm3847 = vcmp.eq.f32.partialorder %v3846, 8.507059e+37
      %v3848 = vand.u32 %v3389, 2147483648
      %v3849 = vor.u32 1.1754944e-38, %v3848
      %v3850 = vsel %vm3847, %v3849, %v3845
      %v3851 = vmul.f32 1.0, %v3850
      %v3852 = vrcp.pop %v3390
      %v3853 = vmul.f32 %v3390, %v3852
      %v3854 = vsub.f32 1.0, %v3853
      %v3855 = vmul.f32 %v3852, %v3854
      %v3856 = vadd.f32 %v3852, %v3855
      %vm3857 = vweird.f32 %v3390
      %vm3858 = vweird.f32 %v3852
      %vm3859 = vmor %vm3857, %vm3858
      %v3860 = vsel %vm3859, %v3852, %v3856
      %v3861 = vand.u32 2147483647, %v3390
      %vm3862 = vcmp.eq.f32.partialorder %v3861, 8.507059e+37
      %v3863 = vand.u32 %v3390, 2147483648
      %v3864 = vor.u32 1.1754944e-38, %v3863
      %v3865 = vsel %vm3862, %v3864, %v3860
      %v3866 = vmul.f32 1.0, %v3865
      %v3867 = vrcp.pop %v3391
      %v3868 = vmul.f32 %v3391, %v3867
      %v3869 = vsub.f32 1.0, %v3868
      %v3870 = vmul.f32 %v3867, %v3869
      %v3871 = vadd.f32 %v3867, %v3870
      %vm3872 = vweird.f32 %v3391
      %vm3873 = vweird.f32 %v3867
      %vm3874 = vmor %vm3872, %vm3873
      %v3875 = vsel %vm3874, %v3867, %v3871
      %v3876 = vand.u32 2147483647, %v3391
      %vm3877 = vcmp.eq.f32.partialorder %v3876, 8.507059e+37
      %v3878 = vand.u32 %v3391, 2147483648
      %v3879 = vor.u32 1.1754944e-38, %v3878
      %v3880 = vsel %vm3877, %v3879, %v3875
      %v3881 = vmul.f32 1.0, %v3880
      %v3882 = vrcp.pop %v3392
      %v3883 = vmul.f32 %v3392, %v3882
      %v3884 = vsub.f32 1.0, %v3883
      %v3885 = vmul.f32 %v3882, %v3884
      %v3886 = vadd.f32 %v3882, %v3885
      %vm3887 = vweird.f32 %v3392
      %vm3888 = vweird.f32 %v3882
      %vm3889 = vmor %vm3887, %vm3888
      %v3890 = vsel %vm3889, %v3882, %v3886
      %v3891 = vand.u32 2147483647, %v3392
      %vm3892 = vcmp.eq.f32.partialorder %v3891, 8.507059e+37
      %v3893 = vand.u32 %v3392, 2147483648
      %v3894 = vor.u32 1.1754944e-38, %v3893
      %v3895 = vsel %vm3892, %v3894, %v3890
      %v3896 = vmul.f32 1.0, %v3895
      %v3897 = vrcp.pop %v3393
      %v3898 = vmul.f32 %v3393, %v3897
      %v3899 = vsub.f32 1.0, %v3898
      %v3900 = vmul.f32 %v3897, %v3899
      %v3901 = vadd.f32 %v3897, %v3900
      %vm3902 = vweird.f32 %v3393
      %vm3903 = vweird.f32 %v3897
      %vm3904 = vmor %vm3902, %vm3903
      %v3905 = vsel %vm3904, %v3897, %v3901
      %v3906 = vand.u32 2147483647, %v3393
      %vm3907 = vcmp.eq.f32.partialorder %v3906, 8.507059e+37
      %v3908 = vand.u32 %v3393, 2147483648
      %v3909 = vor.u32 1.1754944e-38, %v3908
      %v3910 = vsel %vm3907, %v3909, %v3905
      %v3911 = vmul.f32 1.0, %v3910
      %v3912 = vrcp.pop %v3394
      %v3913 = vmul.f32 %v3394, %v3912
      %v3914 = vsub.f32 1.0, %v3913
      %v3915 = vmul.f32 %v3912, %v3914
      %v3916 = vadd.f32 %v3912, %v3915
      %vm3917 = vweird.f32 %v3394
      %vm3918 = vweird.f32 %v3912
      %vm3919 = vmor %vm3917, %vm3918
      %v3920 = vsel %vm3919, %v3912, %v3916
      %v3921 = vand.u32 2147483647, %v3394
      %vm3922 = vcmp.eq.f32.partialorder %v3921, 8.507059e+37
      %v3923 = vand.u32 %v3394, 2147483648
      %v3924 = vor.u32 1.1754944e-38, %v3923
      %v3925 = vsel %vm3922, %v3924, %v3920
      %v3926 = vmul.f32 1.0, %v3925
      %v3927 = vrcp.pop %v3395
      %v3928 = vmul.f32 %v3395, %v3927
      %v3929 = vsub.f32 1.0, %v3928
      %v3930 = vmul.f32 %v3927, %v3929
      %v3931 = vadd.f32 %v3927, %v3930
      %vm3932 = vweird.f32 %v3395
      %vm3933 = vweird.f32 %v3927
      %vm3934 = vmor %vm3932, %vm3933
      %v3935 = vsel %vm3934, %v3927, %v3931
      %v3936 = vand.u32 2147483647, %v3395
      %vm3937 = vcmp.eq.f32.partialorder %v3936, 8.507059e+37
      %v3938 = vand.u32 %v3395, 2147483648
      %v3939 = vor.u32 1.1754944e-38, %v3938
      %v3940 = vsel %vm3937, %v3939, %v3935
      %v3941 = vmul.f32 1.0, %v3940
      %v3942 = vrcp.pop %v3396
      %v3943 = vmul.f32 %v3396, %v3942
      %v3944 = vsub.f32 1.0, %v3943
      %v3945 = vmul.f32 %v3942, %v3944
      %v3946 = vadd.f32 %v3942, %v3945
      %vm3947 = vweird.f32 %v3396
      %vm3948 = vweird.f32 %v3942
      %vm3949 = vmor %vm3947, %vm3948
      %v3950 = vsel %vm3949, %v3942, %v3946
      %v3951 = vand.u32 2147483647, %v3396
      %vm3952 = vcmp.eq.f32.partialorder %v3951, 8.507059e+37
      %v3953 = vand.u32 %v3396, 2147483648
      %v3954 = vor.u32 1.1754944e-38, %v3953
      %v3955 = vsel %vm3952, %v3954, %v3950
      %v3956 = vmul.f32 1.0, %v3955
      %v3957 = vrcp.pop %v3397
      %v3958 = vmul.f32 %v3397, %v3957
      %v3959 = vsub.f32 1.0, %v3958
      %v3960 = vmul.f32 %v3957, %v3959
      %v3961 = vadd.f32 %v3957, %v3960
      %vm3962 = vweird.f32 %v3397
      %vm3963 = vweird.f32 %v3957
      %vm3964 = vmor %vm3962, %vm3963
      %v3965 = vsel %vm3964, %v3957, %v3961
      %v3966 = vand.u32 2147483647, %v3397
      %vm3967 = vcmp.eq.f32.partialorder %v3966, 8.507059e+37
      %v3968 = vand.u32 %v3397, 2147483648
      %v3969 = vor.u32 1.1754944e-38, %v3968
      %v3970 = vsel %vm3967, %v3969, %v3965
      %v3971 = vmul.f32 1.0, %v3970
      %v3972 = vrcp.pop %v3398
      %v3973 = vmul.f32 %v3398, %v3972
      %v3974 = vsub.f32 1.0, %v3973
      %v3975 = vmul.f32 %v3972, %v3974
      %v3976 = vadd.f32 %v3972, %v3975
      %vm3977 = vweird.f32 %v3398
      %vm3978 = vweird.f32 %v3972
      %vm3979 = vmor %vm3977, %vm3978
      %v3980 = vsel %vm3979, %v3972, %v3976
      %v3981 = vand.u32 2147483647, %v3398
      %vm3982 = vcmp.eq.f32.partialorder %v3981, 8.507059e+37
      %v3983 = vand.u32 %v3398, 2147483648
      %v3984 = vor.u32 1.1754944e-38, %v3983
      %v3985 = vsel %vm3982, %v3984, %v3980
      %v3986 = vmul.f32 1.0, %v3985
      %v3987 = vrcp.pop %v3399
      %v3988 = vmul.f32 %v3399, %v3987
      %v3989 = vsub.f32 1.0, %v3988
      %v3990 = vmul.f32 %v3987, %v3989
      %v3991 = vadd.f32 %v3987, %v3990
      %vm3992 = vweird.f32 %v3399
      %vm3993 = vweird.f32 %v3987
      %vm3994 = vmor %vm3992, %vm3993
      %v3995 = vsel %vm3994, %v3987, %v3991
      %v3996 = vand.u32 2147483647, %v3399
      %vm3997 = vcmp.eq.f32.partialorder %v3996, 8.507059e+37
      %v3998 = vand.u32 %v3399, 2147483648
      %v3999 = vor.u32 1.1754944e-38, %v3998
      %v4000 = vsel %vm3997, %v3999, %v3995
      %v4001 = vmul.f32 1.0, %v4000
      %v4002 = vrcp.pop %v3400
      %v4003 = vmul.f32 %v3400, %v4002
      %v4004 = vsub.f32 1.0, %v4003
      %v4005 = vmul.f32 %v4002, %v4004
      %v4006 = vadd.f32 %v4002, %v4005
      %vm4007 = vweird.f32 %v3400
      %vm4008 = vweird.f32 %v4002
      %vm4009 = vmor %vm4007, %vm4008
      %v4010 = vsel %vm4009, %v4002, %v4006
      %v4011 = vand.u32 2147483647, %v3400
      %vm4012 = vcmp.eq.f32.partialorder %v4011, 8.507059e+37
      %v4013 = vand.u32 %v3400, 2147483648
      %v4014 = vor.u32 1.1754944e-38, %v4013
      %v4015 = vsel %vm4012, %v4014, %v4010
      %v4016 = vmul.f32 1.0, %v4015
      %v4017 = vrcp.pop %v3401
      %v4018 = vmul.f32 %v3401, %v4017
      %v4019 = vsub.f32 1.0, %v4018
      %v4020 = vmul.f32 %v4017, %v4019
      %v4021 = vadd.f32 %v4017, %v4020
      %vm4022 = vweird.f32 %v3401
      %vm4023 = vweird.f32 %v4017
      %vm4024 = vmor %vm4022, %vm4023
      %v4025 = vsel %vm4024, %v4017, %v4021
      %v4026 = vand.u32 2147483647, %v3401
      %vm4027 = vcmp.eq.f32.partialorder %v4026, 8.507059e+37
      %v4028 = vand.u32 %v3401, 2147483648
      %v4029 = vor.u32 1.1754944e-38, %v4028
      %v4030 = vsel %vm4027, %v4029, %v4025
      %v4031 = vmul.f32 1.0, %v4030
      %v4032 = vrcp.pop %v3402
      %v4033 = vmul.f32 %v3402, %v4032
      %v4034 = vsub.f32 1.0, %v4033
      %v4035 = vmul.f32 %v4032, %v4034
      %v4036 = vadd.f32 %v4032, %v4035
      %vm4037 = vweird.f32 %v3402
      %vm4038 = vweird.f32 %v4032
      %vm4039 = vmor %vm4037, %vm4038
      %v4040 = vsel %vm4039, %v4032, %v4036
      %v4041 = vand.u32 2147483647, %v3402
      %vm4042 = vcmp.eq.f32.partialorder %v4041, 8.507059e+37
      %v4043 = vand.u32 %v3402, 2147483648
      %v4044 = vor.u32 1.1754944e-38, %v4043
      %v4045 = vsel %vm4042, %v4044, %v4040
      %v4046 = vmul.f32 1.0, %v4045
      %v4047 = vrcp.pop %v3403
      %v4048 = vmul.f32 %v3403, %v4047
      %v4049 = vsub.f32 1.0, %v4048
      %v4050 = vmul.f32 %v4047, %v4049
      %v4051 = vadd.f32 %v4047, %v4050
      %vm4052 = vweird.f32 %v3403
      %vm4053 = vweird.f32 %v4047
      %vm4054 = vmor %vm4052, %vm4053
      %v4055 = vsel %vm4054, %v4047, %v4051
      %v4056 = vand.u32 2147483647, %v3403
      %vm4057 = vcmp.eq.f32.partialorder %v4056, 8.507059e+37
      %v4058 = vand.u32 %v3403, 2147483648
      %v4059 = vor.u32 1.1754944e-38, %v4058
      %v4060 = vsel %vm4057, %v4059, %v4055
      %v4061 = vmul.f32 1.0, %v4060
      %v4062 = vrcp.pop %v3404
      %v4063 = vmul.f32 %v3404, %v4062
      %v4064 = vsub.f32 1.0, %v4063
      %v4065 = vmul.f32 %v4062, %v4064
      %v4066 = vadd.f32 %v4062, %v4065
      %vm4067 = vweird.f32 %v3404
      %vm4068 = vweird.f32 %v4062
      %vm4069 = vmor %vm4067, %vm4068
      %v4070 = vsel %vm4069, %v4062, %v4066
      %v4071 = vand.u32 2147483647, %v3404
      %vm4072 = vcmp.eq.f32.partialorder %v4071, 8.507059e+37
      %v4073 = vand.u32 %v3404, 2147483648
      %v4074 = vor.u32 1.1754944e-38, %v4073
      %v4075 = vsel %vm4072, %v4074, %v4070
      %v4076 = vmul.f32 1.0, %v4075
      %v4077 = vrcp.pop %v3405
      %v4078 = vmul.f32 %v3405, %v4077
      %v4079 = vsub.f32 1.0, %v4078
      %v4080 = vmul.f32 %v4077, %v4079
      %v4081 = vadd.f32 %v4077, %v4080
      %vm4082 = vweird.f32 %v3405
      %vm4083 = vweird.f32 %v4077
      %vm4084 = vmor %vm4082, %vm4083
      %v4085 = vsel %vm4084, %v4077, %v4081
      %v4086 = vand.u32 2147483647, %v3405
      %vm4087 = vcmp.eq.f32.partialorder %v4086, 8.507059e+37
      %v4088 = vand.u32 %v3405, 2147483648
      %v4089 = vor.u32 1.1754944e-38, %v4088
      %v4090 = vsel %vm4087, %v4089, %v4085
      %v4091 = vmul.f32 1.0, %v4090
      %v4092 = vrcp.pop %v3406
      %v4093 = vmul.f32 %v3406, %v4092
      %v4094 = vsub.f32 1.0, %v4093
      %v4095 = vmul.f32 %v4092, %v4094
      %v4096 = vadd.f32 %v4092, %v4095
      %vm4097 = vweird.f32 %v3406
      %vm4098 = vweird.f32 %v4092
      %vm4099 = vmor %vm4097, %vm4098
      %v4100 = vsel %vm4099, %v4092, %v4096
      %v4101 = vand.u32 2147483647, %v3406
      %vm4102 = vcmp.eq.f32.partialorder %v4101, 8.507059e+37
      %v4103 = vand.u32 %v3406, 2147483648
      %v4104 = vor.u32 1.1754944e-38, %v4103
      %v4105 = vsel %vm4102, %v4104, %v4100
      %v4106 = vmul.f32 1.0, %v4105
      %v4107 = vrcp.pop %v3407
      %v4108 = vmul.f32 %v3407, %v4107
      %v4109 = vsub.f32 1.0, %v4108
      %v4110 = vmul.f32 %v4107, %v4109
      %v4111 = vadd.f32 %v4107, %v4110
      %vm4112 = vweird.f32 %v3407
      %vm4113 = vweird.f32 %v4107
      %vm4114 = vmor %vm4112, %vm4113
      %v4115 = vsel %vm4114, %v4107, %v4111
      %v4116 = vand.u32 2147483647, %v3407
      %vm4117 = vcmp.eq.f32.partialorder %v4116, 8.507059e+37
      %v4118 = vand.u32 %v3407, 2147483648
      %v4119 = vor.u32 1.1754944e-38, %v4118
      %v4120 = vsel %vm4117, %v4119, %v4115
      %v4121 = vmul.f32 1.0, %v4120
      %v4122 = vrcp.pop %v3408
      %v4123 = vmul.f32 %v3408, %v4122
      %v4124 = vsub.f32 1.0, %v4123
      %v4125 = vmul.f32 %v4122, %v4124
      %v4126 = vadd.f32 %v4122, %v4125
      %vm4127 = vweird.f32 %v3408
      %vm4128 = vweird.f32 %v4122
      %vm4129 = vmor %vm4127, %vm4128
      %v4130 = vsel %vm4129, %v4122, %v4126
      %v4131 = vand.u32 2147483647, %v3408
      %vm4132 = vcmp.eq.f32.partialorder %v4131, 8.507059e+37
      %v4133 = vand.u32 %v3408, 2147483648
      %v4134 = vor.u32 1.1754944e-38, %v4133
      %v4135 = vsel %vm4132, %v4134, %v4130
      %v4136 = vmul.f32 1.0, %v4135
      %v4137 = vrcp.pop %v3409
      %v4138 = vmul.f32 %v3409, %v4137
      %v4139 = vsub.f32 1.0, %v4138
      %v4140 = vmul.f32 %v4137, %v4139
      %v4141 = vadd.f32 %v4137, %v4140
      %vm4142 = vweird.f32 %v3409
      %vm4143 = vweird.f32 %v4137
      %vm4144 = vmor %vm4142, %vm4143
      %v4145 = vsel %vm4144, %v4137, %v4141
      %v4146 = vand.u32 2147483647, %v3409
      %vm4147 = vcmp.eq.f32.partialorder %v4146, 8.507059e+37
      %v4148 = vand.u32 %v3409, 2147483648
      %v4149 = vor.u32 1.1754944e-38, %v4148
      %v4150 = vsel %vm4147, %v4149, %v4145
      %v4151 = vmul.f32 1.0, %v4150
      %v4152 = vrcp.pop %v3410
      %v4153 = vmul.f32 %v3410, %v4152
      %v4154 = vsub.f32 1.0, %v4153
      %v4155 = vmul.f32 %v4152, %v4154
      %v4156 = vadd.f32 %v4152, %v4155
      %vm4157 = vweird.f32 %v3410
      %vm4158 = vweird.f32 %v4152
      %vm4159 = vmor %vm4157, %vm4158
      %v4160 = vsel %vm4159, %v4152, %v4156
      %v4161 = vand.u32 2147483647, %v3410
      %vm4162 = vcmp.eq.f32.partialorder %v4161, 8.507059e+37
      %v4163 = vand.u32 %v3410, 2147483648
      %v4164 = vor.u32 1.1754944e-38, %v4163
      %v4165 = vsel %vm4162, %v4164, %v4160
      %v4166 = vmul.f32 1.0, %v4165
      %v4167 = vrcp.pop %v3411
      %v4168 = vmul.f32 %v3411, %v4167
      %v4169 = vsub.f32 1.0, %v4168
      %v4170 = vmul.f32 %v4167, %v4169
      %v4171 = vadd.f32 %v4167, %v4170
      %vm4172 = vweird.f32 %v3411
      %vm4173 = vweird.f32 %v4167
      %vm4174 = vmor %vm4172, %vm4173
      %v4175 = vsel %vm4174, %v4167, %v4171
      %v4176 = vand.u32 2147483647, %v3411
      %vm4177 = vcmp.eq.f32.partialorder %v4176, 8.507059e+37
      %v4178 = vand.u32 %v3411, 2147483648
      %v4179 = vor.u32 1.1754944e-38, %v4178
      %v4180 = vsel %vm4177, %v4179, %v4175
      %v4181 = vmul.f32 1.0, %v4180
      %v4182 = vrcp.pop %v3412
      %v4183 = vmul.f32 %v3412, %v4182
      %v4184 = vsub.f32 1.0, %v4183
      %v4185 = vmul.f32 %v4182, %v4184
      %v4186 = vadd.f32 %v4182, %v4185
      %vm4187 = vweird.f32 %v3412
      %vm4188 = vweird.f32 %v4182
      %vm4189 = vmor %vm4187, %vm4188
      %v4190 = vsel %vm4189, %v4182, %v4186
      %v4191 = vand.u32 2147483647, %v3412
      %vm4192 = vcmp.eq.f32.partialorder %v4191, 8.507059e+37
      %v4193 = vand.u32 %v3412, 2147483648
      %v4194 = vor.u32 1.1754944e-38, %v4193
      %v4195 = vsel %vm4192, %v4194, %v4190
      %v4196 = vmul.f32 1.0, %v4195
      %v4197 = vrcp.pop %v3413
      %v4198 = vmul.f32 %v3413, %v4197
      %v4199 = vsub.f32 1.0, %v4198
      %v4200 = vmul.f32 %v4197, %v4199
      %v4201 = vadd.f32 %v4197, %v4200
      %vm4202 = vweird.f32 %v3413
      %vm4203 = vweird.f32 %v4197
      %vm4204 = vmor %vm4202, %vm4203
      %v4205 = vsel %vm4204, %v4197, %v4201
      %v4206 = vand.u32 2147483647, %v3413
      %vm4207 = vcmp.eq.f32.partialorder %v4206, 8.507059e+37
      %v4208 = vand.u32 %v3413, 2147483648
      %v4209 = vor.u32 1.1754944e-38, %v4208
      %v4210 = vsel %vm4207, %v4209, %v4205
      %v4211 = vmul.f32 1.0, %v4210
      %v4212 = vrcp.pop %v3414
      %v4213 = vmul.f32 %v3414, %v4212
      %v4214 = vsub.f32 1.0, %v4213
      %v4215 = vmul.f32 %v4212, %v4214
      %v4216 = vadd.f32 %v4212, %v4215
      %vm4217 = vweird.f32 %v3414
      %vm4218 = vweird.f32 %v4212
      %vm4219 = vmor %vm4217, %vm4218
      %v4220 = vsel %vm4219, %v4212, %v4216
      %v4221 = vand.u32 2147483647, %v3414
      %vm4222 = vcmp.eq.f32.partialorder %v4221, 8.507059e+37
      %v4223 = vand.u32 %v3414, 2147483648
      %v4224 = vor.u32 1.1754944e-38, %v4223
      %v4225 = vsel %vm4222, %v4224, %v4220
      %v4226 = vmul.f32 1.0, %v4225
      %v4227 = vrcp.pop %v3415
      %v4228 = vmul.f32 %v3415, %v4227
      %v4229 = vsub.f32 1.0, %v4228
      %v4230 = vmul.f32 %v4227, %v4229
      %v4231 = vadd.f32 %v4227, %v4230
      %vm4232 = vweird.f32 %v3415
      %vm4233 = vweird.f32 %v4227
      %vm4234 = vmor %vm4232, %vm4233
      %v4235 = vsel %vm4234, %v4227, %v4231
      %v4236 = vand.u32 2147483647, %v3415
      %vm4237 = vcmp.eq.f32.partialorder %v4236, 8.507059e+37
      %v4238 = vand.u32 %v3415, 2147483648
      %v4239 = vor.u32 1.1754944e-38, %v4238
      %v4240 = vsel %vm4237, %v4239, %v4235
      %v4241 = vmul.f32 1.0, %v4240
      %v4242 = vrcp.pop %v3416
      %v4243 = vmul.f32 %v3416, %v4242
      %v4244 = vsub.f32 1.0, %v4243
      %v4245 = vmul.f32 %v4242, %v4244
      %v4246 = vadd.f32 %v4242, %v4245
      %vm4247 = vweird.f32 %v3416
      %vm4248 = vweird.f32 %v4242
      %vm4249 = vmor %vm4247, %vm4248
      %v4250 = vsel %vm4249, %v4242, %v4246
      %v4251 = vand.u32 2147483647, %v3416
      %vm4252 = vcmp.eq.f32.partialorder %v4251, 8.507059e+37
      %v4253 = vand.u32 %v3416, 2147483648
      %v4254 = vor.u32 1.1754944e-38, %v4253
      %v4255 = vsel %vm4252, %v4254, %v4250
      %v4256 = vmul.f32 1.0, %v4255
      %v4257 = vrcp.pop %v3417
      %v4258 = vmul.f32 %v3417, %v4257
      %v4259 = vsub.f32 1.0, %v4258
      %v4260 = vmul.f32 %v4257, %v4259
      %v4261 = vadd.f32 %v4257, %v4260
      %vm4262 = vweird.f32 %v3417
      %vm4263 = vweird.f32 %v4257
      %vm4264 = vmor %vm4262, %vm4263
      %v4265 = vsel %vm4264, %v4257, %v4261
      %v4266 = vand.u32 2147483647, %v3417
      %vm4267 = vcmp.eq.f32.partialorder %v4266, 8.507059e+37
      %v4268 = vand.u32 %v3417, 2147483648
      %v4269 = vor.u32 1.1754944e-38, %v4268
      %v4270 = vsel %vm4267, %v4269, %v4265
      %v4271 = vmul.f32 1.0, %v4270
      %v4272 = vrcp.pop %v3418
      %v4273 = vmul.f32 %v3418, %v4272
      %v4274 = vsub.f32 1.0, %v4273
      %v4275 = vmul.f32 %v4272, %v4274
      %v4276 = vadd.f32 %v4272, %v4275
      %vm4277 = vweird.f32 %v3418
      %vm4278 = vweird.f32 %v4272
      %vm4279 = vmor %vm4277, %vm4278
      %v4280 = vsel %vm4279, %v4272, %v4276
      %v4281 = vand.u32 2147483647, %v3418
      %vm4282 = vcmp.eq.f32.partialorder %v4281, 8.507059e+37
      %v4283 = vand.u32 %v3418, 2147483648
      %v4284 = vor.u32 1.1754944e-38, %v4283
      %v4285 = vsel %vm4282, %v4284, %v4280
      %v4286 = vmul.f32 1.0, %v4285
      %v4287 = vrcp.pop %v3419
      %v4288 = vmul.f32 %v3419, %v4287
      %v4289 = vsub.f32 1.0, %v4288
      %v4290 = vmul.f32 %v4287, %v4289
      %v4291 = vadd.f32 %v4287, %v4290
      %vm4292 = vweird.f32 %v3419
      %vm4293 = vweird.f32 %v4287
      %vm4294 = vmor %vm4292, %vm4293
      %v4295 = vsel %vm4294, %v4287, %v4291
      %v4296 = vand.u32 2147483647, %v3419
      %vm4297 = vcmp.eq.f32.partialorder %v4296, 8.507059e+37
      %v4298 = vand.u32 %v3419, 2147483648
      %v4299 = vor.u32 1.1754944e-38, %v4298
      %v4300 = vsel %vm4297, %v4299, %v4295
      %v4301 = vmul.f32 1.0, %v4300
      %v4302 = vrcp.pop %v3420
      %v4303 = vmul.f32 %v3420, %v4302
      %v4304 = vsub.f32 1.0, %v4303
      %v4305 = vmul.f32 %v4302, %v4304
      %v4306 = vadd.f32 %v4302, %v4305
      %vm4307 = vweird.f32 %v3420
      %vm4308 = vweird.f32 %v4302
      %vm4309 = vmor %vm4307, %vm4308
      %v4310 = vsel %vm4309, %v4302, %v4306
      %v4311 = vand.u32 2147483647, %v3420
      %vm4312 = vcmp.eq.f32.partialorder %v4311, 8.507059e+37
      %v4313 = vand.u32 %v3420, 2147483648
      %v4314 = vor.u32 1.1754944e-38, %v4313
      %v4315 = vsel %vm4312, %v4314, %v4310
      %v4316 = vmul.f32 1.0, %v4315
      %v4317 = vrcp.pop %v3421
      %v4318 = vmul.f32 %v3421, %v4317
      %v4319 = vsub.f32 1.0, %v4318
      %v4320 = vmul.f32 %v4317, %v4319
      %v4321 = vadd.f32 %v4317, %v4320
      %vm4322 = vweird.f32 %v3421
      %vm4323 = vweird.f32 %v4317
      %vm4324 = vmor %vm4322, %vm4323
      %v4325 = vsel %vm4324, %v4317, %v4321
      %v4326 = vand.u32 2147483647, %v3421
      %vm4327 = vcmp.eq.f32.partialorder %v4326, 8.507059e+37
      %v4328 = vand.u32 %v3421, 2147483648
      %v4329 = vor.u32 1.1754944e-38, %v4328
      %v4330 = vsel %vm4327, %v4329, %v4325
      %v4331 = vmul.f32 1.0, %v4330
      %v4332 = vrcp.pop %v3422
      %v4333 = vmul.f32 %v3422, %v4332
      %v4334 = vsub.f32 1.0, %v4333
      %v4335 = vmul.f32 %v4332, %v4334
      %v4336 = vadd.f32 %v4332, %v4335
      %vm4337 = vweird.f32 %v3422
      %vm4338 = vweird.f32 %v4332
      %vm4339 = vmor %vm4337, %vm4338
      %v4340 = vsel %vm4339, %v4332, %v4336
      %v4341 = vand.u32 2147483647, %v3422
      %vm4342 = vcmp.eq.f32.partialorder %v4341, 8.507059e+37
      %v4343 = vand.u32 %v3422, 2147483648
      %v4344 = vor.u32 1.1754944e-38, %v4343
      %v4345 = vsel %vm4342, %v4344, %v4340
      %v4346 = vmul.f32 1.0, %v4345
      %v4347 = vrcp.pop %v3423
      %v4348 = vmul.f32 %v3423, %v4347
      %v4349 = vsub.f32 1.0, %v4348
      %v4350 = vmul.f32 %v4347, %v4349
      %v4351 = vadd.f32 %v4347, %v4350
      %vm4352 = vweird.f32 %v3423
      %vm4353 = vweird.f32 %v4347
      %vm4354 = vmor %vm4352, %vm4353
      %v4355 = vsel %vm4354, %v4347, %v4351
      %v4356 = vand.u32 2147483647, %v3423
      %vm4357 = vcmp.eq.f32.partialorder %v4356, 8.507059e+37
      %v4358 = vand.u32 %v3423, 2147483648
      %v4359 = vor.u32 1.1754944e-38, %v4358
      %v4360 = vsel %vm4357, %v4359, %v4355
      %v4361 = vmul.f32 1.0, %v4360
      %v4362 = vrcp.pop %v3424
      %v4363 = vmul.f32 %v3424, %v4362
      %v4364 = vsub.f32 1.0, %v4363
      %v4365 = vmul.f32 %v4362, %v4364
      %v4366 = vadd.f32 %v4362, %v4365
      %vm4367 = vweird.f32 %v3424
      %vm4368 = vweird.f32 %v4362
      %vm4369 = vmor %vm4367, %vm4368
      %v4370 = vsel %vm4369, %v4362, %v4366
      %v4371 = vand.u32 2147483647, %v3424
      %vm4372 = vcmp.eq.f32.partialorder %v4371, 8.507059e+37
      %v4373 = vand.u32 %v3424, 2147483648
      %v4374 = vor.u32 1.1754944e-38, %v4373
      %v4375 = vsel %vm4372, %v4374, %v4370
      %v4376 = vmul.f32 1.0, %v4375
      %v4377 = vrcp.pop %v3425
      %v4378 = vmul.f32 %v3425, %v4377
      %v4379 = vsub.f32 1.0, %v4378
      %v4380 = vmul.f32 %v4377, %v4379
      %v4381 = vadd.f32 %v4377, %v4380
      %vm4382 = vweird.f32 %v3425
      %vm4383 = vweird.f32 %v4377
      %vm4384 = vmor %vm4382, %vm4383
      %v4385 = vsel %vm4384, %v4377, %v4381
      %v4386 = vand.u32 2147483647, %v3425
      %vm4387 = vcmp.eq.f32.partialorder %v4386, 8.507059e+37
      %v4388 = vand.u32 %v3425, 2147483648
      %v4389 = vor.u32 1.1754944e-38, %v4388
      %v4390 = vsel %vm4387, %v4389, %v4385
      %v4391 = vmul.f32 1.0, %v4390
      %v4392 = vrcp.pop %v3426
      %v4393 = vmul.f32 %v3426, %v4392
      %v4394 = vsub.f32 1.0, %v4393
      %v4395 = vmul.f32 %v4392, %v4394
      %v4396 = vadd.f32 %v4392, %v4395
      %vm4397 = vweird.f32 %v3426
      %vm4398 = vweird.f32 %v4392
      %vm4399 = vmor %vm4397, %vm4398
      %v4400 = vsel %vm4399, %v4392, %v4396
      %v4401 = vand.u32 2147483647, %v3426
      %vm4402 = vcmp.eq.f32.partialorder %v4401, 8.507059e+37
      %v4403 = vand.u32 %v3426, 2147483648
      %v4404 = vor.u32 1.1754944e-38, %v4403
      %v4405 = vsel %vm4402, %v4404, %v4400
      %v4406 = vmul.f32 1.0, %v4405
      %v4407 = vrcp.pop %v3427
      %v4408 = vmul.f32 %v3427, %v4407
      %v4409 = vsub.f32 1.0, %v4408
      %v4410 = vmul.f32 %v4407, %v4409
      %v4411 = vadd.f32 %v4407, %v4410
      %vm4412 = vweird.f32 %v3427
      %vm4413 = vweird.f32 %v4407
      %vm4414 = vmor %vm4412, %vm4413
      %v4415 = vsel %vm4414, %v4407, %v4411
      %v4416 = vand.u32 2147483647, %v3427
      %vm4417 = vcmp.eq.f32.partialorder %v4416, 8.507059e+37
      %v4418 = vand.u32 %v3427, 2147483648
      %v4419 = vor.u32 1.1754944e-38, %v4418
      %v4420 = vsel %vm4417, %v4419, %v4415
      %v4421 = vmul.f32 1.0, %v4420
      %v4422 = vrcp.pop %v3428
      %v4423 = vmul.f32 %v3428, %v4422
      %v4424 = vsub.f32 1.0, %v4423
      %v4425 = vmul.f32 %v4422, %v4424
      %v4426 = vadd.f32 %v4422, %v4425
      %vm4427 = vweird.f32 %v3428
      %vm4428 = vweird.f32 %v4422
      %vm4429 = vmor %vm4427, %vm4428
      %v4430 = vsel %vm4429, %v4422, %v4426
      %v4431 = vand.u32 2147483647, %v3428
      %vm4432 = vcmp.eq.f32.partialorder %v4431, 8.507059e+37
      %v4433 = vand.u32 %v3428, 2147483648
      %v4434 = vor.u32 1.1754944e-38, %v4433
      %v4435 = vsel %vm4432, %v4434, %v4430
      %v4436 = vmul.f32 1.0, %v4435
      %v4437 = vrcp.pop %v3429
      %v4438 = vmul.f32 %v3429, %v4437
      %v4439 = vsub.f32 1.0, %v4438
      %v4440 = vmul.f32 %v4437, %v4439
      %v4441 = vadd.f32 %v4437, %v4440
      %vm4442 = vweird.f32 %v3429
      %vm4443 = vweird.f32 %v4437
      %vm4444 = vmor %vm4442, %vm4443
      %v4445 = vsel %vm4444, %v4437, %v4441
      %v4446 = vand.u32 2147483647, %v3429
      %vm4447 = vcmp.eq.f32.partialorder %v4446, 8.507059e+37
      %v4448 = vand.u32 %v3429, 2147483648
      %v4449 = vor.u32 1.1754944e-38, %v4448
      %v4450 = vsel %vm4447, %v4449, %v4445
      %v4451 = vmul.f32 1.0, %v4450
      %v4452 = vrcp.pop %v3430
      %v4453 = vmul.f32 %v3430, %v4452
      %v4454 = vsub.f32 1.0, %v4453
      %v4455 = vmul.f32 %v4452, %v4454
      %v4456 = vadd.f32 %v4452, %v4455
      %vm4457 = vweird.f32 %v3430
      %vm4458 = vweird.f32 %v4452
      %vm4459 = vmor %vm4457, %vm4458
      %v4460 = vsel %vm4459, %v4452, %v4456
      %v4461 = vand.u32 2147483647, %v3430
      %vm4462 = vcmp.eq.f32.partialorder %v4461, 8.507059e+37
      %v4463 = vand.u32 %v3430, 2147483648
      %v4464 = vor.u32 1.1754944e-38, %v4463
      %v4465 = vsel %vm4462, %v4464, %v4460
      %v4466 = vmul.f32 1.0, %v4465
      %v4467 = vrcp.pop %v3431
      %v4468 = vmul.f32 %v3431, %v4467
      %v4469 = vsub.f32 1.0, %v4468
      %v4470 = vmul.f32 %v4467, %v4469
      %v4471 = vadd.f32 %v4467, %v4470
      %vm4472 = vweird.f32 %v3431
      %vm4473 = vweird.f32 %v4467
      %vm4474 = vmor %vm4472, %vm4473
      %v4475 = vsel %vm4474, %v4467, %v4471
      %v4476 = vand.u32 2147483647, %v3431
      %vm4477 = vcmp.eq.f32.partialorder %v4476, 8.507059e+37
      %v4478 = vand.u32 %v3431, 2147483648
      %v4479 = vor.u32 1.1754944e-38, %v4478
      %v4480 = vsel %vm4477, %v4479, %v4475
      %v4481 = vmul.f32 1.0, %v4480
      %v4482 = vrcp.pop %v3432
      %v4483 = vmul.f32 %v3432, %v4482
      %v4484 = vsub.f32 1.0, %v4483
      %v4485 = vmul.f32 %v4482, %v4484
      %v4486 = vadd.f32 %v4482, %v4485
      %vm4487 = vweird.f32 %v3432
      %vm4488 = vweird.f32 %v4482
      %vm4489 = vmor %vm4487, %vm4488
      %v4490 = vsel %vm4489, %v4482, %v4486
      %v4491 = vand.u32 2147483647, %v3432
      %vm4492 = vcmp.eq.f32.partialorder %v4491, 8.507059e+37
      %v4493 = vand.u32 %v3432, 2147483648
      %v4494 = vor.u32 1.1754944e-38, %v4493
      %v4495 = vsel %vm4492, %v4494, %v4490
      %v4496 = vmul.f32 1.0, %v4495
      %v4497 = vrcp.pop %v3433
      %v4498 = vmul.f32 %v3433, %v4497
      %v4499 = vsub.f32 1.0, %v4498
      %v4500 = vmul.f32 %v4497, %v4499
      %v4501 = vadd.f32 %v4497, %v4500
      %vm4502 = vweird.f32 %v3433
      %vm4503 = vweird.f32 %v4497
      %vm4504 = vmor %vm4502, %vm4503
      %v4505 = vsel %vm4504, %v4497, %v4501
      %v4506 = vand.u32 2147483647, %v3433
      %vm4507 = vcmp.eq.f32.partialorder %v4506, 8.507059e+37
      %v4508 = vand.u32 %v3433, 2147483648
      %v4509 = vor.u32 1.1754944e-38, %v4508
      %v4510 = vsel %vm4507, %v4509, %v4505
      %v4511 = vmul.f32 1.0, %v4510
      %v4512 = vrcp.pop %v3434
      %v4513 = vmul.f32 %v3434, %v4512
      %v4514 = vsub.f32 1.0, %v4513
      %v4515 = vmul.f32 %v4512, %v4514
      %v4516 = vadd.f32 %v4512, %v4515
      %vm4517 = vweird.f32 %v3434
      %vm4518 = vweird.f32 %v4512
      %vm4519 = vmor %vm4517, %vm4518
      %v4520 = vsel %vm4519, %v4512, %v4516
      %v4521 = vand.u32 2147483647, %v3434
      %vm4522 = vcmp.eq.f32.partialorder %v4521, 8.507059e+37
      %v4523 = vand.u32 %v3434, 2147483648
      %v4524 = vor.u32 1.1754944e-38, %v4523
      %v4525 = vsel %vm4522, %v4524, %v4520
      %v4526 = vmul.f32 1.0, %v4525
      %v4527 = vrcp.pop %v3435
      %v4528 = vmul.f32 %v3435, %v4527
      %v4529 = vsub.f32 1.0, %v4528
      %v4530 = vmul.f32 %v4527, %v4529
      %v4531 = vadd.f32 %v4527, %v4530
      %vm4532 = vweird.f32 %v3435
      %vm4533 = vweird.f32 %v4527
      %vm4534 = vmor %vm4532, %vm4533
      %v4535 = vsel %vm4534, %v4527, %v4531
      %v4536 = vand.u32 2147483647, %v3435
      %vm4537 = vcmp.eq.f32.partialorder %v4536, 8.507059e+37
      %v4538 = vand.u32 %v3435, 2147483648
      %v4539 = vor.u32 1.1754944e-38, %v4538
      %v4540 = vsel %vm4537, %v4539, %v4535
      %v4541 = vmul.f32 1.0, %v4540
      %v4542 = vrcp.pop %v3436
      %v4543 = vmul.f32 %v3436, %v4542
      %v4544 = vsub.f32 1.0, %v4543
      %v4545 = vmul.f32 %v4542, %v4544
      %v4546 = vadd.f32 %v4542, %v4545
      %vm4547 = vweird.f32 %v3436
      %vm4548 = vweird.f32 %v4542
      %vm4549 = vmor %vm4547, %vm4548
      %v4550 = vsel %vm4549, %v4542, %v4546
      %v4551 = vand.u32 2147483647, %v3436
      %vm4552 = vcmp.eq.f32.partialorder %v4551, 8.507059e+37
      %v4553 = vand.u32 %v3436, 2147483648
      %v4554 = vor.u32 1.1754944e-38, %v4553
      %v4555 = vsel %vm4552, %v4554, %v4550
      %v4556 = vmul.f32 1.0, %v4555
      %v4557 = vrcp.pop %v3437
      %v4558 = vmul.f32 %v3437, %v4557
      %v4559 = vsub.f32 1.0, %v4558
      %v4560 = vmul.f32 %v4557, %v4559
      %v4561 = vadd.f32 %v4557, %v4560
      %vm4562 = vweird.f32 %v3437
      %vm4563 = vweird.f32 %v4557
      %vm4564 = vmor %vm4562, %vm4563
      %v4565 = vsel %vm4564, %v4557, %v4561
      %v4566 = vand.u32 2147483647, %v3437
      %vm4567 = vcmp.eq.f32.partialorder %v4566, 8.507059e+37
      %v4568 = vand.u32 %v3437, 2147483648
      %v4569 = vor.u32 1.1754944e-38, %v4568
      %v4570 = vsel %vm4567, %v4569, %v4565
      %v4571 = vmul.f32 1.0, %v4570
      %v4572 = vrcp.pop %v3438
      %v4573 = vmul.f32 %v3438, %v4572
      %v4574 = vsub.f32 1.0, %v4573
      %v4575 = vmul.f32 %v4572, %v4574
      %v4576 = vadd.f32 %v4572, %v4575
      %vm4577 = vweird.f32 %v3438
      %vm4578 = vweird.f32 %v4572
      %vm4579 = vmor %vm4577, %vm4578
      %v4580 = vsel %vm4579, %v4572, %v4576
      %v4581 = vand.u32 2147483647, %v3438
      %vm4582 = vcmp.eq.f32.partialorder %v4581, 8.507059e+37
      %v4583 = vand.u32 %v3438, 2147483648
      %v4584 = vor.u32 1.1754944e-38, %v4583
      %v4585 = vsel %vm4582, %v4584, %v4580
      %v4586 = vmul.f32 1.0, %v4585
      %v4587 = vrcp.pop %v3439
      %v4588 = vmul.f32 %v3439, %v4587
      %v4589 = vsub.f32 1.0, %v4588
      %v4590 = vmul.f32 %v4587, %v4589
      %v4591 = vadd.f32 %v4587, %v4590
      %vm4592 = vweird.f32 %v3439
      %vm4593 = vweird.f32 %v4587
      %vm4594 = vmor %vm4592, %vm4593
      %v4595 = vsel %vm4594, %v4587, %v4591
      %v4596 = vand.u32 2147483647, %v3439
      %vm4597 = vcmp.eq.f32.partialorder %v4596, 8.507059e+37
      %v4598 = vand.u32 %v3439, 2147483648
      %v4599 = vor.u32 1.1754944e-38, %v4598
      %v4600 = vsel %vm4597, %v4599, %v4595
      %v4601 = vmul.f32 1.0, %v4600
      %v4602 = vrcp.pop %v3440
      %v4603 = vmul.f32 %v3440, %v4602
      %v4604 = vsub.f32 1.0, %v4603
      %v4605 = vmul.f32 %v4602, %v4604
      %v4606 = vadd.f32 %v4602, %v4605
      %vm4607 = vweird.f32 %v3440
      %vm4608 = vweird.f32 %v4602
      %vm4609 = vmor %vm4607, %vm4608
      %v4610 = vsel %vm4609, %v4602, %v4606
      %v4611 = vand.u32 2147483647, %v3440
      %vm4612 = vcmp.eq.f32.partialorder %v4611, 8.507059e+37
      %v4613 = vand.u32 %v3440, 2147483648
      %v4614 = vor.u32 1.1754944e-38, %v4613
      %v4615 = vsel %vm4612, %v4614, %v4610
      %v4616 = vmul.f32 1.0, %v4615
      %v4617 = vrcp.pop %v3441
      %v4618 = vmul.f32 %v3441, %v4617
      %v4619 = vsub.f32 1.0, %v4618
      %v4620 = vmul.f32 %v4617, %v4619
      %v4621 = vadd.f32 %v4617, %v4620
      %vm4622 = vweird.f32 %v3441
      %vm4623 = vweird.f32 %v4617
      %vm4624 = vmor %vm4622, %vm4623
      %v4625 = vsel %vm4624, %v4617, %v4621
      %v4626 = vand.u32 2147483647, %v3441
      %vm4627 = vcmp.eq.f32.partialorder %v4626, 8.507059e+37
      %v4628 = vand.u32 %v3441, 2147483648
      %v4629 = vor.u32 1.1754944e-38, %v4628
      %v4630 = vsel %vm4627, %v4629, %v4625
      %v4631 = vmul.f32 1.0, %v4630
      %v4632 = vrcp.pop %v3442
      %v4633 = vmul.f32 %v3442, %v4632
      %v4634 = vsub.f32 1.0, %v4633
      %v4635 = vmul.f32 %v4632, %v4634
      %v4636 = vadd.f32 %v4632, %v4635
      %vm4637 = vweird.f32 %v3442
      %vm4638 = vweird.f32 %v4632
      %vm4639 = vmor %vm4637, %vm4638
      %v4640 = vsel %vm4639, %v4632, %v4636
      %v4641 = vand.u32 2147483647, %v3442
      %vm4642 = vcmp.eq.f32.partialorder %v4641, 8.507059e+37
      %v4643 = vand.u32 %v3442, 2147483648
      %v4644 = vor.u32 1.1754944e-38, %v4643
      %v4645 = vsel %vm4642, %v4644, %v4640
      %v4646 = vmul.f32 1.0, %v4645
      %v4647 = vrcp.pop %v3443
      %v4648 = vmul.f32 %v3443, %v4647
      %v4649 = vsub.f32 1.0, %v4648
      %v4650 = vmul.f32 %v4647, %v4649
      %v4651 = vadd.f32 %v4647, %v4650
      %vm4652 = vweird.f32 %v3443
      %vm4653 = vweird.f32 %v4647
      %vm4654 = vmor %vm4652, %vm4653
      %v4655 = vsel %vm4654, %v4647, %v4651
      %v4656 = vand.u32 2147483647, %v3443
      %vm4657 = vcmp.eq.f32.partialorder %v4656, 8.507059e+37
      %v4658 = vand.u32 %v3443, 2147483648
      %v4659 = vor.u32 1.1754944e-38, %v4658
      %v4660 = vsel %vm4657, %v4659, %v4655
      %v4661 = vmul.f32 1.0, %v4660
      %v4662 = vrcp.pop %v3444
      %v4663 = vmul.f32 %v3444, %v4662
      %v4664 = vsub.f32 1.0, %v4663
      %v4665 = vmul.f32 %v4662, %v4664
      %v4666 = vadd.f32 %v4662, %v4665
      %vm4667 = vweird.f32 %v3444
      %vm4668 = vweird.f32 %v4662
      %vm4669 = vmor %vm4667, %vm4668
      %v4670 = vsel %vm4669, %v4662, %v4666
      %v4671 = vand.u32 2147483647, %v3444
      %vm4672 = vcmp.eq.f32.partialorder %v4671, 8.507059e+37
      %v4673 = vand.u32 %v3444, 2147483648
      %v4674 = vor.u32 1.1754944e-38, %v4673
      %v4675 = vsel %vm4672, %v4674, %v4670
      %v4676 = vmul.f32 1.0, %v4675
      %v4677 = vrcp.pop %v3445
      %v4678 = vmul.f32 %v3445, %v4677
      %v4679 = vsub.f32 1.0, %v4678
      %v4680 = vmul.f32 %v4677, %v4679
      %v4681 = vadd.f32 %v4677, %v4680
      %vm4682 = vweird.f32 %v3445
      %vm4683 = vweird.f32 %v4677
      %vm4684 = vmor %vm4682, %vm4683
      %v4685 = vsel %vm4684, %v4677, %v4681
      %v4686 = vand.u32 2147483647, %v3445
      %vm4687 = vcmp.eq.f32.partialorder %v4686, 8.507059e+37
      %v4688 = vand.u32 %v3445, 2147483648
      %v4689 = vor.u32 1.1754944e-38, %v4688
      %v4690 = vsel %vm4687, %v4689, %v4685
      %v4691 = vmul.f32 1.0, %v4690
      %v4692 = vrcp.pop %v3446
      %v4693 = vmul.f32 %v3446, %v4692
      %v4694 = vsub.f32 1.0, %v4693
      %v4695 = vmul.f32 %v4692, %v4694
      %v4696 = vadd.f32 %v4692, %v4695
      %vm4697 = vweird.f32 %v3446
      %vm4698 = vweird.f32 %v4692
      %vm4699 = vmor %vm4697, %vm4698
      %v4700 = vsel %vm4699, %v4692, %v4696
      %v4701 = vand.u32 2147483647, %v3446
      %vm4702 = vcmp.eq.f32.partialorder %v4701, 8.507059e+37
      %v4703 = vand.u32 %v3446, 2147483648
      %v4704 = vor.u32 1.1754944e-38, %v4703
      %v4705 = vsel %vm4702, %v4704, %v4700
      %v4706 = vmul.f32 1.0, %v4705
      %v4707 = vrcp.pop %v3447
      %v4708 = vmul.f32 %v3447, %v4707
      %v4709 = vsub.f32 1.0, %v4708
      %v4710 = vmul.f32 %v4707, %v4709
      %v4711 = vadd.f32 %v4707, %v4710
      %vm4712 = vweird.f32 %v3447
      %vm4713 = vweird.f32 %v4707
      %vm4714 = vmor %vm4712, %vm4713
      %v4715 = vsel %vm4714, %v4707, %v4711
      %v4716 = vand.u32 2147483647, %v3447
      %vm4717 = vcmp.eq.f32.partialorder %v4716, 8.507059e+37
      %v4718 = vand.u32 %v3447, 2147483648
      %v4719 = vor.u32 1.1754944e-38, %v4718
      %v4720 = vsel %vm4717, %v4719, %v4715
      %v4721 = vmul.f32 1.0, %v4720
      %v4722 = vrcp.pop %v3448
      %v4723 = vmul.f32 %v3448, %v4722
      %v4724 = vsub.f32 1.0, %v4723
      %v4725 = vmul.f32 %v4722, %v4724
      %v4726 = vadd.f32 %v4722, %v4725
      %vm4727 = vweird.f32 %v3448
      %vm4728 = vweird.f32 %v4722
      %vm4729 = vmor %vm4727, %vm4728
      %v4730 = vsel %vm4729, %v4722, %v4726
      %v4731 = vand.u32 2147483647, %v3448
      %vm4732 = vcmp.eq.f32.partialorder %v4731, 8.507059e+37
      %v4733 = vand.u32 %v3448, 2147483648
      %v4734 = vor.u32 1.1754944e-38, %v4733
      %v4735 = vsel %vm4732, %v4734, %v4730
      %v4736 = vmul.f32 1.0, %v4735
      %v4737 = vrcp.pop %v3449
      %v4738 = vmul.f32 %v3449, %v4737
      %v4739 = vsub.f32 1.0, %v4738
      %v4740 = vmul.f32 %v4737, %v4739
      %v4741 = vadd.f32 %v4737, %v4740
      %vm4742 = vweird.f32 %v3449
      %vm4743 = vweird.f32 %v4737
      %vm4744 = vmor %vm4742, %vm4743
      %v4745 = vsel %vm4744, %v4737, %v4741
      %v4746 = vand.u32 2147483647, %v3449
      %vm4747 = vcmp.eq.f32.partialorder %v4746, 8.507059e+37
      %v4748 = vand.u32 %v3449, 2147483648
      %v4749 = vor.u32 1.1754944e-38, %v4748
      %v4750 = vsel %vm4747, %v4749, %v4745
      %v4751 = vmul.f32 1.0, %v4750
      %v4752 = vrcp.pop %v3450
      %v4753 = vmul.f32 %v3450, %v4752
      %v4754 = vsub.f32 1.0, %v4753
      %v4755 = vmul.f32 %v4752, %v4754
      %v4756 = vadd.f32 %v4752, %v4755
      %vm4757 = vweird.f32 %v3450
      %vm4758 = vweird.f32 %v4752
      %vm4759 = vmor %vm4757, %vm4758
      %v4760 = vsel %vm4759, %v4752, %v4756
      %v4761 = vand.u32 2147483647, %v3450
      %vm4762 = vcmp.eq.f32.partialorder %v4761, 8.507059e+37
      %v4763 = vand.u32 %v3450, 2147483648
      %v4764 = vor.u32 1.1754944e-38, %v4763
      %v4765 = vsel %vm4762, %v4764, %v4760
      %v4766 = vmul.f32 1.0, %v4765
      %v4767 = vrcp.pop %v3451
      %v4768 = vmul.f32 %v3451, %v4767
      %v4769 = vsub.f32 1.0, %v4768
      %v4770 = vmul.f32 %v4767, %v4769
      %v4771 = vadd.f32 %v4767, %v4770
      %vm4772 = vweird.f32 %v3451
      %vm4773 = vweird.f32 %v4767
      %vm4774 = vmor %vm4772, %vm4773
      %v4775 = vsel %vm4774, %v4767, %v4771
      %v4776 = vand.u32 2147483647, %v3451
      %vm4777 = vcmp.eq.f32.partialorder %v4776, 8.507059e+37
      %v4778 = vand.u32 %v3451, 2147483648
      %v4779 = vor.u32 1.1754944e-38, %v4778
      %v4780 = vsel %vm4777, %v4779, %v4775
      %v4781 = vmul.f32 1.0, %v4780
      %v4782 = vrcp.pop %v3452
      %v4783 = vmul.f32 %v3452, %v4782
      %v4784 = vsub.f32 1.0, %v4783
      %v4785 = vmul.f32 %v4782, %v4784
      %v4786 = vadd.f32 %v4782, %v4785
      %vm4787 = vweird.f32 %v3452
      %vm4788 = vweird.f32 %v4782
      %vm4789 = vmor %vm4787, %vm4788
      %v4790 = vsel %vm4789, %v4782, %v4786
      %v4791 = vand.u32 2147483647, %v3452
      %vm4792 = vcmp.eq.f32.partialorder %v4791, 8.507059e+37
      %v4793 = vand.u32 %v3452, 2147483648
      %v4794 = vor.u32 1.1754944e-38, %v4793
      %v4795 = vsel %vm4792, %v4794, %v4790
      %v4796 = vmul.f32 1.0, %v4795
      %v4797 = vrcp.pop %v3453
      %v4798 = vmul.f32 %v3453, %v4797
      %v4799 = vsub.f32 1.0, %v4798
      %v4800 = vmul.f32 %v4797, %v4799
      %v4801 = vadd.f32 %v4797, %v4800
      %vm4802 = vweird.f32 %v3453
      %vm4803 = vweird.f32 %v4797
      %vm4804 = vmor %vm4802, %vm4803
      %v4805 = vsel %vm4804, %v4797, %v4801
      %v4806 = vand.u32 2147483647, %v3453
      %vm4807 = vcmp.eq.f32.partialorder %v4806, 8.507059e+37
      %v4808 = vand.u32 %v3453, 2147483648
      %v4809 = vor.u32 1.1754944e-38, %v4808
      %v4810 = vsel %vm4807, %v4809, %v4805
      %v4811 = vmul.f32 1.0, %v4810
      %v4812 = vrcp.pop %v3454
      %v4813 = vmul.f32 %v3454, %v4812
      %v4814 = vsub.f32 1.0, %v4813
      %v4815 = vmul.f32 %v4812, %v4814
      %v4816 = vadd.f32 %v4812, %v4815
      %vm4817 = vweird.f32 %v3454
      %vm4818 = vweird.f32 %v4812
      %vm4819 = vmor %vm4817, %vm4818
      %v4820 = vsel %vm4819, %v4812, %v4816
      %v4821 = vand.u32 2147483647, %v3454
      %vm4822 = vcmp.eq.f32.partialorder %v4821, 8.507059e+37
      %v4823 = vand.u32 %v3454, 2147483648
      %v4824 = vor.u32 1.1754944e-38, %v4823
      %v4825 = vsel %vm4822, %v4824, %v4820
      %v4826 = vmul.f32 1.0, %v4825
      %v4827 = vrcp.pop %v3455
      %v4828 = vmul.f32 %v3455, %v4827
      %v4829 = vsub.f32 1.0, %v4828
      %v4830 = vmul.f32 %v4827, %v4829
      %v4831 = vadd.f32 %v4827, %v4830
      %vm4832 = vweird.f32 %v3455
      %vm4833 = vweird.f32 %v4827
      %vm4834 = vmor %vm4832, %vm4833
      %v4835 = vsel %vm4834, %v4827, %v4831
      %v4836 = vand.u32 2147483647, %v3455
      %vm4837 = vcmp.eq.f32.partialorder %v4836, 8.507059e+37
      %v4838 = vand.u32 %v3455, 2147483648
      %v4839 = vor.u32 1.1754944e-38, %v4838
      %v4840 = vsel %vm4837, %v4839, %v4835
      %v4841 = vmul.f32 1.0, %v4840
      %v4842 = vrcp.pop %v3456
      %v4843 = vmul.f32 %v3456, %v4842
      %v4844 = vsub.f32 1.0, %v4843
      %v4845 = vmul.f32 %v4842, %v4844
      %v4846 = vadd.f32 %v4842, %v4845
      %vm4847 = vweird.f32 %v3456
      %vm4848 = vweird.f32 %v4842
      %vm4849 = vmor %vm4847, %vm4848
      %v4850 = vsel %vm4849, %v4842, %v4846
      %v4851 = vand.u32 2147483647, %v3456
      %vm4852 = vcmp.eq.f32.partialorder %v4851, 8.507059e+37
      %v4853 = vand.u32 %v3456, 2147483648
      %v4854 = vor.u32 1.1754944e-38, %v4853
      %v4855 = vsel %vm4852, %v4854, %v4850
      %v4856 = vmul.f32 1.0, %v4855
      %v4857 = vrcp.pop %v3457
      %v4858 = vmul.f32 %v3457, %v4857
      %v4859 = vsub.f32 1.0, %v4858
      %v4860 = vmul.f32 %v4857, %v4859
      %v4861 = vadd.f32 %v4857, %v4860
      %vm4862 = vweird.f32 %v3457
      %vm4863 = vweird.f32 %v4857
      %vm4864 = vmor %vm4862, %vm4863
      %v4865 = vsel %vm4864, %v4857, %v4861
      %v4866 = vand.u32 2147483647, %v3457
      %vm4867 = vcmp.eq.f32.partialorder %v4866, 8.507059e+37
      %v4868 = vand.u32 %v3457, 2147483648
      %v4869 = vor.u32 1.1754944e-38, %v4868
      %v4870 = vsel %vm4867, %v4869, %v4865
      %v4871 = vmul.f32 1.0, %v4870
      %v4872 = vrcp.pop %v3458
      %v4873 = vmul.f32 %v3458, %v4872
      %v4874 = vsub.f32 1.0, %v4873
      %v4875 = vmul.f32 %v4872, %v4874
      %v4876 = vadd.f32 %v4872, %v4875
      %vm4877 = vweird.f32 %v3458
      %vm4878 = vweird.f32 %v4872
      %vm4879 = vmor %vm4877, %vm4878
      %v4880 = vsel %vm4879, %v4872, %v4876
      %v4881 = vand.u32 2147483647, %v3458
      %vm4882 = vcmp.eq.f32.partialorder %v4881, 8.507059e+37
      %v4883 = vand.u32 %v3458, 2147483648
      %v4884 = vor.u32 1.1754944e-38, %v4883
      %v4885 = vsel %vm4882, %v4884, %v4880
      %v4886 = vmul.f32 1.0, %v4885
      %v4887 = vrcp.pop %v3459
      %v4888 = vmul.f32 %v3459, %v4887
      %v4889 = vsub.f32 1.0, %v4888
      %v4890 = vmul.f32 %v4887, %v4889
      %v4891 = vadd.f32 %v4887, %v4890
      %vm4892 = vweird.f32 %v3459
      %vm4893 = vweird.f32 %v4887
      %vm4894 = vmor %vm4892, %vm4893
      %v4895 = vsel %vm4894, %v4887, %v4891
      %v4896 = vand.u32 2147483647, %v3459
      %vm4897 = vcmp.eq.f32.partialorder %v4896, 8.507059e+37
      %v4898 = vand.u32 %v3459, 2147483648
      %v4899 = vor.u32 1.1754944e-38, %v4898
      %v4900 = vsel %vm4897, %v4899, %v4895
      %v4901 = vmul.f32 1.0, %v4900
      %v4902 = vrcp.pop %v3460
      %v4903 = vmul.f32 %v3460, %v4902
      %v4904 = vsub.f32 1.0, %v4903
      %v4905 = vmul.f32 %v4902, %v4904
      %v4906 = vadd.f32 %v4902, %v4905
      %vm4907 = vweird.f32 %v3460
      %vm4908 = vweird.f32 %v4902
      %vm4909 = vmor %vm4907, %vm4908
      %v4910 = vsel %vm4909, %v4902, %v4906
      %v4911 = vand.u32 2147483647, %v3460
      %vm4912 = vcmp.eq.f32.partialorder %v4911, 8.507059e+37
      %v4913 = vand.u32 %v3460, 2147483648
      %v4914 = vor.u32 1.1754944e-38, %v4913
      %v4915 = vsel %vm4912, %v4914, %v4910
      %v4916 = vmul.f32 1.0, %v4915
      %v4917 = vrcp.pop %v3461
      %v4918 = vmul.f32 %v3461, %v4917
      %v4919 = vsub.f32 1.0, %v4918
      %v4920 = vmul.f32 %v4917, %v4919
      %v4921 = vadd.f32 %v4917, %v4920
      %vm4922 = vweird.f32 %v3461
      %vm4923 = vweird.f32 %v4917
      %vm4924 = vmor %vm4922, %vm4923
      %v4925 = vsel %vm4924, %v4917, %v4921
      %v4926 = vand.u32 2147483647, %v3461
      %vm4927 = vcmp.eq.f32.partialorder %v4926, 8.507059e+37
      %v4928 = vand.u32 %v3461, 2147483648
      %v4929 = vor.u32 1.1754944e-38, %v4928
      %v4930 = vsel %vm4927, %v4929, %v4925
      %v4931 = vmul.f32 1.0, %v4930
      %v4932 = vrcp.pop %v3462
      %v4933 = vmul.f32 %v3462, %v4932
      %v4934 = vsub.f32 1.0, %v4933
      %v4935 = vmul.f32 %v4932, %v4934
      %v4936 = vadd.f32 %v4932, %v4935
      %vm4937 = vweird.f32 %v3462
      %vm4938 = vweird.f32 %v4932
      %vm4939 = vmor %vm4937, %vm4938
      %v4940 = vsel %vm4939, %v4932, %v4936
      %v4941 = vand.u32 2147483647, %v3462
      %vm4942 = vcmp.eq.f32.partialorder %v4941, 8.507059e+37
      %v4943 = vand.u32 %v3462, 2147483648
      %v4944 = vor.u32 1.1754944e-38, %v4943
      %v4945 = vsel %vm4942, %v4944, %v4940
      %v4946 = vmul.f32 1.0, %v4945
      %v4947 = vrcp.pop %v3463
      %v4948 = vmul.f32 %v3463, %v4947
      %v4949 = vsub.f32 1.0, %v4948
      %v4950 = vmul.f32 %v4947, %v4949
      %v4951 = vadd.f32 %v4947, %v4950
      %vm4952 = vweird.f32 %v3463
      %vm4953 = vweird.f32 %v4947
      %vm4954 = vmor %vm4952, %vm4953
      %v4955 = vsel %vm4954, %v4947, %v4951
      %v4956 = vand.u32 2147483647, %v3463
      %vm4957 = vcmp.eq.f32.partialorder %v4956, 8.507059e+37
      %v4958 = vand.u32 %v3463, 2147483648
      %v4959 = vor.u32 1.1754944e-38, %v4958
      %v4960 = vsel %vm4957, %v4959, %v4955
      %v4961 = vmul.f32 1.0, %v4960
      %v4962 = vrcp.pop %v3464
      %v4963 = vmul.f32 %v3464, %v4962
      %v4964 = vsub.f32 1.0, %v4963
      %v4965 = vmul.f32 %v4962, %v4964
      %v4966 = vadd.f32 %v4962, %v4965
      %vm4967 = vweird.f32 %v3464
      %vm4968 = vweird.f32 %v4962
      %vm4969 = vmor %vm4967, %vm4968
      %v4970 = vsel %vm4969, %v4962, %v4966
      %v4971 = vand.u32 2147483647, %v3464
      %vm4972 = vcmp.eq.f32.partialorder %v4971, 8.507059e+37
      %v4973 = vand.u32 %v3464, 2147483648
      %v4974 = vor.u32 1.1754944e-38, %v4973
      %v4975 = vsel %vm4972, %v4974, %v4970
      %v4976 = vmul.f32 1.0, %v4975
      %v4977 = vrcp.pop %v3465
      %v4978 = vmul.f32 %v3465, %v4977
      %v4979 = vsub.f32 1.0, %v4978
      %v4980 = vmul.f32 %v4977, %v4979
      %v4981 = vadd.f32 %v4977, %v4980
      %vm4982 = vweird.f32 %v3465
      %vm4983 = vweird.f32 %v4977
      %vm4984 = vmor %vm4982, %vm4983
      %v4985 = vsel %vm4984, %v4977, %v4981
      %v4986 = vand.u32 2147483647, %v3465
      %vm4987 = vcmp.eq.f32.partialorder %v4986, 8.507059e+37
      %v4988 = vand.u32 %v3465, 2147483648
      %v4989 = vor.u32 1.1754944e-38, %v4988
      %v4990 = vsel %vm4987, %v4989, %v4985
      %v4991 = vmul.f32 1.0, %v4990
      %v4992 = vrcp.pop %v3466
      %v4993 = vmul.f32 %v3466, %v4992
      %v4994 = vsub.f32 1.0, %v4993
      %v4995 = vmul.f32 %v4992, %v4994
      %v4996 = vadd.f32 %v4992, %v4995
      %vm4997 = vweird.f32 %v3466
      %vm4998 = vweird.f32 %v4992
      %vm4999 = vmor %vm4997, %vm4998
      %v5000 = vsel %vm4999, %v4992, %v4996
      %v5001 = vand.u32 2147483647, %v3466
      %vm5002 = vcmp.eq.f32.partialorder %v5001, 8.507059e+37
      %v5003 = vand.u32 %v3466, 2147483648
      %v5004 = vor.u32 1.1754944e-38, %v5003
      %v5005 = vsel %vm5002, %v5004, %v5000
      %v5006 = vmul.f32 1.0, %v5005
      %v5007 = vrcp.pop %v3467
      %v5008 = vmul.f32 %v3467, %v5007
      %v5009 = vsub.f32 1.0, %v5008
      %v5010 = vmul.f32 %v5007, %v5009
      %v5011 = vadd.f32 %v5007, %v5010
      %vm5012 = vweird.f32 %v3467
      %vm5013 = vweird.f32 %v5007
      %vm5014 = vmor %vm5012, %vm5013
      %v5015 = vsel %vm5014, %v5007, %v5011
      %v5016 = vand.u32 2147483647, %v3467
      %vm5017 = vcmp.eq.f32.partialorder %v5016, 8.507059e+37
      %v5018 = vand.u32 %v3467, 2147483648
      %v5019 = vor.u32 1.1754944e-38, %v5018
      %v5020 = vsel %vm5017, %v5019, %v5015
      %v5021 = vmul.f32 1.0, %v5020
      %v5022 = vrcp.pop %v3468
      %v5023 = vmul.f32 %v3468, %v5022
      %v5024 = vsub.f32 1.0, %v5023
      %v5025 = vmul.f32 %v5022, %v5024
      %v5026 = vadd.f32 %v5022, %v5025
      %vm5027 = vweird.f32 %v3468
      %vm5028 = vweird.f32 %v5022
      %vm5029 = vmor %vm5027, %vm5028
      %v5030 = vsel %vm5029, %v5022, %v5026
      %v5031 = vand.u32 2147483647, %v3468
      %vm5032 = vcmp.eq.f32.partialorder %v5031, 8.507059e+37
      %v5033 = vand.u32 %v3468, 2147483648
      %v5034 = vor.u32 1.1754944e-38, %v5033
      %v5035 = vsel %vm5032, %v5034, %v5030
      %v5036 = vmul.f32 1.0, %v5035
      %v5037 = vrcp.pop %v3469
      %v5038 = vmul.f32 %v3469, %v5037
      %v5039 = vsub.f32 1.0, %v5038
      %v5040 = vmul.f32 %v5037, %v5039
      %v5041 = vadd.f32 %v5037, %v5040
      %vm5042 = vweird.f32 %v3469
      %vm5043 = vweird.f32 %v5037
      %vm5044 = vmor %vm5042, %vm5043
      %v5045 = vsel %vm5044, %v5037, %v5041
      %v5046 = vand.u32 2147483647, %v3469
      %vm5047 = vcmp.eq.f32.partialorder %v5046, 8.507059e+37
      %v5048 = vand.u32 %v3469, 2147483648
      %v5049 = vor.u32 1.1754944e-38, %v5048
      %v5050 = vsel %vm5047, %v5049, %v5045
      %v5051 = vmul.f32 1.0, %v5050
      %v5052 = vrcp.pop %v3470
      %v5053 = vmul.f32 %v3470, %v5052
      %v5054 = vsub.f32 1.0, %v5053
      %v5055 = vmul.f32 %v5052, %v5054
      %v5056 = vadd.f32 %v5052, %v5055
      %vm5057 = vweird.f32 %v3470
      %vm5058 = vweird.f32 %v5052
      %vm5059 = vmor %vm5057, %vm5058
      %v5060 = vsel %vm5059, %v5052, %v5056
      %v5061 = vand.u32 2147483647, %v3470
      %vm5062 = vcmp.eq.f32.partialorder %v5061, 8.507059e+37
      %v5063 = vand.u32 %v3470, 2147483648
      %v5064 = vor.u32 1.1754944e-38, %v5063
      %v5065 = vsel %vm5062, %v5064, %v5060
      %v5066 = vmul.f32 1.0, %v5065
      %v5067 = vrcp.pop %v3471
      %v5068 = vmul.f32 %v3471, %v5067
      %v5069 = vsub.f32 1.0, %v5068
      %v5070 = vmul.f32 %v5067, %v5069
      %v5071 = vadd.f32 %v5067, %v5070
      %vm5072 = vweird.f32 %v3471
      %vm5073 = vweird.f32 %v5067
      %vm5074 = vmor %vm5072, %vm5073
      %v5075 = vsel %vm5074, %v5067, %v5071
      %v5076 = vand.u32 2147483647, %v3471
      %vm5077 = vcmp.eq.f32.partialorder %v5076, 8.507059e+37
      %v5078 = vand.u32 %v3471, 2147483648
      %v5079 = vor.u32 1.1754944e-38, %v5078
      %v5080 = vsel %vm5077, %v5079, %v5075
      %v5081 = vmul.f32 1.0, %v5080
      %v5082 = vrcp.pop %v3472
      %v5083 = vmul.f32 %v3472, %v5082
      %v5084 = vsub.f32 1.0, %v5083
      %v5085 = vmul.f32 %v5082, %v5084
      %v5086 = vadd.f32 %v5082, %v5085
      %vm5087 = vweird.f32 %v3472
      %vm5088 = vweird.f32 %v5082
      %vm5089 = vmor %vm5087, %vm5088
      %v5090 = vsel %vm5089, %v5082, %v5086
      %v5091 = vand.u32 2147483647, %v3472
      %vm5092 = vcmp.eq.f32.partialorder %v5091, 8.507059e+37
      %v5093 = vand.u32 %v3472, 2147483648
      %v5094 = vor.u32 1.1754944e-38, %v5093
      %v5095 = vsel %vm5092, %v5094, %v5090
      %v5096 = vmul.f32 1.0, %v5095
      %v5097 = vrcp.pop %v3473
      %v5098 = vmul.f32 %v3473, %v5097
      %v5099 = vsub.f32 1.0, %v5098
      %v5100 = vmul.f32 %v5097, %v5099
      %v5101 = vadd.f32 %v5097, %v5100
      %vm5102 = vweird.f32 %v3473
      %vm5103 = vweird.f32 %v5097
      %vm5104 = vmor %vm5102, %vm5103
      %v5105 = vsel %vm5104, %v5097, %v5101
      %v5106 = vand.u32 2147483647, %v3473
      %vm5107 = vcmp.eq.f32.partialorder %v5106, 8.507059e+37
      %v5108 = vand.u32 %v3473, 2147483648
      %v5109 = vor.u32 1.1754944e-38, %v5108
      %v5110 = vsel %vm5107, %v5109, %v5105
      %v5111 = vmul.f32 1.0, %v5110
      %v5112 = vrcp.pop %v3474
      %v5113 = vmul.f32 %v3474, %v5112
      %v5114 = vsub.f32 1.0, %v5113
      %v5115 = vmul.f32 %v5112, %v5114
      %v5116 = vadd.f32 %v5112, %v5115
      %vm5117 = vweird.f32 %v3474
      %vm5118 = vweird.f32 %v5112
      %vm5119 = vmor %vm5117, %vm5118
      %v5120 = vsel %vm5119, %v5112, %v5116
      %v5121 = vand.u32 2147483647, %v3474
      %vm5122 = vcmp.eq.f32.partialorder %v5121, 8.507059e+37
      %v5123 = vand.u32 %v3474, 2147483648
      %v5124 = vor.u32 1.1754944e-38, %v5123
      %v5125 = vsel %vm5122, %v5124, %v5120
      %v5126 = vmul.f32 1.0, %v5125
      %v5127 = vrcp.pop %v3475
      %v5128 = vmul.f32 %v3475, %v5127
      %v5129 = vsub.f32 1.0, %v5128
      %v5130 = vmul.f32 %v5127, %v5129
      %v5131 = vadd.f32 %v5127, %v5130
      %vm5132 = vweird.f32 %v3475
      %vm5133 = vweird.f32 %v5127
      %vm5134 = vmor %vm5132, %vm5133
      %v5135 = vsel %vm5134, %v5127, %v5131
      %v5136 = vand.u32 2147483647, %v3475
      %vm5137 = vcmp.eq.f32.partialorder %v5136, 8.507059e+37
      %v5138 = vand.u32 %v3475, 2147483648
      %v5139 = vor.u32 1.1754944e-38, %v5138
      %v5140 = vsel %vm5137, %v5139, %v5135
      %v5141 = vmul.f32 1.0, %v5140
      %v5142 = vrcp.pop %v3476
      %v5143 = vmul.f32 %v3476, %v5142
      %v5144 = vsub.f32 1.0, %v5143
      %v5145 = vmul.f32 %v5142, %v5144
      %v5146 = vadd.f32 %v5142, %v5145
      %vm5147 = vweird.f32 %v3476
      %vm5148 = vweird.f32 %v5142
      %vm5149 = vmor %vm5147, %vm5148
      %v5150 = vsel %vm5149, %v5142, %v5146
      %v5151 = vand.u32 2147483647, %v3476
      %vm5152 = vcmp.eq.f32.partialorder %v5151, 8.507059e+37
      %v5153 = vand.u32 %v3476, 2147483648
      %v5154 = vor.u32 1.1754944e-38, %v5153
      %v5155 = vsel %vm5152, %v5154, %v5150
      %v5156 = vmul.f32 1.0, %v5155
      %v5157 = vpack.c.bf16 %v3506, %v3491
      %v5158 = vpack.c.bf16 %v3536, %v3521
      %v5159 = vpack.c.bf16 %v3566, %v3551
      %v5160 = vpack.c.bf16 %v3581, %v3581
      %v5161 = vpack.c.bf16 %v3611, %v3596
      %v5162 = vpack.c.bf16 %v3641, %v3626
      %v5163 = vpack.c.bf16 %v3671, %v3656
      %v5164 = vpack.c.bf16 %v3686, %v3686
      %v5165 = vpack.c.bf16 %v3716, %v3701
      %v5166 = vpack.c.bf16 %v3746, %v3731
      %v5167 = vpack.c.bf16 %v3776, %v3761
      %v5168 = vpack.c.bf16 %v3791, %v3791
      %v5169 = vpack.c.bf16 %v3821, %v3806
      %v5170 = vpack.c.bf16 %v3851, %v3836
      %v5171 = vpack.c.bf16 %v3881, %v3866
      %v5172 = vpack.c.bf16 %v3896, %v3896
      %v5173 = vpack.c.bf16 %v3926, %v3911
      %v5174 = vpack.c.bf16 %v3956, %v3941
      %v5175 = vpack.c.bf16 %v3986, %v3971
      %v5176 = vpack.c.bf16 %v4001, %v4001
      %v5177 = vpack.c.bf16 %v4031, %v4016
      %v5178 = vpack.c.bf16 %v4061, %v4046
      %v5179 = vpack.c.bf16 %v4091, %v4076
      %v5180 = vpack.c.bf16 %v4106, %v4106
      %v5181 = vpack.c.bf16 %v4136, %v4121
      %v5182 = vpack.c.bf16 %v4166, %v4151
      %v5183 = vpack.c.bf16 %v4196, %v4181
      %v5184 = vpack.c.bf16 %v4211, %v4211
      %v5185 = vpack.c.bf16 %v4241, %v4226
      %v5186 = vpack.c.bf16 %v4271, %v4256
      %v5187 = vpack.c.bf16 %v4301, %v4286
      %v5188 = vpack.c.bf16 %v4316, %v4316
      %v5189 = vpack.c.bf16 %v4346, %v4331
      %v5190 = vpack.c.bf16 %v4376, %v4361
      %v5191 = vpack.c.bf16 %v4406, %v4391
      %v5192 = vpack.c.bf16 %v4421, %v4421
      %v5193 = vpack.c.bf16 %v4451, %v4436
      %v5194 = vpack.c.bf16 %v4481, %v4466
      %v5195 = vpack.c.bf16 %v4511, %v4496
      %v5196 = vpack.c.bf16 %v4526, %v4526
      %v5197 = vpack.c.bf16 %v4556, %v4541
      %v5198 = vpack.c.bf16 %v4586, %v4571
      %v5199 = vpack.c.bf16 %v4616, %v4601
      %v5200 = vpack.c.bf16 %v4631, %v4631
      %v5201 = vpack.c.bf16 %v4661, %v4646
      %v5202 = vpack.c.bf16 %v4691, %v4676
      %v5203 = vpack.c.bf16 %v4721, %v4706
      %v5204 = vpack.c.bf16 %v4736, %v4736
      %v5205 = vpack.c.bf16 %v4766, %v4751
      %v5206 = vpack.c.bf16 %v4796, %v4781
      %v5207 = vpack.c.bf16 %v4826, %v4811
      %v5208 = vpack.c.bf16 %v4841, %v4841
      %v5209 = vpack.c.bf16 %v4871, %v4856
      %v5210 = vpack.c.bf16 %v4901, %v4886
      %v5211 = vpack.c.bf16 %v4931, %v4916
      %v5212 = vpack.c.bf16 %v4946, %v4946
      %v5213 = vpack.c.bf16 %v4976, %v4961
      %v5214 = vpack.c.bf16 %v5006, %v4991
      %v5215 = vpack.c.bf16 %v5036, %v5021
      %v5216 = vpack.c.bf16 %v5051, %v5051
      %v5217 = vpack.c.bf16 %v5081, %v5066
      %v5218 = vpack.c.bf16 %v5111, %v5096
      %v5219 = vpack.c.bf16 %v5141, %v5126
      %v5220 = vpack.c.bf16 %v5156, %v5156
      %5221 = vst [vmem:[%s258] sm:$0xff] %v5157
      %5222 = vst [vmem:[%s258 + $0x8] sm:$0xff] %v5158
      %5223 = vst [vmem:[%s258 + $0x10] sm:$0xff] %v5159
      %vm5224 = vcmask 125952
      %5225 = vst.msk [vmem:[%s258 + $0x18] sm:$0xf] %vm5224, %v5160
      %5226 = vst [vmem:[%s258 + $0x1c] sm:$0xff] %v5161
      %5227 = vst [vmem:[%s258 + $0x24] sm:$0xff] %v5162
      %5228 = vst [vmem:[%s258 + $0x2c] sm:$0xff] %v5163
      %5229 = vst.msk [vmem:[%s258 + $0x34] sm:$0xf] %vm5224, %v5164
      %5230 = vst [vmem:[%s258 + $0x38] sm:$0xff] %v5165
      %5231 = vst [vmem:[%s258 + $0x40] sm:$0xff] %v5166
      %5232 = vst [vmem:[%s258 + $0x48] sm:$0xff] %v5167
      %5233 = vst.msk [vmem:[%s258 + $0x50] sm:$0xf] %vm5224, %v5168
      %5234 = vst [vmem:[%s258 + $0x54] sm:$0xff] %v5169
      %5235 = vst [vmem:[%s258 + $0x5c] sm:$0xff] %v5170
      %5236 = vst [vmem:[%s258 + $0x64] sm:$0xff] %v5171
      %5237 = vst.msk [vmem:[%s258 + $0x6c] sm:$0xf] %vm5224, %v5172
      %5238 = vst [vmem:[%s258 + $0x70] sm:$0xff] %v5173
      %5239 = vst [vmem:[%s258 + $0x78] sm:$0xff] %v5174
      %5240 = vst [vmem:[%s258 + $0x80] sm:$0xff] %v5175
      %5241 = vst.msk [vmem:[%s258 + $0x88] sm:$0xf] %vm5224, %v5176
      %5242 = vst [vmem:[%s258 + $0x8c] sm:$0xff] %v5177
      %5243 = vst [vmem:[%s258 + $0x94] sm:$0xff] %v5178
      %5244 = vst [vmem:[%s258 + $0x9c] sm:$0xff] %v5179
      %5245 = vst.msk [vmem:[%s258 + $0xa4] sm:$0xf] %vm5224, %v5180
      %5246 = vst [vmem:[%s258 + $0xa8] sm:$0xff] %v5181
      %5247 = vst [vmem:[%s258 + $0xb0] sm:$0xff] %v5182
      %5248 = vst [vmem:[%s258 + $0xb8] sm:$0xff] %v5183
      %5249 = vst.msk [vmem:[%s258 + $0xc0] sm:$0xf] %vm5224, %v5184
      %5250 = vst [vmem:[%s258 + $0xc4] sm:$0xff] %v5185
      %5251 = vst [vmem:[%s258 + $0xcc] sm:$0xff] %v5186
      %5252 = vst [vmem:[%s258 + $0xd4] sm:$0xff] %v5187
      %5253 = vst.msk [vmem:[%s258 + $0xdc] sm:$0xf] %vm5224, %v5188
      %5254 = vst [vmem:[%s258 + $0xe0] sm:$0xff] %v5189
      %5255 = vst [vmem:[%s258 + $0xe8] sm:$0xff] %v5190
      %5256 = vst [vmem:[%s258 + $0xf0] sm:$0xff] %v5191
      %5257 = vst.msk [vmem:[%s258 + $0xf8] sm:$0xf] %vm5224, %v5192
      %5258 = vst [vmem:[%s258 + $0xfc] sm:$0xff] %v5193
      %5259 = vst [vmem:[%s258 + $0x104] sm:$0xff] %v5194
      %5260 = vst [vmem:[%s258 + $0x10c] sm:$0xff] %v5195
      %5261 = vst.msk [vmem:[%s258 + $0x114] sm:$0xf] %vm5224, %v5196
      %5262 = vst [vmem:[%s258 + $0x118] sm:$0xff] %v5197
      %5263 = vst [vmem:[%s258 + $0x120] sm:$0xff] %v5198
      %5264 = vst [vmem:[%s258 + $0x128] sm:$0xff] %v5199
      %5265 = vst.msk [vmem:[%s258 + $0x130] sm:$0xf] %vm5224, %v5200
      %5266 = vst [vmem:[%s258 + $0x134] sm:$0xff] %v5201
      %5267 = vst [vmem:[%s258 + $0x13c] sm:$0xff] %v5202
      %5268 = vst [vmem:[%s258 + $0x144] sm:$0xff] %v5203
      %5269 = vst.msk [vmem:[%s258 + $0x14c] sm:$0xf] %vm5224, %v5204
      %5270 = vst [vmem:[%s258 + $0x150] sm:$0xff] %v5205
      %5271 = vst [vmem:[%s258 + $0x158] sm:$0xff] %v5206
      %5272 = vst [vmem:[%s258 + $0x160] sm:$0xff] %v5207
      %5273 = vst.msk [vmem:[%s258 + $0x168] sm:$0xf] %vm5224, %v5208
      %5274 = vst [vmem:[%s258 + $0x16c] sm:$0xff] %v5209
      %5275 = vst [vmem:[%s258 + $0x174] sm:$0xff] %v5210
      %5276 = vst [vmem:[%s258 + $0x17c] sm:$0xff] %v5211
      %5277 = vst.msk [vmem:[%s258 + $0x184] sm:$0xf] %vm5224, %v5212
      %5278 = vst [vmem:[%s258 + $0x188] sm:$0xff] %v5213
      %5279 = vst [vmem:[%s258 + $0x190] sm:$0xff] %v5214
      %5280 = vst [vmem:[%s258 + $0x198] sm:$0xff] %v5215
      %5281 = vst.msk [vmem:[%s258 + $0x1a0] sm:$0xf] %vm5224, %v5216
      %5282 = vst [vmem:[%s258 + $0x1a4] sm:$0xff] %v5217
      %5283 = vst [vmem:[%s258 + $0x1ac] sm:$0xff] %v5218
      %5284 = vst [vmem:[%s258 + $0x1b4] sm:$0xff] %v5219
      %5285 = vst.msk [vmem:[%s258 + $0x1bc] sm:$0xf] %vm5224, %v5220
      %s5286 = smul.u32 16, %s17
      %p5287 = scmp.lt.s32.totalorder %s5286, 31
      %s5288 = scalar_select %p5287, %s5286, 31
      %s5289 = smul.addr %s5288, 7
      %s5290 = smul.addr %s5289, 4
      %s5291 = scalar_lea.vmem %s6, %s5290
      // Predicated region
      $region45: #{ae_forward.1} parent=43 // pred_check
        %p5292 = pneg %p166
      $region46: #{ae_forward.1} parent=43 // pred_check_branch
        %5294 = sbr.rel (%p5292) target = $region48
      $region47: #{ae_forward.1} parent=43 // pred_region
        %s5295 = smul.u32 16, %s17
      $region48: #{ae_forward.1} parent=43 // pred_fallthru
        _
    $region44: #{ae_forward.1} parent=5 // pred_fallthru
      _
    %p5296 = scmp.le.s32.totalorder 2, %s12
    // Predicated region
    $region49: #{ae_forward.1} parent=5 // pred_check
      %p5297 = pneg %p5296
    $region50: #{ae_forward.1} parent=5 // pred_check_branch
      %5299 = sbr.rel (%p5297) target = $region52
    $region51: #{ae_forward.1} parent=5 // pred_region
      %s5300 = ssub.s32 %s12, 2
      // Predicated region
      $region53: #{ae_forward.1} parent=51 // pred_check
        %p5301 = pneg %p172
      $region54: #{ae_forward.1} parent=51 // pred_check_branch
        %5303 = sbr.rel (%p5301) target = $region56
      $region55: #{ae_forward.1} parent=51 // pred_region
        %s5304 = smul.u32 16, %s18
        %p5305 = scmp.lt.s32.totalorder %s5304, 31
        %s5306 = scalar_select %p5305, %s5304, 31
        %s5307 = smul.addr %s5306, 7
        %s5308 = smul.addr %s5307, 4
        %s5309 = scalar_lea.vmem %s6, %s5308
      $region56: #{ae_forward.1} parent=51 // pred_fallthru
        _
    $region52: #{ae_forward.1} parent=5 // pred_fallthru
      _
  $region6: #{ae_forward.1} parent=0 // loop_footer
    %s16 = sadd.s32 1, %s12
  $region7: #{ae_forward.1} parent=0 // loop_footer_branch
    %11 = sbr.rel target = $region3
  $region8: #{ae_forward.1} parent=0 // loop_exit
    _

</llo_original>
